<compile_context>
chip_gen: v6e
topology: v6e:2x2x1
jax: 0.10.0
libtpu: 0.0.40
codegen_flags: <defaults>
</compile_context>

<pallas_src>
import functools

import numpy as np

import jax
import jax.numpy as jnp
from jax.experimental import pallas as pl
from jax.experimental.pallas import tpu as pltpu


def _round_up(n, m):
    return ((n + m - 1) // m) * m


def _tap_selectors(B, Hin, Win, Hout, Wout, KH, KW, stride, pad,
                   m_out_rows, m_in_rows):
    """Per-tap 0/1 selection matrices mapping flat (b,h,w) input rows to flat
    (b,oh,ow) output rows.  Output rows whose source lands in the zero-padding
    are all-zero rows; fully-out-of-bounds taps are dropped."""
    tap_ids, mats = [], []
    for kh in range(KH):
        for kw in range(KW):
            S = np.zeros((m_out_rows, m_in_rows), np.float32)
            valid = False
            for oh in range(Hout):
                h = stride * oh - pad + kh
                if h < 0 or h >= Hin:
                    continue
                for ow in range(Wout):
                    w = stride * ow - pad + kw
                    if w < 0 or w >= Win:
                        continue
                    for b in range(B):
                        S[(b * Hout + oh) * Wout + ow, (b * Hin + h) * Win + w] = 1.0
                    valid = True
            if valid:
                tap_ids.append(kh * KW + kw)
                mats.append(S)
    return tap_ids, np.stack(mats, axis=0)


def _encoder_kernel(x1_ref, w1_ref, sh1_ref,
                    s2_ref, w2_ref, sh2_ref,
                    s3_ref, w3_ref, sh3_ref,
                    s4_ref, w4_ref, sh4_ref,
                    w5_ref, sh5_ref, o_ref, *, alpha):
    f32 = jnp.float32
    bf16 = jnp.bfloat16

    def leaky(z):                                    # f32 epilogue (v5e-safe)
        return jnp.where(z >= 0, z, alpha * z)

    # ---- layer 1: im2col GEMM (patches built in wrapper), LeakyReLU ----
    z = jnp.dot(x1_ref[...], w1_ref[...], preferred_element_type=f32)
    y = leaky(z + sh1_ref[...]).astype(bf16)                       # (M1, nf)

    # ---- layers 2-4: conv as per-tap row-select @ per-tap weight (MXU) ----
    for s_ref, w_ref, sh_ref in ((s2_ref, w2_ref, sh2_ref),
                                 (s3_ref, w3_ref, sh3_ref),
                                 (s4_ref, w4_ref, sh4_ref)):
        acc = sh_ref[...]                                          # (1, Cout) f32
        for t in range(s_ref.shape[0]):                            # static unroll
            xt = jnp.dot(s_ref[t], y, preferred_element_type=f32).astype(bf16)
            acc = acc + jnp.dot(xt, w_ref[t], preferred_element_type=f32)
        y = leaky(acc).astype(bf16)                                # (Mout, Cout)

    # ---- layer 5: 1x1 conv, no activation; drop M padding rows ----
    z = jnp.dot(y, w5_ref[...], preferred_element_type=f32) + sh5_ref[...]
    o_ref[...] = z[: o_ref.shape[0], :]


def encoder_forward(params, x_nchw, *, nz=64):
    """Mirrors Encoder.forward (eval-mode BN): returns (mu, logvar), each NCHW."""
    B, ch, H0, W0 = x_nchw.shape
    x = jnp.transpose(x_nchw, (0, 2, 3, 1)).astype(jnp.float32)    # NHWC
    KH = KW = 4
    stride, pad = 2, 1

    # Fold conv bias + eval-mode BN affine into (weight, shift) per layer.
    folded = []
    for p in params:
        w = p["w"] * p["scale"][:, None, None, None]
        sh = p["b"] * p["scale"] + p["shift"]
        folded.append((w, sh))

    # ---- layer 1: wrapper-side im2col (tiny; the input comes from HBM anyway)
    w1, sh1 = folded[0]
    h1 = (H0 + 2 * pad - KH) // stride + 1
    w1sp = (W0 + 2 * pad - KW) // stride + 1
    xp = jnp.pad(x, ((0, 0), (pad, pad), (pad, pad), (0, 0)))
    cols = []
    for kh in range(KH):
        for kw in range(KW):
            cols.append(xp[:, kh:kh + stride * h1:stride,
                           kw:kw + stride * w1sp:stride, :])
    X1 = jnp.stack(cols, axis=3).reshape(B * h1 * w1sp, KH * KW * ch)
    m1 = B * h1 * w1sp
    rows_prev = _round_up(m1, 8)
    if rows_prev != m1:
        X1 = jnp.pad(X1, ((0, rows_prev - m1), (0, 0)))
    X1 = X1.astype(jnp.bfloat16)
    W1m = jnp.transpose(w1, (2, 3, 1, 0)).reshape(KH * KW * ch, -1)
    W1m = W1m.astype(jnp.bfloat16)
    sh1 = sh1.reshape(1, -1).astype(jnp.float32)

    # ---- layers 2-4: constant tap-selection matrices + per-tap weight stacks
    spatial = (h1, w1sp)
    tap_inputs = []
    for w, sh in folded[1:4]:
        cout, cin, _, _ = w.shape
        hin, win = spatial
        hout = (hin + 2 * pad - KH) // stride + 1
        wout = (win + 2 * pad - KW) // stride + 1
        rows_out = _round_up(B * hout * wout, 8)
        tap_ids, S = _tap_selectors(B, hin, win, hout, wout, KH, KW,
                                    stride, pad, rows_out, rows_prev)
        w_hwio = jnp.transpose(w, (2, 3, 1, 0)).reshape(KH * KW, cin, cout)
        Wt = w_hwio[np.asarray(tap_ids)].astype(jnp.bfloat16)      # (T, Cin, Cout)
        tap_inputs += [jnp.asarray(S, jnp.bfloat16), Wt,
                       sh.reshape(1, cout).astype(jnp.float32)]
        spatial = (hout, wout)
        rows_prev = rows_out
    assert spatial == (1, 1), "Encoder expects the 4th conv to reach 1x1 spatial"

    # ---- layer 5: 1x1 conv ----
    w5, sh5 = folded[4]
    cout5, cin5, _, _ = w5.shape
    W5m = jnp.transpose(w5, (2, 3, 1, 0)).reshape(cin5, cout5).astype(jnp.bfloat16)
    sh5 = sh5.reshape(1, cout5).astype(jnp.float32)

    kernel_args = (X1, W1m, sh1, *tap_inputs, W5m, sh5)
    out = pl.pallas_call(
        functools.partial(_encoder_kernel, alpha=0.2),
        out_shape=jax.ShapeDtypeStruct((B, cout5), jnp.float32),
        in_specs=[pl.BlockSpec(memory_space=pltpu.MemorySpace.VMEM)]
                 * len(kernel_args),
        out_specs=pl.BlockSpec(memory_space=pltpu.MemorySpace.VMEM),
    )(*kernel_args)

    mu = out[:, :nz].reshape(B, nz, 1, 1)
    logvar = out[:, nz:].reshape(B, nz, 1, 1)
    return mu, logvar


def init_encoder_params(key, ch=1, nz=64, nf=32):
    """Deterministic synthetic parameters matching the PyTorch module shapes."""
    eps = 1e-5
    # (Cin, Cout, kernel, has_bn)
    layer_cfg = [
        (ch,      nf,      4, False),
        (nf,      nf * 2,  4, True),
        (nf * 2,  nf * 4,  4, True),
        (nf * 4,  nf * 8,  4, True),
        (nf * 8,  nz * 2,  1, False),
    ]
    params = []
    for li, (cin, cout, k, has_bn) in enumerate(layer_cfg):
        kw, kb, kg, kbe, km, kv = jax.random.split(jax.random.fold_in(key, li), 6)
        w = 0.05 * jax.random.normal(kw, (cout, cin, k, k), jnp.float32)
        b = 0.05 * jax.random.normal(kb, (cout,), jnp.float32)
        if has_bn:
            gamma = 1.0 + 0.1 * jax.random.normal(kg, (cout,), jnp.float32)
            beta = 0.1 * jax.random.normal(kbe, (cout,), jnp.float32)
            rmean = 0.1 * jax.random.normal(km, (cout,), jnp.float32)
            rvar = jax.random.uniform(kv, (cout,), jnp.float32, 0.5, 1.5)
            scale = gamma / jnp.sqrt(rvar + eps)
            shift = beta - rmean * scale
        else:
            scale = jnp.ones((cout,), jnp.float32)
            shift = jnp.zeros((cout,), jnp.float32)
        params.append(dict(w=w, b=b, scale=scale, shift=shift))
    return params


def _ref_forward(params, x_nchw, *, nz=64):
    """Pure-JAX f32 reference (eval-mode BN), for a numerical self-check."""
    x = x_nchw.astype(jnp.float32)
    cfgs = [(2, 1, True), (2, 1, True), (2, 1, True), (2, 1, True), (1, 0, False)]
    for p, (stride, pad, act) in zip(params, cfgs):
        x = jax.lax.conv_general_dilated(
            x, p["w"], window_strides=(stride, stride),
            padding=((pad, pad), (pad, pad)),
            dimension_numbers=("NCHW", "OIHW", "NCHW"))
        x = x + p["b"][None, :, None, None]
        x = x * p["scale"][None, :, None, None] + p["shift"][None, :, None, None]
        if act:
            x = jnp.where(x >= 0, x, 0.2 * x)
    return x[:, :nz], x[:, nz:]


if __name__ == "__main__":
    key = jax.random.PRNGKey(0)
    kx, kp = jax.random.split(key)

    ch, nz, nf = 1, 64, 32
    B, H, W = 2, 16, 16                      # 16 -> 8 -> 4 -> 2 -> 1 spatial
    x = jax.random.normal(kx, (B, ch, H, W), jnp.float32)
    params = init_encoder_params(kp, ch=ch, nz=nz, nf=nf)

    fwd = jax.jit(functools.partial(encoder_forward, nz=nz))
    mu, logvar = fwd(params, x)
    jax.block_until_ready((mu, logvar))

    assert mu.shape == (B, nz, 1, 1) and logvar.shape == (B, nz, 1, 1)

    # Numerical self-check vs. pure-JAX f32 reference (kernel uses bf16 operands).
    mu_ref, logvar_ref = _ref_forward(params, x, nz=nz)
    err = max(float(jnp.max(jnp.abs(mu - mu_ref))),
              float(jnp.max(jnp.abs(logvar - logvar_ref))))
    ref_scale = max(float(jnp.max(jnp.abs(mu_ref))),
                    float(jnp.max(jnp.abs(logvar_ref))))
    assert err <= 3e-2 + 3e-2 * ref_scale, f"max abs error {err} (ref scale {ref_scale})"

    print("KERNEL_OK")
</pallas_src>

<mosaic_0001>
module attributes {stable_mosaic.version = 11 : i64} {
  func.func @_encoder_kernel(%arg0: memref<128x16xbf16, #tpu.memory_space<vmem>>, %arg1: memref<16x32xbf16, #tpu.memory_space<vmem>>, %arg2: memref<1x32xf32, #tpu.memory_space<vmem>>, %arg3: memref<16x32x128xbf16, #tpu.memory_space<vmem>>, %arg4: memref<16x32x64xbf16, #tpu.memory_space<vmem>>, %arg5: memref<1x64xf32, #tpu.memory_space<vmem>>, %arg6: memref<16x8x32xbf16, #tpu.memory_space<vmem>>, %arg7: memref<16x64x128xbf16, #tpu.memory_space<vmem>>, %arg8: memref<1x128xf32, #tpu.memory_space<vmem>>, %arg9: memref<4x8x8xbf16, #tpu.memory_space<vmem>>, %arg10: memref<4x128x256xbf16, #tpu.memory_space<vmem>>, %arg11: memref<1x256xf32, #tpu.memory_space<vmem>>, %arg12: memref<256x128xbf16, #tpu.memory_space<vmem>>, %arg13: memref<1x128xf32, #tpu.memory_space<vmem>>, %arg14: memref<2x128xf32, #tpu.memory_space<vmem>>) attributes {dimension_semantics = [], scalar_prefetch = 0 : i64, scratch_operands = 0 : i64, tpu.core_type = #tpu.core_type<tc>} {
    %c0 = arith.constant 0 : index
    %c0_0 = arith.constant 0 : index
    %0 = vector.load %arg0[%c0, %c0_0] : memref<128x16xbf16, #tpu.memory_space<vmem>>, vector<128x16xbf16>
    %c0_1 = arith.constant 0 : index
    %c0_2 = arith.constant 0 : index
    %1 = vector.load %arg1[%c0_1, %c0_2] : memref<16x32xbf16, #tpu.memory_space<vmem>>, vector<16x32xbf16>
    %cst = arith.constant dense<0.000000e+00> : vector<128x32xf32>
    %2 = tpu.matmul %0, %1, %cst {dimension_numbers = #tpu.dot_dimension_numbers<[1], [0], [0], [1], [0, 0, 1, 1], [], []>} : vector<128x16xbf16>, vector<16x32xbf16>, vector<128x32xf32> -> vector<128x32xf32>
    %c0_3 = arith.constant 0 : index
    %c0_4 = arith.constant 0 : index
    %3 = vector.load %arg2[%c0_3, %c0_4] : memref<1x32xf32, #tpu.memory_space<vmem>>, vector<1x32xf32>
    %4 = vector.broadcast %3 : vector<1x32xf32> to vector<128x32xf32>
    %5 = arith.addf %2, %4 : vector<128x32xf32>
    %cst_5 = arith.constant 0.000000e+00 : f32
    %6 = vector.broadcast %cst_5 : f32 to vector<128x32xf32>
    %7 = arith.cmpf oge, %5, %6 : vector<128x32xf32>
    %cst_6 = arith.constant 2.000000e-01 : f32
    %8 = vector.broadcast %cst_6 : f32 to vector<128x32xf32>
    %9 = arith.mulf %8, %5 : vector<128x32xf32>
    %10 = arith.select %7, %5, %9 : vector<128x32xi1>, vector<128x32xf32>
    %11 = arith.truncf %10 : vector<128x32xf32> to vector<128x32xbf16>
    %c0_7 = arith.constant 0 : index
    %c0_8 = arith.constant 0 : index
    %12 = vector.load %arg5[%c0_7, %c0_8] : memref<1x64xf32, #tpu.memory_space<vmem>>, vector<1x64xf32>
    %c0_9 = arith.constant 0 : index
    %c0_10 = arith.constant 0 : index
    %c0_11 = arith.constant 0 : index
    %13 = vector.load %arg3[%c0_9, %c0_10, %c0_11] : memref<16x32x128xbf16, #tpu.memory_space<vmem>>, vector<1x32x128xbf16>
    %14 = vector.shape_cast %13 : vector<1x32x128xbf16> to vector<32x128xbf16>
    %cst_12 = arith.constant dense<0.000000e+00> : vector<32x32xf32>
    %15 = tpu.matmul %14, %11, %cst_12 {dimension_numbers = #tpu.dot_dimension_numbers<[1], [0], [0], [1], [0, 0, 1, 1], [], []>} : vector<32x128xbf16>, vector<128x32xbf16>, vector<32x32xf32> -> vector<32x32xf32>
    %16 = arith.truncf %15 : vector<32x32xf32> to vector<32x32xbf16>
    %c0_13 = arith.constant 0 : index
    %c0_14 = arith.constant 0 : index
    %c0_15 = arith.constant 0 : index
    %17 = vector.load %arg4[%c0_13, %c0_14, %c0_15] : memref<16x32x64xbf16, #tpu.memory_space<vmem>>, vector<1x32x64xbf16>
    %18 = vector.shape_cast %17 : vector<1x32x64xbf16> to vector<32x64xbf16>
    %cst_16 = arith.constant dense<0.000000e+00> : vector<32x64xf32>
    %19 = tpu.matmul %16, %18, %cst_16 {dimension_numbers = #tpu.dot_dimension_numbers<[1], [0], [0], [1], [0, 0, 1, 1], [], []>} : vector<32x32xbf16>, vector<32x64xbf16>, vector<32x64xf32> -> vector<32x64xf32>
    %20 = vector.broadcast %12 : vector<1x64xf32> to vector<32x64xf32>
    %21 = arith.addf %20, %19 : vector<32x64xf32>
    %c1 = arith.constant 1 : index
    %c0_17 = arith.constant 0 : index
    %c0_18 = arith.constant 0 : index
    %22 = vector.load %arg3[%c1, %c0_17, %c0_18] : memref<16x32x128xbf16, #tpu.memory_space<vmem>>, vector<1x32x128xbf16>
    %23 = vector.shape_cast %22 : vector<1x32x128xbf16> to vector<32x128xbf16>
    %cst_19 = arith.constant dense<0.000000e+00> : vector<32x32xf32>
    %24 = tpu.matmul %23, %11, %cst_19 {dimension_numbers = #tpu.dot_dimension_numbers<[1], [0], [0], [1], [0, 0, 1, 1], [], []>} : vector<32x128xbf16>, vector<128x32xbf16>, vector<32x32xf32> -> vector<32x32xf32>
    %25 = arith.truncf %24 : vector<32x32xf32> to vector<32x32xbf16>
    %c1_20 = arith.constant 1 : index
    %c0_21 = arith.constant 0 : index
    %c0_22 = arith.constant 0 : index
    %26 = vector.load %arg4[%c1_20, %c0_21, %c0_22] : memref<16x32x64xbf16, #tpu.memory_space<vmem>>, vector<1x32x64xbf16>
    %27 = vector.shape_cast %26 : vector<1x32x64xbf16> to vector<32x64xbf16>
    %cst_23 = arith.constant dense<0.000000e+00> : vector<32x64xf32>
    %28 = tpu.matmul %25, %27, %cst_23 {dimension_numbers = #tpu.dot_dimension_numbers<[1], [0], [0], [1], [0, 0, 1, 1], [], []>} : vector<32x32xbf16>, vector<32x64xbf16>, vector<32x64xf32> -> vector<32x64xf32>
    %29 = arith.addf %21, %28 : vector<32x64xf32>
    %c2 = arith.constant 2 : index
    %c0_24 = arith.constant 0 : index
    %c0_25 = arith.constant 0 : index
    %30 = vector.load %arg3[%c2, %c0_24, %c0_25] : memref<16x32x128xbf16, #tpu.memory_space<vmem>>, vector<1x32x128xbf16>
    %31 = vector.shape_cast %30 : vector<1x32x128xbf16> to vector<32x128xbf16>
    %cst_26 = arith.constant dense<0.000000e+00> : vector<32x32xf32>
    %32 = tpu.matmul %31, %11, %cst_26 {dimension_numbers = #tpu.dot_dimension_numbers<[1], [0], [0], [1], [0, 0, 1, 1], [], []>} : vector<32x128xbf16>, vector<128x32xbf16>, vector<32x32xf32> -> vector<32x32xf32>
    %33 = arith.truncf %32 : vector<32x32xf32> to vector<32x32xbf16>
    %c2_27 = arith.constant 2 : index
    %c0_28 = arith.constant 0 : index
    %c0_29 = arith.constant 0 : index
    %34 = vector.load %arg4[%c2_27, %c0_28, %c0_29] : memref<16x32x64xbf16, #tpu.memory_space<vmem>>, vector<1x32x64xbf16>
    %35 = vector.shape_cast %34 : vector<1x32x64xbf16> to vector<32x64xbf16>
    %cst_30 = arith.constant dense<0.000000e+00> : vector<32x64xf32>
    %36 = tpu.matmul %33, %35, %cst_30 {dimension_numbers = #tpu.dot_dimension_numbers<[1], [0], [0], [1], [0, 0, 1, 1], [], []>} : vector<32x32xbf16>, vector<32x64xbf16>, vector<32x64xf32> -> vector<32x64xf32>
    %37 = arith.addf %29, %36 : vector<32x64xf32>
    %c3 = arith.constant 3 : index
    %c0_31 = arith.constant 0 : index
    %c0_32 = arith.constant 0 : index
    %38 = vector.load %arg3[%c3, %c0_31, %c0_32] : memref<16x32x128xbf16, #tpu.memory_space<vmem>>, vector<1x32x128xbf16>
    %39 = vector.shape_cast %38 : vector<1x32x128xbf16> to vector<32x128xbf16>
    %cst_33 = arith.constant dense<0.000000e+00> : vector<32x32xf32>
    %40 = tpu.matmul %39, %11, %cst_33 {dimension_numbers = #tpu.dot_dimension_numbers<[1], [0], [0], [1], [0, 0, 1, 1], [], []>} : vector<32x128xbf16>, vector<128x32xbf16>, vector<32x32xf32> -> vector<32x32xf32>
    %41 = arith.truncf %40 : vector<32x32xf32> to vector<32x32xbf16>
    %c3_34 = arith.constant 3 : index
    %c0_35 = arith.constant 0 : index
    %c0_36 = arith.constant 0 : index
    %42 = vector.load %arg4[%c3_34, %c0_35, %c0_36] : memref<16x32x64xbf16, #tpu.memory_space<vmem>>, vector<1x32x64xbf16>
    %43 = vector.shape_cast %42 : vector<1x32x64xbf16> to vector<32x64xbf16>
    %cst_37 = arith.constant dense<0.000000e+00> : vector<32x64xf32>
    %44 = tpu.matmul %41, %43, %cst_37 {dimension_numbers = #tpu.dot_dimension_numbers<[1], [0], [0], [1], [0, 0, 1, 1], [], []>} : vector<32x32xbf16>, vector<32x64xbf16>, vector<32x64xf32> -> vector<32x64xf32>
    %45 = arith.addf %37, %44 : vector<32x64xf32>
    %c4 = arith.constant 4 : index
    %c0_38 = arith.constant 0 : index
    %c0_39 = arith.constant 0 : index
    %46 = vector.load %arg3[%c4, %c0_38, %c0_39] : memref<16x32x128xbf16, #tpu.memory_space<vmem>>, vector<1x32x128xbf16>
    %47 = vector.shape_cast %46 : vector<1x32x128xbf16> to vector<32x128xbf16>
    %cst_40 = arith.constant dense<0.000000e+00> : vector<32x32xf32>
    %48 = tpu.matmul %47, %11, %cst_40 {dimension_numbers = #tpu.dot_dimension_numbers<[1], [0], [0], [1], [0, 0, 1, 1], [], []>} : vector<32x128xbf16>, vector<128x32xbf16>, vector<32x32xf32> -> vector<32x32xf32>
    %49 = arith.truncf %48 : vector<32x32xf32> to vector<32x32xbf16>
    %c4_41 = arith.constant 4 : index
    %c0_42 = arith.constant 0 : index
    %c0_43 = arith.constant 0 : index
    %50 = vector.load %arg4[%c4_41, %c0_42, %c0_43] : memref<16x32x64xbf16, #tpu.memory_space<vmem>>, vector<1x32x64xbf16>
    %51 = vector.shape_cast %50 : vector<1x32x64xbf16> to vector<32x64xbf16>
    %cst_44 = arith.constant dense<0.000000e+00> : vector<32x64xf32>
    %52 = tpu.matmul %49, %51, %cst_44 {dimension_numbers = #tpu.dot_dimension_numbers<[1], [0], [0], [1], [0, 0, 1, 1], [], []>} : vector<32x32xbf16>, vector<32x64xbf16>, vector<32x64xf32> -> vector<32x64xf32>
    %53 = arith.addf %45, %52 : vector<32x64xf32>
    %c5 = arith.constant 5 : index
    %c0_45 = arith.constant 0 : index
    %c0_46 = arith.constant 0 : index
    %54 = vector.load %arg3[%c5, %c0_45, %c0_46] : memref<16x32x128xbf16, #tpu.memory_space<vmem>>, vector<1x32x128xbf16>
    %55 = vector.shape_cast %54 : vector<1x32x128xbf16> to vector<32x128xbf16>
    %cst_47 = arith.constant dense<0.000000e+00> : vector<32x32xf32>
    %56 = tpu.matmul %55, %11, %cst_47 {dimension_numbers = #tpu.dot_dimension_numbers<[1], [0], [0], [1], [0, 0, 1, 1], [], []>} : vector<32x128xbf16>, vector<128x32xbf16>, vector<32x32xf32> -> vector<32x32xf32>
    %57 = arith.truncf %56 : vector<32x32xf32> to vector<32x32xbf16>
    %c5_48 = arith.constant 5 : index
    %c0_49 = arith.constant 0 : index
    %c0_50 = arith.constant 0 : index
    %58 = vector.load %arg4[%c5_48, %c0_49, %c0_50] : memref<16x32x64xbf16, #tpu.memory_space<vmem>>, vector<1x32x64xbf16>
    %59 = vector.shape_cast %58 : vector<1x32x64xbf16> to vector<32x64xbf16>
    %cst_51 = arith.constant dense<0.000000e+00> : vector<32x64xf32>
    %60 = tpu.matmul %57, %59, %cst_51 {dimension_numbers = #tpu.dot_dimension_numbers<[1], [0], [0], [1], [0, 0, 1, 1], [], []>} : vector<32x32xbf16>, vector<32x64xbf16>, vector<32x64xf32> -> vector<32x64xf32>
    %61 = arith.addf %53, %60 : vector<32x64xf32>
    %c6 = arith.constant 6 : index
    %c0_52 = arith.constant 0 : index
    %c0_53 = arith.constant 0 : index
    %62 = vector.load %arg3[%c6, %c0_52, %c0_53] : memref<16x32x128xbf16, #tpu.memory_space<vmem>>, vector<1x32x128xbf16>
    %63 = vector.shape_cast %62 : vector<1x32x128xbf16> to vector<32x128xbf16>
    %cst_54 = arith.constant dense<0.000000e+00> : vector<32x32xf32>
    %64 = tpu.matmul %63, %11, %cst_54 {dimension_numbers = #tpu.dot_dimension_numbers<[1], [0], [0], [1], [0, 0, 1, 1], [], []>} : vector<32x128xbf16>, vector<128x32xbf16>, vector<32x32xf32> -> vector<32x32xf32>
    %65 = arith.truncf %64 : vector<32x32xf32> to vector<32x32xbf16>
    %c6_55 = arith.constant 6 : index
    %c0_56 = arith.constant 0 : index
    %c0_57 = arith.constant 0 : index
    %66 = vector.load %arg4[%c6_55, %c0_56, %c0_57] : memref<16x32x64xbf16, #tpu.memory_space<vmem>>, vector<1x32x64xbf16>
    %67 = vector.shape_cast %66 : vector<1x32x64xbf16> to vector<32x64xbf16>
    %cst_58 = arith.constant dense<0.000000e+00> : vector<32x64xf32>
    %68 = tpu.matmul %65, %67, %cst_58 {dimension_numbers = #tpu.dot_dimension_numbers<[1], [0], [0], [1], [0, 0, 1, 1], [], []>} : vector<32x32xbf16>, vector<32x64xbf16>, vector<32x64xf32> -> vector<32x64xf32>
    %69 = arith.addf %61, %68 : vector<32x64xf32>
    %c7 = arith.constant 7 : index
    %c0_59 = arith.constant 0 : index
    %c0_60 = arith.constant 0 : index
    %70 = vector.load %arg3[%c7, %c0_59, %c0_60] : memref<16x32x128xbf16, #tpu.memory_space<vmem>>, vector<1x32x128xbf16>
    %71 = vector.shape_cast %70 : vector<1x32x128xbf16> to vector<32x128xbf16>
    %cst_61 = arith.constant dense<0.000000e+00> : vector<32x32xf32>
    %72 = tpu.matmul %71, %11, %cst_61 {dimension_numbers = #tpu.dot_dimension_numbers<[1], [0], [0], [1], [0, 0, 1, 1], [], []>} : vector<32x128xbf16>, vector<128x32xbf16>, vector<32x32xf32> -> vector<32x32xf32>
    %73 = arith.truncf %72 : vector<32x32xf32> to vector<32x32xbf16>
    %c7_62 = arith.constant 7 : index
    %c0_63 = arith.constant 0 : index
    %c0_64 = arith.constant 0 : index
    %74 = vector.load %arg4[%c7_62, %c0_63, %c0_64] : memref<16x32x64xbf16, #tpu.memory_space<vmem>>, vector<1x32x64xbf16>
    %75 = vector.shape_cast %74 : vector<1x32x64xbf16> to vector<32x64xbf16>
    %cst_65 = arith.constant dense<0.000000e+00> : vector<32x64xf32>
    %76 = tpu.matmul %73, %75, %cst_65 {dimension_numbers = #tpu.dot_dimension_numbers<[1], [0], [0], [1], [0, 0, 1, 1], [], []>} : vector<32x32xbf16>, vector<32x64xbf16>, vector<32x64xf32> -> vector<32x64xf32>
    %77 = arith.addf %69, %76 : vector<32x64xf32>
    %c8 = arith.constant 8 : index
    %c0_66 = arith.constant 0 : index
    %c0_67 = arith.constant 0 : index
    %78 = vector.load %arg3[%c8, %c0_66, %c0_67] : memref<16x32x128xbf16, #tpu.memory_space<vmem>>, vector<1x32x128xbf16>
    %79 = vector.shape_cast %78 : vector<1x32x128xbf16> to vector<32x128xbf16>
    %cst_68 = arith.constant dense<0.000000e+00> : vector<32x32xf32>
    %80 = tpu.matmul %79, %11, %cst_68 {dimension_numbers = #tpu.dot_dimension_numbers<[1], [0], [0], [1], [0, 0, 1, 1], [], []>} : vector<32x128xbf16>, vector<128x32xbf16>, vector<32x32xf32> -> vector<32x32xf32>
    %81 = arith.truncf %80 : vector<32x32xf32> to vector<32x32xbf16>
    %c8_69 = arith.constant 8 : index
    %c0_70 = arith.constant 0 : index
    %c0_71 = arith.constant 0 : index
    %82 = vector.load %arg4[%c8_69, %c0_70, %c0_71] : memref<16x32x64xbf16, #tpu.memory_space<vmem>>, vector<1x32x64xbf16>
    %83 = vector.shape_cast %82 : vector<1x32x64xbf16> to vector<32x64xbf16>
    %cst_72 = arith.constant dense<0.000000e+00> : vector<32x64xf32>
    %84 = tpu.matmul %81, %83, %cst_72 {dimension_numbers = #tpu.dot_dimension_numbers<[1], [0], [0], [1], [0, 0, 1, 1], [], []>} : vector<32x32xbf16>, vector<32x64xbf16>, vector<32x64xf32> -> vector<32x64xf32>
    %85 = arith.addf %77, %84 : vector<32x64xf32>
    %c9 = arith.constant 9 : index
    %c0_73 = arith.constant 0 : index
    %c0_74 = arith.constant 0 : index
    %86 = vector.load %arg3[%c9, %c0_73, %c0_74] : memref<16x32x128xbf16, #tpu.memory_space<vmem>>, vector<1x32x128xbf16>
    %87 = vector.shape_cast %86 : vector<1x32x128xbf16> to vector<32x128xbf16>
    %cst_75 = arith.constant dense<0.000000e+00> : vector<32x32xf32>
    %88 = tpu.matmul %87, %11, %cst_75 {dimension_numbers = #tpu.dot_dimension_numbers<[1], [0], [0], [1], [0, 0, 1, 1], [], []>} : vector<32x128xbf16>, vector<128x32xbf16>, vector<32x32xf32> -> vector<32x32xf32>
    %89 = arith.truncf %88 : vector<32x32xf32> to vector<32x32xbf16>
    %c9_76 = arith.constant 9 : index
    %c0_77 = arith.constant 0 : index
    %c0_78 = arith.constant 0 : index
    %90 = vector.load %arg4[%c9_76, %c0_77, %c0_78] : memref<16x32x64xbf16, #tpu.memory_space<vmem>>, vector<1x32x64xbf16>
    %91 = vector.shape_cast %90 : vector<1x32x64xbf16> to vector<32x64xbf16>
    %cst_79 = arith.constant dense<0.000000e+00> : vector<32x64xf32>
    %92 = tpu.matmul %89, %91, %cst_79 {dimension_numbers = #tpu.dot_dimension_numbers<[1], [0], [0], [1], [0, 0, 1, 1], [], []>} : vector<32x32xbf16>, vector<32x64xbf16>, vector<32x64xf32> -> vector<32x64xf32>
    %93 = arith.addf %85, %92 : vector<32x64xf32>
    %c10 = arith.constant 10 : index
    %c0_80 = arith.constant 0 : index
    %c0_81 = arith.constant 0 : index
    %94 = vector.load %arg3[%c10, %c0_80, %c0_81] : memref<16x32x128xbf16, #tpu.memory_space<vmem>>, vector<1x32x128xbf16>
    %95 = vector.shape_cast %94 : vector<1x32x128xbf16> to vector<32x128xbf16>
    %cst_82 = arith.constant dense<0.000000e+00> : vector<32x32xf32>
    %96 = tpu.matmul %95, %11, %cst_82 {dimension_numbers = #tpu.dot_dimension_numbers<[1], [0], [0], [1], [0, 0, 1, 1], [], []>} : vector<32x128xbf16>, vector<128x32xbf16>, vector<32x32xf32> -> vector<32x32xf32>
    %97 = arith.truncf %96 : vector<32x32xf32> to vector<32x32xbf16>
    %c10_83 = arith.constant 10 : index
    %c0_84 = arith.constant 0 : index
    %c0_85 = arith.constant 0 : index
    %98 = vector.load %arg4[%c10_83, %c0_84, %c0_85] : memref<16x32x64xbf16, #tpu.memory_space<vmem>>, vector<1x32x64xbf16>
    %99 = vector.shape_cast %98 : vector<1x32x64xbf16> to vector<32x64xbf16>
    %cst_86 = arith.constant dense<0.000000e+00> : vector<32x64xf32>
    %100 = tpu.matmul %97, %99, %cst_86 {dimension_numbers = #tpu.dot_dimension_numbers<[1], [0], [0], [1], [0, 0, 1, 1], [], []>} : vector<32x32xbf16>, vector<32x64xbf16>, vector<32x64xf32> -> vector<32x64xf32>
    %101 = arith.addf %93, %100 : vector<32x64xf32>
    %c11 = arith.constant 11 : index
    %c0_87 = arith.constant 0 : index
    %c0_88 = arith.constant 0 : index
    %102 = vector.load %arg3[%c11, %c0_87, %c0_88] : memref<16x32x128xbf16, #tpu.memory_space<vmem>>, vector<1x32x128xbf16>
    %103 = vector.shape_cast %102 : vector<1x32x128xbf16> to vector<32x128xbf16>
    %cst_89 = arith.constant dense<0.000000e+00> : vector<32x32xf32>
    %104 = tpu.matmul %103, %11, %cst_89 {dimension_numbers = #tpu.dot_dimension_numbers<[1], [0], [0], [1], [0, 0, 1, 1], [], []>} : vector<32x128xbf16>, vector<128x32xbf16>, vector<32x32xf32> -> vector<32x32xf32>
    %105 = arith.truncf %104 : vector<32x32xf32> to vector<32x32xbf16>
    %c11_90 = arith.constant 11 : index
    %c0_91 = arith.constant 0 : index
    %c0_92 = arith.constant 0 : index
    %106 = vector.load %arg4[%c11_90, %c0_91, %c0_92] : memref<16x32x64xbf16, #tpu.memory_space<vmem>>, vector<1x32x64xbf16>
    %107 = vector.shape_cast %106 : vector<1x32x64xbf16> to vector<32x64xbf16>
    %cst_93 = arith.constant dense<0.000000e+00> : vector<32x64xf32>
    %108 = tpu.matmul %105, %107, %cst_93 {dimension_numbers = #tpu.dot_dimension_numbers<[1], [0], [0], [1], [0, 0, 1, 1], [], []>} : vector<32x32xbf16>, vector<32x64xbf16>, vector<32x64xf32> -> vector<32x64xf32>
    %109 = arith.addf %101, %108 : vector<32x64xf32>
    %c12 = arith.constant 12 : index
    %c0_94 = arith.constant 0 : index
    %c0_95 = arith.constant 0 : index
    %110 = vector.load %arg3[%c12, %c0_94, %c0_95] : memref<16x32x128xbf16, #tpu.memory_space<vmem>>, vector<1x32x128xbf16>
    %111 = vector.shape_cast %110 : vector<1x32x128xbf16> to vector<32x128xbf16>
    %cst_96 = arith.constant dense<0.000000e+00> : vector<32x32xf32>
    %112 = tpu.matmul %111, %11, %cst_96 {dimension_numbers = #tpu.dot_dimension_numbers<[1], [0], [0], [1], [0, 0, 1, 1], [], []>} : vector<32x128xbf16>, vector<128x32xbf16>, vector<32x32xf32> -> vector<32x32xf32>
    %113 = arith.truncf %112 : vector<32x32xf32> to vector<32x32xbf16>
    %c12_97 = arith.constant 12 : index
    %c0_98 = arith.constant 0 : index
    %c0_99 = arith.constant 0 : index
    %114 = vector.load %arg4[%c12_97, %c0_98, %c0_99] : memref<16x32x64xbf16, #tpu.memory_space<vmem>>, vector<1x32x64xbf16>
    %115 = vector.shape_cast %114 : vector<1x32x64xbf16> to vector<32x64xbf16>
    %cst_100 = arith.constant dense<0.000000e+00> : vector<32x64xf32>
    %116 = tpu.matmul %113, %115, %cst_100 {dimension_numbers = #tpu.dot_dimension_numbers<[1], [0], [0], [1], [0, 0, 1, 1], [], []>} : vector<32x32xbf16>, vector<32x64xbf16>, vector<32x64xf32> -> vector<32x64xf32>
    %117 = arith.addf %109, %116 : vector<32x64xf32>
    %c13 = arith.constant 13 : index
    %c0_101 = arith.constant 0 : index
    %c0_102 = arith.constant 0 : index
    %118 = vector.load %arg3[%c13, %c0_101, %c0_102] : memref<16x32x128xbf16, #tpu.memory_space<vmem>>, vector<1x32x128xbf16>
    %119 = vector.shape_cast %118 : vector<1x32x128xbf16> to vector<32x128xbf16>
    %cst_103 = arith.constant dense<0.000000e+00> : vector<32x32xf32>
    %120 = tpu.matmul %119, %11, %cst_103 {dimension_numbers = #tpu.dot_dimension_numbers<[1], [0], [0], [1], [0, 0, 1, 1], [], []>} : vector<32x128xbf16>, vector<128x32xbf16>, vector<32x32xf32> -> vector<32x32xf32>
    %121 = arith.truncf %120 : vector<32x32xf32> to vector<32x32xbf16>
    %c13_104 = arith.constant 13 : index
    %c0_105 = arith.constant 0 : index
    %c0_106 = arith.constant 0 : index
    %122 = vector.load %arg4[%c13_104, %c0_105, %c0_106] : memref<16x32x64xbf16, #tpu.memory_space<vmem>>, vector<1x32x64xbf16>
    %123 = vector.shape_cast %122 : vector<1x32x64xbf16> to vector<32x64xbf16>
    %cst_107 = arith.constant dense<0.000000e+00> : vector<32x64xf32>
    %124 = tpu.matmul %121, %123, %cst_107 {dimension_numbers = #tpu.dot_dimension_numbers<[1], [0], [0], [1], [0, 0, 1, 1], [], []>} : vector<32x32xbf16>, vector<32x64xbf16>, vector<32x64xf32> -> vector<32x64xf32>
    %125 = arith.addf %117, %124 : vector<32x64xf32>
    %c14 = arith.constant 14 : index
    %c0_108 = arith.constant 0 : index
    %c0_109 = arith.constant 0 : index
    %126 = vector.load %arg3[%c14, %c0_108, %c0_109] : memref<16x32x128xbf16, #tpu.memory_space<vmem>>, vector<1x32x128xbf16>
    %127 = vector.shape_cast %126 : vector<1x32x128xbf16> to vector<32x128xbf16>
    %cst_110 = arith.constant dense<0.000000e+00> : vector<32x32xf32>
    %128 = tpu.matmul %127, %11, %cst_110 {dimension_numbers = #tpu.dot_dimension_numbers<[1], [0], [0], [1], [0, 0, 1, 1], [], []>} : vector<32x128xbf16>, vector<128x32xbf16>, vector<32x32xf32> -> vector<32x32xf32>
    %129 = arith.truncf %128 : vector<32x32xf32> to vector<32x32xbf16>
    %c14_111 = arith.constant 14 : index
    %c0_112 = arith.constant 0 : index
    %c0_113 = arith.constant 0 : index
    %130 = vector.load %arg4[%c14_111, %c0_112, %c0_113] : memref<16x32x64xbf16, #tpu.memory_space<vmem>>, vector<1x32x64xbf16>
    %131 = vector.shape_cast %130 : vector<1x32x64xbf16> to vector<32x64xbf16>
    %cst_114 = arith.constant dense<0.000000e+00> : vector<32x64xf32>
    %132 = tpu.matmul %129, %131, %cst_114 {dimension_numbers = #tpu.dot_dimension_numbers<[1], [0], [0], [1], [0, 0, 1, 1], [], []>} : vector<32x32xbf16>, vector<32x64xbf16>, vector<32x64xf32> -> vector<32x64xf32>
    %133 = arith.addf %125, %132 : vector<32x64xf32>
    %c15 = arith.constant 15 : index
    %c0_115 = arith.constant 0 : index
    %c0_116 = arith.constant 0 : index
    %134 = vector.load %arg3[%c15, %c0_115, %c0_116] : memref<16x32x128xbf16, #tpu.memory_space<vmem>>, vector<1x32x128xbf16>
    %135 = vector.shape_cast %134 : vector<1x32x128xbf16> to vector<32x128xbf16>
    %cst_117 = arith.constant dense<0.000000e+00> : vector<32x32xf32>
    %136 = tpu.matmul %135, %11, %cst_117 {dimension_numbers = #tpu.dot_dimension_numbers<[1], [0], [0], [1], [0, 0, 1, 1], [], []>} : vector<32x128xbf16>, vector<128x32xbf16>, vector<32x32xf32> -> vector<32x32xf32>
    %137 = arith.truncf %136 : vector<32x32xf32> to vector<32x32xbf16>
    %c15_118 = arith.constant 15 : index
    %c0_119 = arith.constant 0 : index
    %c0_120 = arith.constant 0 : index
    %138 = vector.load %arg4[%c15_118, %c0_119, %c0_120] : memref<16x32x64xbf16, #tpu.memory_space<vmem>>, vector<1x32x64xbf16>
    %139 = vector.shape_cast %138 : vector<1x32x64xbf16> to vector<32x64xbf16>
    %cst_121 = arith.constant dense<0.000000e+00> : vector<32x64xf32>
    %140 = tpu.matmul %137, %139, %cst_121 {dimension_numbers = #tpu.dot_dimension_numbers<[1], [0], [0], [1], [0, 0, 1, 1], [], []>} : vector<32x32xbf16>, vector<32x64xbf16>, vector<32x64xf32> -> vector<32x64xf32>
    %141 = arith.addf %133, %140 : vector<32x64xf32>
    %cst_122 = arith.constant 0.000000e+00 : f32
    %142 = vector.broadcast %cst_122 : f32 to vector<32x64xf32>
    %143 = arith.cmpf oge, %141, %142 : vector<32x64xf32>
    %cst_123 = arith.constant 2.000000e-01 : f32
    %144 = vector.broadcast %cst_123 : f32 to vector<32x64xf32>
    %145 = arith.mulf %144, %141 : vector<32x64xf32>
    %146 = arith.select %143, %141, %145 : vector<32x64xi1>, vector<32x64xf32>
    %147 = arith.truncf %146 : vector<32x64xf32> to vector<32x64xbf16>
    %c0_124 = arith.constant 0 : index
    %c0_125 = arith.constant 0 : index
    %148 = vector.load %arg8[%c0_124, %c0_125] : memref<1x128xf32, #tpu.memory_space<vmem>>, vector<1x128xf32>
    %c0_126 = arith.constant 0 : index
    %c0_127 = arith.constant 0 : index
    %c0_128 = arith.constant 0 : index
    %149 = vector.load %arg6[%c0_126, %c0_127, %c0_128] : memref<16x8x32xbf16, #tpu.memory_space<vmem>>, vector<1x8x32xbf16>
    %150 = vector.shape_cast %149 : vector<1x8x32xbf16> to vector<8x32xbf16>
    %cst_129 = arith.constant dense<0.000000e+00> : vector<8x64xf32>
    %151 = tpu.matmul %150, %147, %cst_129 {dimension_numbers = #tpu.dot_dimension_numbers<[1], [0], [0], [1], [0, 0, 1, 1], [], []>} : vector<8x32xbf16>, vector<32x64xbf16>, vector<8x64xf32> -> vector<8x64xf32>
    %152 = arith.truncf %151 : vector<8x64xf32> to vector<8x64xbf16>
    %c0_130 = arith.constant 0 : index
    %c0_131 = arith.constant 0 : index
    %c0_132 = arith.constant 0 : index
    %153 = vector.load %arg7[%c0_130, %c0_131, %c0_132] : memref<16x64x128xbf16, #tpu.memory_space<vmem>>, vector<1x64x128xbf16>
    %154 = vector.shape_cast %153 : vector<1x64x128xbf16> to vector<64x128xbf16>
    %cst_133 = arith.constant dense<0.000000e+00> : vector<8x128xf32>
    %155 = tpu.matmul %152, %154, %cst_133 {dimension_numbers = #tpu.dot_dimension_numbers<[1], [0], [0], [1], [0, 0, 1, 1], [], []>} : vector<8x64xbf16>, vector<64x128xbf16>, vector<8x128xf32> -> vector<8x128xf32>
    %156 = vector.broadcast %148 : vector<1x128xf32> to vector<8x128xf32>
    %157 = arith.addf %156, %155 : vector<8x128xf32>
    %c1_134 = arith.constant 1 : index
    %c0_135 = arith.constant 0 : index
    %c0_136 = arith.constant 0 : index
    %158 = vector.load %arg6[%c1_134, %c0_135, %c0_136] : memref<16x8x32xbf16, #tpu.memory_space<vmem>>, vector<1x8x32xbf16>
    %159 = vector.shape_cast %158 : vector<1x8x32xbf16> to vector<8x32xbf16>
    %cst_137 = arith.constant dense<0.000000e+00> : vector<8x64xf32>
    %160 = tpu.matmul %159, %147, %cst_137 {dimension_numbers = #tpu.dot_dimension_numbers<[1], [0], [0], [1], [0, 0, 1, 1], [], []>} : vector<8x32xbf16>, vector<32x64xbf16>, vector<8x64xf32> -> vector<8x64xf32>
    %161 = arith.truncf %160 : vector<8x64xf32> to vector<8x64xbf16>
    %c1_138 = arith.constant 1 : index
    %c0_139 = arith.constant 0 : index
    %c0_140 = arith.constant 0 : index
    %162 = vector.load %arg7[%c1_138, %c0_139, %c0_140] : memref<16x64x128xbf16, #tpu.memory_space<vmem>>, vector<1x64x128xbf16>
    %163 = vector.shape_cast %162 : vector<1x64x128xbf16> to vector<64x128xbf16>
    %cst_141 = arith.constant dense<0.000000e+00> : vector<8x128xf32>
    %164 = tpu.matmul %161, %163, %cst_141 {dimension_numbers = #tpu.dot_dimension_numbers<[1], [0], [0], [1], [0, 0, 1, 1], [], []>} : vector<8x64xbf16>, vector<64x128xbf16>, vector<8x128xf32> -> vector<8x128xf32>
    %165 = arith.addf %157, %164 : vector<8x128xf32>
    %c2_142 = arith.constant 2 : index
    %c0_143 = arith.constant 0 : index
    %c0_144 = arith.constant 0 : index
    %166 = vector.load %arg6[%c2_142, %c0_143, %c0_144] : memref<16x8x32xbf16, #tpu.memory_space<vmem>>, vector<1x8x32xbf16>
    %167 = vector.shape_cast %166 : vector<1x8x32xbf16> to vector<8x32xbf16>
    %cst_145 = arith.constant dense<0.000000e+00> : vector<8x64xf32>
    %168 = tpu.matmul %167, %147, %cst_145 {dimension_numbers = #tpu.dot_dimension_numbers<[1], [0], [0], [1], [0, 0, 1, 1], [], []>} : vector<8x32xbf16>, vector<32x64xbf16>, vector<8x64xf32> -> vector<8x64xf32>
    %169 = arith.truncf %168 : vector<8x64xf32> to vector<8x64xbf16>
    %c2_146 = arith.constant 2 : index
    %c0_147 = arith.constant 0 : index
    %c0_148 = arith.constant 0 : index
    %170 = vector.load %arg7[%c2_146, %c0_147, %c0_148] : memref<16x64x128xbf16, #tpu.memory_space<vmem>>, vector<1x64x128xbf16>
    %171 = vector.shape_cast %170 : vector<1x64x128xbf16> to vector<64x128xbf16>
    %cst_149 = arith.constant dense<0.000000e+00> : vector<8x128xf32>
    %172 = tpu.matmul %169, %171, %cst_149 {dimension_numbers = #tpu.dot_dimension_numbers<[1], [0], [0], [1], [0, 0, 1, 1], [], []>} : vector<8x64xbf16>, vector<64x128xbf16>, vector<8x128xf32> -> vector<8x128xf32>
    %173 = arith.addf %165, %172 : vector<8x128xf32>
    %c3_150 = arith.constant 3 : index
    %c0_151 = arith.constant 0 : index
    %c0_152 = arith.constant 0 : index
    %174 = vector.load %arg6[%c3_150, %c0_151, %c0_152] : memref<16x8x32xbf16, #tpu.memory_space<vmem>>, vector<1x8x32xbf16>
    %175 = vector.shape_cast %174 : vector<1x8x32xbf16> to vector<8x32xbf16>
    %cst_153 = arith.constant dense<0.000000e+00> : vector<8x64xf32>
    %176 = tpu.matmul %175, %147, %cst_153 {dimension_numbers = #tpu.dot_dimension_numbers<[1], [0], [0], [1], [0, 0, 1, 1], [], []>} : vector<8x32xbf16>, vector<32x64xbf16>, vector<8x64xf32> -> vector<8x64xf32>
    %177 = arith.truncf %176 : vector<8x64xf32> to vector<8x64xbf16>
    %c3_154 = arith.constant 3 : index
    %c0_155 = arith.constant 0 : index
    %c0_156 = arith.constant 0 : index
    %178 = vector.load %arg7[%c3_154, %c0_155, %c0_156] : memref<16x64x128xbf16, #tpu.memory_space<vmem>>, vector<1x64x128xbf16>
    %179 = vector.shape_cast %178 : vector<1x64x128xbf16> to vector<64x128xbf16>
    %cst_157 = arith.constant dense<0.000000e+00> : vector<8x128xf32>
    %180 = tpu.matmul %177, %179, %cst_157 {dimension_numbers = #tpu.dot_dimension_numbers<[1], [0], [0], [1], [0, 0, 1, 1], [], []>} : vector<8x64xbf16>, vector<64x128xbf16>, vector<8x128xf32> -> vector<8x128xf32>
    %181 = arith.addf %173, %180 : vector<8x128xf32>
    %c4_158 = arith.constant 4 : index
    %c0_159 = arith.constant 0 : index
    %c0_160 = arith.constant 0 : index
    %182 = vector.load %arg6[%c4_158, %c0_159, %c0_160] : memref<16x8x32xbf16, #tpu.memory_space<vmem>>, vector<1x8x32xbf16>
    %183 = vector.shape_cast %182 : vector<1x8x32xbf16> to vector<8x32xbf16>
    %cst_161 = arith.constant dense<0.000000e+00> : vector<8x64xf32>
    %184 = tpu.matmul %183, %147, %cst_161 {dimension_numbers = #tpu.dot_dimension_numbers<[1], [0], [0], [1], [0, 0, 1, 1], [], []>} : vector<8x32xbf16>, vector<32x64xbf16>, vector<8x64xf32> -> vector<8x64xf32>
    %185 = arith.truncf %184 : vector<8x64xf32> to vector<8x64xbf16>
    %c4_162 = arith.constant 4 : index
    %c0_163 = arith.constant 0 : index
    %c0_164 = arith.constant 0 : index
    %186 = vector.load %arg7[%c4_162, %c0_163, %c0_164] : memref<16x64x128xbf16, #tpu.memory_space<vmem>>, vector<1x64x128xbf16>
    %187 = vector.shape_cast %186 : vector<1x64x128xbf16> to vector<64x128xbf16>
    %cst_165 = arith.constant dense<0.000000e+00> : vector<8x128xf32>
    %188 = tpu.matmul %185, %187, %cst_165 {dimension_numbers = #tpu.dot_dimension_numbers<[1], [0], [0], [1], [0, 0, 1, 1], [], []>} : vector<8x64xbf16>, vector<64x128xbf16>, vector<8x128xf32> -> vector<8x128xf32>
    %189 = arith.addf %181, %188 : vector<8x128xf32>
    %c5_166 = arith.constant 5 : index
    %c0_167 = arith.constant 0 : index
    %c0_168 = arith.constant 0 : index
    %190 = vector.load %arg6[%c5_166, %c0_167, %c0_168] : memref<16x8x32xbf16, #tpu.memory_space<vmem>>, vector<1x8x32xbf16>
    %191 = vector.shape_cast %190 : vector<1x8x32xbf16> to vector<8x32xbf16>
    %cst_169 = arith.constant dense<0.000000e+00> : vector<8x64xf32>
    %192 = tpu.matmul %191, %147, %cst_169 {dimension_numbers = #tpu.dot_dimension_numbers<[1], [0], [0], [1], [0, 0, 1, 1], [], []>} : vector<8x32xbf16>, vector<32x64xbf16>, vector<8x64xf32> -> vector<8x64xf32>
    %193 = arith.truncf %192 : vector<8x64xf32> to vector<8x64xbf16>
    %c5_170 = arith.constant 5 : index
    %c0_171 = arith.constant 0 : index
    %c0_172 = arith.constant 0 : index
    %194 = vector.load %arg7[%c5_170, %c0_171, %c0_172] : memref<16x64x128xbf16, #tpu.memory_space<vmem>>, vector<1x64x128xbf16>
    %195 = vector.shape_cast %194 : vector<1x64x128xbf16> to vector<64x128xbf16>
    %cst_173 = arith.constant dense<0.000000e+00> : vector<8x128xf32>
    %196 = tpu.matmul %193, %195, %cst_173 {dimension_numbers = #tpu.dot_dimension_numbers<[1], [0], [0], [1], [0, 0, 1, 1], [], []>} : vector<8x64xbf16>, vector<64x128xbf16>, vector<8x128xf32> -> vector<8x128xf32>
    %197 = arith.addf %189, %196 : vector<8x128xf32>
    %c6_174 = arith.constant 6 : index
    %c0_175 = arith.constant 0 : index
    %c0_176 = arith.constant 0 : index
    %198 = vector.load %arg6[%c6_174, %c0_175, %c0_176] : memref<16x8x32xbf16, #tpu.memory_space<vmem>>, vector<1x8x32xbf16>
    %199 = vector.shape_cast %198 : vector<1x8x32xbf16> to vector<8x32xbf16>
    %cst_177 = arith.constant dense<0.000000e+00> : vector<8x64xf32>
    %200 = tpu.matmul %199, %147, %cst_177 {dimension_numbers = #tpu.dot_dimension_numbers<[1], [0], [0], [1], [0, 0, 1, 1], [], []>} : vector<8x32xbf16>, vector<32x64xbf16>, vector<8x64xf32> -> vector<8x64xf32>
    %201 = arith.truncf %200 : vector<8x64xf32> to vector<8x64xbf16>
    %c6_178 = arith.constant 6 : index
    %c0_179 = arith.constant 0 : index
    %c0_180 = arith.constant 0 : index
    %202 = vector.load %arg7[%c6_178, %c0_179, %c0_180] : memref<16x64x128xbf16, #tpu.memory_space<vmem>>, vector<1x64x128xbf16>
    %203 = vector.shape_cast %202 : vector<1x64x128xbf16> to vector<64x128xbf16>
    %cst_181 = arith.constant dense<0.000000e+00> : vector<8x128xf32>
    %204 = tpu.matmul %201, %203, %cst_181 {dimension_numbers = #tpu.dot_dimension_numbers<[1], [0], [0], [1], [0, 0, 1, 1], [], []>} : vector<8x64xbf16>, vector<64x128xbf16>, vector<8x128xf32> -> vector<8x128xf32>
    %205 = arith.addf %197, %204 : vector<8x128xf32>
    %c7_182 = arith.constant 7 : index
    %c0_183 = arith.constant 0 : index
    %c0_184 = arith.constant 0 : index
    %206 = vector.load %arg6[%c7_182, %c0_183, %c0_184] : memref<16x8x32xbf16, #tpu.memory_space<vmem>>, vector<1x8x32xbf16>
    %207 = vector.shape_cast %206 : vector<1x8x32xbf16> to vector<8x32xbf16>
    %cst_185 = arith.constant dense<0.000000e+00> : vector<8x64xf32>
    %208 = tpu.matmul %207, %147, %cst_185 {dimension_numbers = #tpu.dot_dimension_numbers<[1], [0], [0], [1], [0, 0, 1, 1], [], []>} : vector<8x32xbf16>, vector<32x64xbf16>, vector<8x64xf32> -> vector<8x64xf32>
    %209 = arith.truncf %208 : vector<8x64xf32> to vector<8x64xbf16>
    %c7_186 = arith.constant 7 : index
    %c0_187 = arith.constant 0 : index
    %c0_188 = arith.constant 0 : index
    %210 = vector.load %arg7[%c7_186, %c0_187, %c0_188] : memref<16x64x128xbf16, #tpu.memory_space<vmem>>, vector<1x64x128xbf16>
    %211 = vector.shape_cast %210 : vector<1x64x128xbf16> to vector<64x128xbf16>
    %cst_189 = arith.constant dense<0.000000e+00> : vector<8x128xf32>
    %212 = tpu.matmul %209, %211, %cst_189 {dimension_numbers = #tpu.dot_dimension_numbers<[1], [0], [0], [1], [0, 0, 1, 1], [], []>} : vector<8x64xbf16>, vector<64x128xbf16>, vector<8x128xf32> -> vector<8x128xf32>
    %213 = arith.addf %205, %212 : vector<8x128xf32>
    %c8_190 = arith.constant 8 : index
    %c0_191 = arith.constant 0 : index
    %c0_192 = arith.constant 0 : index
    %214 = vector.load %arg6[%c8_190, %c0_191, %c0_192] : memref<16x8x32xbf16, #tpu.memory_space<vmem>>, vector<1x8x32xbf16>
    %215 = vector.shape_cast %214 : vector<1x8x32xbf16> to vector<8x32xbf16>
    %cst_193 = arith.constant dense<0.000000e+00> : vector<8x64xf32>
    %216 = tpu.matmul %215, %147, %cst_193 {dimension_numbers = #tpu.dot_dimension_numbers<[1], [0], [0], [1], [0, 0, 1, 1], [], []>} : vector<8x32xbf16>, vector<32x64xbf16>, vector<8x64xf32> -> vector<8x64xf32>
    %217 = arith.truncf %216 : vector<8x64xf32> to vector<8x64xbf16>
    %c8_194 = arith.constant 8 : index
    %c0_195 = arith.constant 0 : index
    %c0_196 = arith.constant 0 : index
    %218 = vector.load %arg7[%c8_194, %c0_195, %c0_196] : memref<16x64x128xbf16, #tpu.memory_space<vmem>>, vector<1x64x128xbf16>
    %219 = vector.shape_cast %218 : vector<1x64x128xbf16> to vector<64x128xbf16>
    %cst_197 = arith.constant dense<0.000000e+00> : vector<8x128xf32>
    %220 = tpu.matmul %217, %219, %cst_197 {dimension_numbers = #tpu.dot_dimension_numbers<[1], [0], [0], [1], [0, 0, 1, 1], [], []>} : vector<8x64xbf16>, vector<64x128xbf16>, vector<8x128xf32> -> vector<8x128xf32>
    %221 = arith.addf %213, %220 : vector<8x128xf32>
    %c9_198 = arith.constant 9 : index
    %c0_199 = arith.constant 0 : index
    %c0_200 = arith.constant 0 : index
    %222 = vector.load %arg6[%c9_198, %c0_199, %c0_200] : memref<16x8x32xbf16, #tpu.memory_space<vmem>>, vector<1x8x32xbf16>
    %223 = vector.shape_cast %222 : vector<1x8x32xbf16> to vector<8x32xbf16>
    %cst_201 = arith.constant dense<0.000000e+00> : vector<8x64xf32>
    %224 = tpu.matmul %223, %147, %cst_201 {dimension_numbers = #tpu.dot_dimension_numbers<[1], [0], [0], [1], [0, 0, 1, 1], [], []>} : vector<8x32xbf16>, vector<32x64xbf16>, vector<8x64xf32> -> vector<8x64xf32>
    %225 = arith.truncf %224 : vector<8x64xf32> to vector<8x64xbf16>
    %c9_202 = arith.constant 9 : index
    %c0_203 = arith.constant 0 : index
    %c0_204 = arith.constant 0 : index
    %226 = vector.load %arg7[%c9_202, %c0_203, %c0_204] : memref<16x64x128xbf16, #tpu.memory_space<vmem>>, vector<1x64x128xbf16>
    %227 = vector.shape_cast %226 : vector<1x64x128xbf16> to vector<64x128xbf16>
    %cst_205 = arith.constant dense<0.000000e+00> : vector<8x128xf32>
    %228 = tpu.matmul %225, %227, %cst_205 {dimension_numbers = #tpu.dot_dimension_numbers<[1], [0], [0], [1], [0, 0, 1, 1], [], []>} : vector<8x64xbf16>, vector<64x128xbf16>, vector<8x128xf32> -> vector<8x128xf32>
    %229 = arith.addf %221, %228 : vector<8x128xf32>
    %c10_206 = arith.constant 10 : index
    %c0_207 = arith.constant 0 : index
    %c0_208 = arith.constant 0 : index
    %230 = vector.load %arg6[%c10_206, %c0_207, %c0_208] : memref<16x8x32xbf16, #tpu.memory_space<vmem>>, vector<1x8x32xbf16>
    %231 = vector.shape_cast %230 : vector<1x8x32xbf16> to vector<8x32xbf16>
    %cst_209 = arith.constant dense<0.000000e+00> : vector<8x64xf32>
    %232 = tpu.matmul %231, %147, %cst_209 {dimension_numbers = #tpu.dot_dimension_numbers<[1], [0], [0], [1], [0, 0, 1, 1], [], []>} : vector<8x32xbf16>, vector<32x64xbf16>, vector<8x64xf32> -> vector<8x64xf32>
    %233 = arith.truncf %232 : vector<8x64xf32> to vector<8x64xbf16>
    %c10_210 = arith.constant 10 : index
    %c0_211 = arith.constant 0 : index
    %c0_212 = arith.constant 0 : index
    %234 = vector.load %arg7[%c10_210, %c0_211, %c0_212] : memref<16x64x128xbf16, #tpu.memory_space<vmem>>, vector<1x64x128xbf16>
    %235 = vector.shape_cast %234 : vector<1x64x128xbf16> to vector<64x128xbf16>
    %cst_213 = arith.constant dense<0.000000e+00> : vector<8x128xf32>
    %236 = tpu.matmul %233, %235, %cst_213 {dimension_numbers = #tpu.dot_dimension_numbers<[1], [0], [0], [1], [0, 0, 1, 1], [], []>} : vector<8x64xbf16>, vector<64x128xbf16>, vector<8x128xf32> -> vector<8x128xf32>
    %237 = arith.addf %229, %236 : vector<8x128xf32>
    %c11_214 = arith.constant 11 : index
    %c0_215 = arith.constant 0 : index
    %c0_216 = arith.constant 0 : index
    %238 = vector.load %arg6[%c11_214, %c0_215, %c0_216] : memref<16x8x32xbf16, #tpu.memory_space<vmem>>, vector<1x8x32xbf16>
    %239 = vector.shape_cast %238 : vector<1x8x32xbf16> to vector<8x32xbf16>
    %cst_217 = arith.constant dense<0.000000e+00> : vector<8x64xf32>
    %240 = tpu.matmul %239, %147, %cst_217 {dimension_numbers = #tpu.dot_dimension_numbers<[1], [0], [0], [1], [0, 0, 1, 1], [], []>} : vector<8x32xbf16>, vector<32x64xbf16>, vector<8x64xf32> -> vector<8x64xf32>
    %241 = arith.truncf %240 : vector<8x64xf32> to vector<8x64xbf16>
    %c11_218 = arith.constant 11 : index
    %c0_219 = arith.constant 0 : index
    %c0_220 = arith.constant 0 : index
    %242 = vector.load %arg7[%c11_218, %c0_219, %c0_220] : memref<16x64x128xbf16, #tpu.memory_space<vmem>>, vector<1x64x128xbf16>
    %243 = vector.shape_cast %242 : vector<1x64x128xbf16> to vector<64x128xbf16>
    %cst_221 = arith.constant dense<0.000000e+00> : vector<8x128xf32>
    %244 = tpu.matmul %241, %243, %cst_221 {dimension_numbers = #tpu.dot_dimension_numbers<[1], [0], [0], [1], [0, 0, 1, 1], [], []>} : vector<8x64xbf16>, vector<64x128xbf16>, vector<8x128xf32> -> vector<8x128xf32>
    %245 = arith.addf %237, %244 : vector<8x128xf32>
    %c12_222 = arith.constant 12 : index
    %c0_223 = arith.constant 0 : index
    %c0_224 = arith.constant 0 : index
    %246 = vector.load %arg6[%c12_222, %c0_223, %c0_224] : memref<16x8x32xbf16, #tpu.memory_space<vmem>>, vector<1x8x32xbf16>
    %247 = vector.shape_cast %246 : vector<1x8x32xbf16> to vector<8x32xbf16>
    %cst_225 = arith.constant dense<0.000000e+00> : vector<8x64xf32>
    %248 = tpu.matmul %247, %147, %cst_225 {dimension_numbers = #tpu.dot_dimension_numbers<[1], [0], [0], [1], [0, 0, 1, 1], [], []>} : vector<8x32xbf16>, vector<32x64xbf16>, vector<8x64xf32> -> vector<8x64xf32>
    %249 = arith.truncf %248 : vector<8x64xf32> to vector<8x64xbf16>
    %c12_226 = arith.constant 12 : index
    %c0_227 = arith.constant 0 : index
    %c0_228 = arith.constant 0 : index
    %250 = vector.load %arg7[%c12_226, %c0_227, %c0_228] : memref<16x64x128xbf16, #tpu.memory_space<vmem>>, vector<1x64x128xbf16>
    %251 = vector.shape_cast %250 : vector<1x64x128xbf16> to vector<64x128xbf16>
    %cst_229 = arith.constant dense<0.000000e+00> : vector<8x128xf32>
    %252 = tpu.matmul %249, %251, %cst_229 {dimension_numbers = #tpu.dot_dimension_numbers<[1], [0], [0], [1], [0, 0, 1, 1], [], []>} : vector<8x64xbf16>, vector<64x128xbf16>, vector<8x128xf32> -> vector<8x128xf32>
    %253 = arith.addf %245, %252 : vector<8x128xf32>
    %c13_230 = arith.constant 13 : index
    %c0_231 = arith.constant 0 : index
    %c0_232 = arith.constant 0 : index
    %254 = vector.load %arg6[%c13_230, %c0_231, %c0_232] : memref<16x8x32xbf16, #tpu.memory_space<vmem>>, vector<1x8x32xbf16>
    %255 = vector.shape_cast %254 : vector<1x8x32xbf16> to vector<8x32xbf16>
    %cst_233 = arith.constant dense<0.000000e+00> : vector<8x64xf32>
    %256 = tpu.matmul %255, %147, %cst_233 {dimension_numbers = #tpu.dot_dimension_numbers<[1], [0], [0], [1], [0, 0, 1, 1], [], []>} : vector<8x32xbf16>, vector<32x64xbf16>, vector<8x64xf32> -> vector<8x64xf32>
    %257 = arith.truncf %256 : vector<8x64xf32> to vector<8x64xbf16>
    %c13_234 = arith.constant 13 : index
    %c0_235 = arith.constant 0 : index
    %c0_236 = arith.constant 0 : index
    %258 = vector.load %arg7[%c13_234, %c0_235, %c0_236] : memref<16x64x128xbf16, #tpu.memory_space<vmem>>, vector<1x64x128xbf16>
    %259 = vector.shape_cast %258 : vector<1x64x128xbf16> to vector<64x128xbf16>
    %cst_237 = arith.constant dense<0.000000e+00> : vector<8x128xf32>
    %260 = tpu.matmul %257, %259, %cst_237 {dimension_numbers = #tpu.dot_dimension_numbers<[1], [0], [0], [1], [0, 0, 1, 1], [], []>} : vector<8x64xbf16>, vector<64x128xbf16>, vector<8x128xf32> -> vector<8x128xf32>
    %261 = arith.addf %253, %260 : vector<8x128xf32>
    %c14_238 = arith.constant 14 : index
    %c0_239 = arith.constant 0 : index
    %c0_240 = arith.constant 0 : index
    %262 = vector.load %arg6[%c14_238, %c0_239, %c0_240] : memref<16x8x32xbf16, #tpu.memory_space<vmem>>, vector<1x8x32xbf16>
    %263 = vector.shape_cast %262 : vector<1x8x32xbf16> to vector<8x32xbf16>
    %cst_241 = arith.constant dense<0.000000e+00> : vector<8x64xf32>
    %264 = tpu.matmul %263, %147, %cst_241 {dimension_numbers = #tpu.dot_dimension_numbers<[1], [0], [0], [1], [0, 0, 1, 1], [], []>} : vector<8x32xbf16>, vector<32x64xbf16>, vector<8x64xf32> -> vector<8x64xf32>
    %265 = arith.truncf %264 : vector<8x64xf32> to vector<8x64xbf16>
    %c14_242 = arith.constant 14 : index
    %c0_243 = arith.constant 0 : index
    %c0_244 = arith.constant 0 : index
    %266 = vector.load %arg7[%c14_242, %c0_243, %c0_244] : memref<16x64x128xbf16, #tpu.memory_space<vmem>>, vector<1x64x128xbf16>
    %267 = vector.shape_cast %266 : vector<1x64x128xbf16> to vector<64x128xbf16>
    %cst_245 = arith.constant dense<0.000000e+00> : vector<8x128xf32>
    %268 = tpu.matmul %265, %267, %cst_245 {dimension_numbers = #tpu.dot_dimension_numbers<[1], [0], [0], [1], [0, 0, 1, 1], [], []>} : vector<8x64xbf16>, vector<64x128xbf16>, vector<8x128xf32> -> vector<8x128xf32>
    %269 = arith.addf %261, %268 : vector<8x128xf32>
    %c15_246 = arith.constant 15 : index
    %c0_247 = arith.constant 0 : index
    %c0_248 = arith.constant 0 : index
    %270 = vector.load %arg6[%c15_246, %c0_247, %c0_248] : memref<16x8x32xbf16, #tpu.memory_space<vmem>>, vector<1x8x32xbf16>
    %271 = vector.shape_cast %270 : vector<1x8x32xbf16> to vector<8x32xbf16>
    %cst_249 = arith.constant dense<0.000000e+00> : vector<8x64xf32>
    %272 = tpu.matmul %271, %147, %cst_249 {dimension_numbers = #tpu.dot_dimension_numbers<[1], [0], [0], [1], [0, 0, 1, 1], [], []>} : vector<8x32xbf16>, vector<32x64xbf16>, vector<8x64xf32> -> vector<8x64xf32>
    %273 = arith.truncf %272 : vector<8x64xf32> to vector<8x64xbf16>
    %c15_250 = arith.constant 15 : index
    %c0_251 = arith.constant 0 : index
    %c0_252 = arith.constant 0 : index
    %274 = vector.load %arg7[%c15_250, %c0_251, %c0_252] : memref<16x64x128xbf16, #tpu.memory_space<vmem>>, vector<1x64x128xbf16>
    %275 = vector.shape_cast %274 : vector<1x64x128xbf16> to vector<64x128xbf16>
    %cst_253 = arith.constant dense<0.000000e+00> : vector<8x128xf32>
    %276 = tpu.matmul %273, %275, %cst_253 {dimension_numbers = #tpu.dot_dimension_numbers<[1], [0], [0], [1], [0, 0, 1, 1], [], []>} : vector<8x64xbf16>, vector<64x128xbf16>, vector<8x128xf32> -> vector<8x128xf32>
    %277 = arith.addf %269, %276 : vector<8x128xf32>
    %cst_254 = arith.constant 0.000000e+00 : f32
    %278 = vector.broadcast %cst_254 : f32 to vector<8x128xf32>
    %279 = arith.cmpf oge, %277, %278 : vector<8x128xf32>
    %cst_255 = arith.constant 2.000000e-01 : f32
    %280 = vector.broadcast %cst_255 : f32 to vector<8x128xf32>
    %281 = arith.mulf %280, %277 : vector<8x128xf32>
    %282 = arith.select %279, %277, %281 : vector<8x128xi1>, vector<8x128xf32>
    %283 = arith.truncf %282 : vector<8x128xf32> to vector<8x128xbf16>
    %c0_256 = arith.constant 0 : index
    %c0_257 = arith.constant 0 : index
    %284 = vector.load %arg11[%c0_256, %c0_257] : memref<1x256xf32, #tpu.memory_space<vmem>>, vector<1x256xf32>
    %c0_258 = arith.constant 0 : index
    %c0_259 = arith.constant 0 : index
    %c0_260 = arith.constant 0 : index
    %285 = vector.load %arg9[%c0_258, %c0_259, %c0_260] : memref<4x8x8xbf16, #tpu.memory_space<vmem>>, vector<1x8x8xbf16>
    %286 = vector.shape_cast %285 : vector<1x8x8xbf16> to vector<8x8xbf16>
    %cst_261 = arith.constant dense<0.000000e+00> : vector<8x128xf32>
    %287 = tpu.matmul %286, %283, %cst_261 {dimension_numbers = #tpu.dot_dimension_numbers<[1], [0], [0], [1], [0, 0, 1, 1], [], []>} : vector<8x8xbf16>, vector<8x128xbf16>, vector<8x128xf32> -> vector<8x128xf32>
    %288 = arith.truncf %287 : vector<8x128xf32> to vector<8x128xbf16>
    %c0_262 = arith.constant 0 : index
    %c0_263 = arith.constant 0 : index
    %c0_264 = arith.constant 0 : index
    %289 = vector.load %arg10[%c0_262, %c0_263, %c0_264] : memref<4x128x256xbf16, #tpu.memory_space<vmem>>, vector<1x128x256xbf16>
    %290 = vector.shape_cast %289 : vector<1x128x256xbf16> to vector<128x256xbf16>
    %cst_265 = arith.constant dense<0.000000e+00> : vector<8x256xf32>
    %291 = tpu.matmul %288, %290, %cst_265 {dimension_numbers = #tpu.dot_dimension_numbers<[1], [0], [0], [1], [0, 0, 1, 1], [], []>} : vector<8x128xbf16>, vector<128x256xbf16>, vector<8x256xf32> -> vector<8x256xf32>
    %292 = vector.broadcast %284 : vector<1x256xf32> to vector<8x256xf32>
    %293 = arith.addf %292, %291 : vector<8x256xf32>
    %c1_266 = arith.constant 1 : index
    %c0_267 = arith.constant 0 : index
    %c0_268 = arith.constant 0 : index
    %294 = vector.load %arg9[%c1_266, %c0_267, %c0_268] : memref<4x8x8xbf16, #tpu.memory_space<vmem>>, vector<1x8x8xbf16>
    %295 = vector.shape_cast %294 : vector<1x8x8xbf16> to vector<8x8xbf16>
    %cst_269 = arith.constant dense<0.000000e+00> : vector<8x128xf32>
    %296 = tpu.matmul %295, %283, %cst_269 {dimension_numbers = #tpu.dot_dimension_numbers<[1], [0], [0], [1], [0, 0, 1, 1], [], []>} : vector<8x8xbf16>, vector<8x128xbf16>, vector<8x128xf32> -> vector<8x128xf32>
    %297 = arith.truncf %296 : vector<8x128xf32> to vector<8x128xbf16>
    %c1_270 = arith.constant 1 : index
    %c0_271 = arith.constant 0 : index
    %c0_272 = arith.constant 0 : index
    %298 = vector.load %arg10[%c1_270, %c0_271, %c0_272] : memref<4x128x256xbf16, #tpu.memory_space<vmem>>, vector<1x128x256xbf16>
    %299 = vector.shape_cast %298 : vector<1x128x256xbf16> to vector<128x256xbf16>
    %cst_273 = arith.constant dense<0.000000e+00> : vector<8x256xf32>
    %300 = tpu.matmul %297, %299, %cst_273 {dimension_numbers = #tpu.dot_dimension_numbers<[1], [0], [0], [1], [0, 0, 1, 1], [], []>} : vector<8x128xbf16>, vector<128x256xbf16>, vector<8x256xf32> -> vector<8x256xf32>
    %301 = arith.addf %293, %300 : vector<8x256xf32>
    %c2_274 = arith.constant 2 : index
    %c0_275 = arith.constant 0 : index
    %c0_276 = arith.constant 0 : index
    %302 = vector.load %arg9[%c2_274, %c0_275, %c0_276] : memref<4x8x8xbf16, #tpu.memory_space<vmem>>, vector<1x8x8xbf16>
    %303 = vector.shape_cast %302 : vector<1x8x8xbf16> to vector<8x8xbf16>
    %cst_277 = arith.constant dense<0.000000e+00> : vector<8x128xf32>
    %304 = tpu.matmul %303, %283, %cst_277 {dimension_numbers = #tpu.dot_dimension_numbers<[1], [0], [0], [1], [0, 0, 1, 1], [], []>} : vector<8x8xbf16>, vector<8x128xbf16>, vector<8x128xf32> -> vector<8x128xf32>
    %305 = arith.truncf %304 : vector<8x128xf32> to vector<8x128xbf16>
    %c2_278 = arith.constant 2 : index
    %c0_279 = arith.constant 0 : index
    %c0_280 = arith.constant 0 : index
    %306 = vector.load %arg10[%c2_278, %c0_279, %c0_280] : memref<4x128x256xbf16, #tpu.memory_space<vmem>>, vector<1x128x256xbf16>
    %307 = vector.shape_cast %306 : vector<1x128x256xbf16> to vector<128x256xbf16>
    %cst_281 = arith.constant dense<0.000000e+00> : vector<8x256xf32>
    %308 = tpu.matmul %305, %307, %cst_281 {dimension_numbers = #tpu.dot_dimension_numbers<[1], [0], [0], [1], [0, 0, 1, 1], [], []>} : vector<8x128xbf16>, vector<128x256xbf16>, vector<8x256xf32> -> vector<8x256xf32>
    %309 = arith.addf %301, %308 : vector<8x256xf32>
    %c3_282 = arith.constant 3 : index
    %c0_283 = arith.constant 0 : index
    %c0_284 = arith.constant 0 : index
    %310 = vector.load %arg9[%c3_282, %c0_283, %c0_284] : memref<4x8x8xbf16, #tpu.memory_space<vmem>>, vector<1x8x8xbf16>
    %311 = vector.shape_cast %310 : vector<1x8x8xbf16> to vector<8x8xbf16>
    %cst_285 = arith.constant dense<0.000000e+00> : vector<8x128xf32>
    %312 = tpu.matmul %311, %283, %cst_285 {dimension_numbers = #tpu.dot_dimension_numbers<[1], [0], [0], [1], [0, 0, 1, 1], [], []>} : vector<8x8xbf16>, vector<8x128xbf16>, vector<8x128xf32> -> vector<8x128xf32>
    %313 = arith.truncf %312 : vector<8x128xf32> to vector<8x128xbf16>
    %c3_286 = arith.constant 3 : index
    %c0_287 = arith.constant 0 : index
    %c0_288 = arith.constant 0 : index
    %314 = vector.load %arg10[%c3_286, %c0_287, %c0_288] : memref<4x128x256xbf16, #tpu.memory_space<vmem>>, vector<1x128x256xbf16>
    %315 = vector.shape_cast %314 : vector<1x128x256xbf16> to vector<128x256xbf16>
    %cst_289 = arith.constant dense<0.000000e+00> : vector<8x256xf32>
    %316 = tpu.matmul %313, %315, %cst_289 {dimension_numbers = #tpu.dot_dimension_numbers<[1], [0], [0], [1], [0, 0, 1, 1], [], []>} : vector<8x128xbf16>, vector<128x256xbf16>, vector<8x256xf32> -> vector<8x256xf32>
    %317 = arith.addf %309, %316 : vector<8x256xf32>
    %cst_290 = arith.constant 0.000000e+00 : f32
    %318 = vector.broadcast %cst_290 : f32 to vector<8x256xf32>
    %319 = arith.cmpf oge, %317, %318 : vector<8x256xf32>
    %cst_291 = arith.constant 2.000000e-01 : f32
    %320 = vector.broadcast %cst_291 : f32 to vector<8x256xf32>
    %321 = arith.mulf %320, %317 : vector<8x256xf32>
    %322 = arith.select %319, %317, %321 : vector<8x256xi1>, vector<8x256xf32>
    %323 = arith.truncf %322 : vector<8x256xf32> to vector<8x256xbf16>
    %c0_292 = arith.constant 0 : index
    %c0_293 = arith.constant 0 : index
    %324 = vector.load %arg12[%c0_292, %c0_293] : memref<256x128xbf16, #tpu.memory_space<vmem>>, vector<256x128xbf16>
    %cst_294 = arith.constant dense<0.000000e+00> : vector<8x128xf32>
    %325 = tpu.matmul %323, %324, %cst_294 {dimension_numbers = #tpu.dot_dimension_numbers<[1], [0], [0], [1], [0, 0, 1, 1], [], []>} : vector<8x256xbf16>, vector<256x128xbf16>, vector<8x128xf32> -> vector<8x128xf32>
    %c0_295 = arith.constant 0 : index
    %c0_296 = arith.constant 0 : index
    %326 = vector.load %arg13[%c0_295, %c0_296] : memref<1x128xf32, #tpu.memory_space<vmem>>, vector<1x128xf32>
    %327 = vector.broadcast %326 : vector<1x128xf32> to vector<8x128xf32>
    %328 = arith.addf %325, %327 : vector<8x128xf32>
    %329 = vector.extract_strided_slice %328 {offsets = [0, 0], sizes = [2, 128], strides = [1, 1]} : vector<8x128xf32> to vector<2x128xf32>
    %c0_297 = arith.constant 0 : index
    %c0_298 = arith.constant 0 : index
    %330 = vector.load %arg14[%c0_297, %c0_298] : memref<2x128xf32, #tpu.memory_space<vmem>>, vector<2x128xf32>
    tpu.vector_store %arg14[%c0_297, %c0_298], %329 {strides = array<i32>} : memref<2x128xf32, #tpu.memory_space<vmem>>, vector<2x128xf32>,
    return
  }
}

</mosaic_0001>

<llo_original>
// kernel: encoder_forward.1
$region0: #{encoder_forward.1}
  #allocation0 [shape = 'u32[]', space=smem, size = 0x4, offset = 0x4, fixed_abs, tag = 'smem constant byte address 0x4 - core index']
  #allocation1 [shape = 'u32[144,128]{1,0:T(1,128)}', space=vmem, size = 0x12000, scoped, tag = 'internal scratch']
  %s0 = inlined_call_operand.vmem [shape: bf16[128,16], index: 0, kind: input, shape index: {}]
  %s1 = inlined_call_operand.vmem [shape: bf16[16,32], index: 1, kind: input, shape index: {}]
  %s2 = inlined_call_operand.vmem [shape: f32[1,32], index: 2, kind: input, shape index: {}]
  %s3 = inlined_call_operand.vmem [shape: bf16[16,32,128], index: 3, kind: input, shape index: {}]
  %s4 = inlined_call_operand.vmem [shape: bf16[16,32,64], index: 4, kind: input, shape index: {}]
  %s5 = inlined_call_operand.vmem [shape: f32[1,64], index: 5, kind: input, shape index: {}]
  %s6 = inlined_call_operand.vmem [shape: bf16[16,8,32], index: 6, kind: input, shape index: {}]
  %s7 = inlined_call_operand.vmem [shape: bf16[16,64,128], index: 7, kind: input, shape index: {}]
  %s8 = inlined_call_operand.vmem [shape: f32[1,128], index: 8, kind: input, shape index: {}]
  %s9 = inlined_call_operand.vmem [shape: bf16[4,8,8], index: 9, kind: input, shape index: {}]
  %s10 = inlined_call_operand.vmem [shape: bf16[4,128,256], index: 10, kind: input, shape index: {}]
  %s11 = inlined_call_operand.vmem [shape: f32[1,256], index: 11, kind: input, shape index: {}]
  %s12 = inlined_call_operand.vmem [shape: bf16[256,128], index: 12, kind: input, shape index: {}]
  %s13 = inlined_call_operand.vmem [shape: f32[1,128], index: 13, kind: input, shape index: {}]
  %s14 = inlined_call_operand.vmem [shape: f32[2,128], index: 14, kind: output, shape index: {}]
  %s15 = sld [smem:[#allocation0]]
  $region66: #{encoder_forward.1} parent=0
    _
  %s17 = ssub.s32 1, %s15
  %s18 = scalar_select 0, %s17, %s15
  // Predicated region
  $region2: #{encoder_forward.1} parent=0 // pred_check
    _
  $region3: #{encoder_forward.1} parent=0 // pred_check_branch
    %20 = sbr.rel (0) target = $region5
  $region4: #{encoder_forward.1} parent=0 // pred_region
    _
  $region5: #{encoder_forward.1} parent=0 // pred_fallthru
    _
  // Predicated region
  $region6: #{encoder_forward.1} parent=0 // pred_check
    _
  $region7: #{encoder_forward.1} parent=0 // pred_check_branch
    %22 = sbr.rel (0) target = $region9
  $region8: #{encoder_forward.1} parent=0 // pred_region
    _
  $region9: #{encoder_forward.1} parent=0 // pred_fallthru
    _
  // Predicated region
  $region10: #{encoder_forward.1} parent=0 // pred_check
    _
  $region11: #{encoder_forward.1} parent=0 // pred_check_branch
    %24 = sbr.rel (0) target = $region13
  $region12: #{encoder_forward.1} parent=0 // pred_region
    _
  $region13: #{encoder_forward.1} parent=0 // pred_fallthru
    _
  // Predicated region
  $region14: #{encoder_forward.1} parent=0 // pred_check
    _
  $region15: #{encoder_forward.1} parent=0 // pred_check_branch
    %26 = sbr.rel (0) target = $region17
  $region16: #{encoder_forward.1} parent=0 // pred_region
    _
  $region17: #{encoder_forward.1} parent=0 // pred_fallthru
    _
  // Predicated region
  $region18: #{encoder_forward.1} parent=0 // pred_check
    _
  $region19: #{encoder_forward.1} parent=0 // pred_check_branch
    %28 = sbr.rel (0) target = $region21
  $region20: #{encoder_forward.1} parent=0 // pred_region
    _
  $region21: #{encoder_forward.1} parent=0 // pred_fallthru
    _
  // Predicated region
  $region22: #{encoder_forward.1} parent=0 // pred_check
    _
  $region23: #{encoder_forward.1} parent=0 // pred_check_branch
    %30 = sbr.rel (0) target = $region25
  $region24: #{encoder_forward.1} parent=0 // pred_region
    _
  $region25: #{encoder_forward.1} parent=0 // pred_fallthru
    _
  // Predicated region
  $region26: #{encoder_forward.1} parent=0 // pred_check
    _
  $region27: #{encoder_forward.1} parent=0 // pred_check_branch
    %32 = sbr.rel (0) target = $region29
  $region28: #{encoder_forward.1} parent=0 // pred_region
    _
  $region29: #{encoder_forward.1} parent=0 // pred_fallthru
    _
  // Predicated region
  $region30: #{encoder_forward.1} parent=0 // pred_check
    _
  $region31: #{encoder_forward.1} parent=0 // pred_check_branch
    %34 = sbr.rel (0) target = $region33
  $region32: #{encoder_forward.1} parent=0 // pred_region
    _
  $region33: #{encoder_forward.1} parent=0 // pred_fallthru
    _
  // Predicated region
  $region34: #{encoder_forward.1} parent=0 // pred_check
    _
  $region35: #{encoder_forward.1} parent=0 // pred_check_branch
    %36 = sbr.rel (0) target = $region37
  $region36: #{encoder_forward.1} parent=0 // pred_region
    _
  $region37: #{encoder_forward.1} parent=0 // pred_fallthru
    _
  // Predicated region
  $region38: #{encoder_forward.1} parent=0 // pred_check
    _
  $region39: #{encoder_forward.1} parent=0 // pred_check_branch
    %38 = sbr.rel (0) target = $region41
  $region40: #{encoder_forward.1} parent=0 // pred_region
    _
  $region41: #{encoder_forward.1} parent=0 // pred_fallthru
    _
  // Predicated region
  $region42: #{encoder_forward.1} parent=0 // pred_check
    _
  $region43: #{encoder_forward.1} parent=0 // pred_check_branch
    %40 = sbr.rel (0) target = $region45
  $region44: #{encoder_forward.1} parent=0 // pred_region
    _
  $region45: #{encoder_forward.1} parent=0 // pred_fallthru
    _
  // Predicated region
  $region46: #{encoder_forward.1} parent=0 // pred_check
    _
  $region47: #{encoder_forward.1} parent=0 // pred_check_branch
    %42 = sbr.rel (0) target = $region49
  $region48: #{encoder_forward.1} parent=0 // pred_region
    _
  $region49: #{encoder_forward.1} parent=0 // pred_fallthru
    _
  // Predicated region
  $region50: #{encoder_forward.1} parent=0 // pred_check
    _
  $region51: #{encoder_forward.1} parent=0 // pred_check_branch
    %44 = sbr.rel (0) target = $region53
  $region52: #{encoder_forward.1} parent=0 // pred_region
    _
  $region53: #{encoder_forward.1} parent=0 // pred_fallthru
    _
  // Predicated region
  $region54: #{encoder_forward.1} parent=0 // pred_check
    _
  $region55: #{encoder_forward.1} parent=0 // pred_check_branch
    %46 = sbr.rel (0) target = $region57
  $region56: #{encoder_forward.1} parent=0 // pred_region
    _
  $region57: #{encoder_forward.1} parent=0 // pred_fallthru
    _
  %v48 = vld [vmem:[%s0] sm:$0xf]
  %v49 = vld [vmem:[%s0 + $0x4] sm:$0xf]
  %v50 = vld [vmem:[%s0 + $0x8] sm:$0xf]
  %v51 = vld [vmem:[%s0 + $0xc] sm:$0xf]
  %v52 = vld [vmem:[%s0 + $0x10] sm:$0xf]
  %v53 = vld [vmem:[%s0 + $0x14] sm:$0xf]
  %v54 = vld [vmem:[%s0 + $0x18] sm:$0xf]
  %v55 = vld [vmem:[%s0 + $0x1c] sm:$0xf]
  %v56 = vld [vmem:[%s0 + $0x20] sm:$0xf]
  %v57 = vld [vmem:[%s0 + $0x24] sm:$0xf]
  %v58 = vld [vmem:[%s0 + $0x28] sm:$0xf]
  %v59 = vld [vmem:[%s0 + $0x2c] sm:$0xf]
  %v60 = vld [vmem:[%s0 + $0x30] sm:$0xf]
  %v61 = vld [vmem:[%s0 + $0x34] sm:$0xf]
  %v62 = vld [vmem:[%s0 + $0x38] sm:$0xf]
  %v63 = vld [vmem:[%s0 + $0x3c] sm:$0xf]
  %v64 = vld [vmem:[%s1] sm:$0xf]
  %v65 = vld [vmem:[%s1 + $0x4] sm:$0xf]
  %v66 = vld [vmem:[%s2] sm:$0x1]
  %v68 = vlaneseq
  %v69 = vshrl.u32 %v68, 7
  %v70 = vsub.s32 0, %v69
  %v71 = vrot.slane %v66, %v70
  %v89 = vunpack.c.l.b16 %v48
  %v90 = vunpack.c.l.b16 %v49
  %v91 = vunpack.c.l.b16 %v50
  %v92 = vunpack.c.l.b16 %v51
  %v93 = vunpack.c.l.b16 %v52
  %v94 = vunpack.c.l.b16 %v53
  %v95 = vunpack.c.l.b16 %v54
  %v96 = vunpack.c.l.b16 %v55
  %v97 = vunpack.c.l.b16 %v56
  %v98 = vunpack.c.l.b16 %v57
  %v99 = vunpack.c.l.b16 %v58
  %v100 = vunpack.c.l.b16 %v59
  %v101 = vunpack.c.l.b16 %v60
  %v102 = vunpack.c.l.b16 %v61
  %v103 = vunpack.c.l.b16 %v62
  %v104 = vunpack.c.l.b16 %v63
  %v105 = vpack.c.b16 %v90, %v89
  %v106 = vpack.c.b16 %v92, %v91
  %v107 = vpack.c.b16 %v94, %v93
  %v108 = vpack.c.b16 %v96, %v95
  %v109 = vpack.c.b16 %v98, %v97
  %v110 = vpack.c.b16 %v100, %v99
  %v111 = vpack.c.b16 %v102, %v101
  %v112 = vpack.c.b16 %v104, %v103
  %v115 = vunpack.c.l.b16 %v64
  %v116 = vunpack.c.l.b16 %v65
  %v117 = vpack.c.b16 %v116, %v115
  %vm119 = vcmask 130048
  %v121 = vsel %vm119, %v105, 0
  %v124 = vsel %vm119, %v106, 0
  %v127 = vsel %vm119, %v107, 0
  %v130 = vsel %vm119, %v108, 0
  %v133 = vsel %vm119, %v109, 0
  %v136 = vsel %vm119, %v110, 0
  %v139 = vsel %vm119, %v111, 0
  %v142 = vsel %vm119, %v112, 0
  %144 = vmatprep.subr.bf16.mxu0 0
  %145 = vmatpush1.bf16.msra.mxu0 0
  %146 = vmatprep.subr.bf16.mxu0 0
  %147 = vmatpush1.bf16.msra.mxu0 0
  %148 = vmatprep.subr.bf16.mxu0 0
  %149 = vmatpush1.bf16.msra.mxu0 0
  %150 = vmatprep.subr.bf16.mxu0 0
  %151 = vmatpush1.bf16.msra.mxu0 0
  %152 = vmatprep.subr.bf16.mxu0 0
  %153 = vmatpush1.bf16.msra.mxu0 0
  %154 = vmatprep.subr.bf16.mxu0 0
  %155 = vmatpush1.bf16.msra.mxu0 0
  %156 = vmatprep.subr.bf16.mxu0 0
  %157 = vmatpush1.bf16.msra.mxu0 0
  %158 = vmatprep.subr.bf16.mxu0 0
  %159 = vmatpush1.bf16.msra.mxu0 %v117
  %160 = vmatprep.subr.bf16.mxu0 0
  %161 = vmatpush2.bf16.msra.mxu0 0
  %162 = vmatprep.subr.bf16.mxu0 0
  %163 = vmatpush2.bf16.msra.mxu0 0
  %164 = vmatprep.subr.bf16.mxu0 0
  %165 = vmatpush2.bf16.msra.mxu0 0
  %166 = vmatprep.subr.bf16.mxu0 0
  %167 = vmatpush2.bf16.msra.mxu0 0
  %168 = vmatprep.subr.bf16.mxu0 0
  %169 = vmatpush2.bf16.msra.mxu0 0
  %170 = vmatprep.subr.bf16.mxu0 0
  %171 = vmatpush2.bf16.msra.mxu0 0
  %172 = vmatprep.subr.bf16.mxu0 0
  %173 = vmatpush2.bf16.msra.mxu0 0
  %174 = vmatprep.subr.bf16.mxu0 0
  %175 = vmatpush2.bf16.msra.mxu0 0
  %176 = vmatprep.mubr.bf16.mxu0 0
  %177 = vmatmul.mubr.bf16.gmra.mxu0 %v121
  %v178 = vpop.f32.mrf.mxu0
  %v179 = vadd.f32 %v71, %v178
  %v180 = vpop.f32.mrf.mxu0
  %v181 = vpop.f32.mrf.mxu0
  %v182 = vadd.f32 %v71, %v181
  %v183 = vpop.f32.mrf.mxu0
  %184 = vmatprep.mubr.bf16.mxu0 0
  %185 = vmatmul.mubr.bf16.gmra.mxu0 %v124
  %v186 = vpop.f32.mrf.mxu0
  %v187 = vadd.f32 %v71, %v186
  %v188 = vpop.f32.mrf.mxu0
  %v189 = vpop.f32.mrf.mxu0
  %v190 = vadd.f32 %v71, %v189
  %v191 = vpop.f32.mrf.mxu0
  %192 = vmatprep.mubr.bf16.mxu0 0
  %193 = vmatmul.mubr.bf16.gmra.mxu0 %v127
  %v194 = vpop.f32.mrf.mxu0
  %v195 = vadd.f32 %v71, %v194
  %v196 = vpop.f32.mrf.mxu0
  %v197 = vpop.f32.mrf.mxu0
  %v198 = vadd.f32 %v71, %v197
  %v199 = vpop.f32.mrf.mxu0
  %200 = vmatprep.mubr.bf16.mxu0 0
  %201 = vmatmul.mubr.bf16.gmra.mxu0 %v130
  %v202 = vpop.f32.mrf.mxu0
  %v203 = vadd.f32 %v71, %v202
  %v204 = vpop.f32.mrf.mxu0
  %v205 = vpop.f32.mrf.mxu0
  %v206 = vadd.f32 %v71, %v205
  %v207 = vpop.f32.mrf.mxu0
  %208 = vmatprep.mubr.bf16.mxu0 0
  %209 = vmatmul.mubr.bf16.gmra.mxu0 %v133
  %v210 = vpop.f32.mrf.mxu0
  %v211 = vadd.f32 %v71, %v210
  %v212 = vpop.f32.mrf.mxu0
  %v213 = vpop.f32.mrf.mxu0
  %v214 = vadd.f32 %v71, %v213
  %v215 = vpop.f32.mrf.mxu0
  %216 = vmatprep.mubr.bf16.mxu0 0
  %217 = vmatmul.mubr.bf16.gmra.mxu0 %v136
  %v218 = vpop.f32.mrf.mxu0
  %v219 = vadd.f32 %v71, %v218
  %v220 = vpop.f32.mrf.mxu0
  %v221 = vpop.f32.mrf.mxu0
  %v222 = vadd.f32 %v71, %v221
  %v223 = vpop.f32.mrf.mxu0
  %224 = vmatprep.mubr.bf16.mxu0 0
  %225 = vmatmul.mubr.bf16.gmra.mxu0 %v139
  %v226 = vpop.f32.mrf.mxu0
  %v227 = vadd.f32 %v71, %v226
  %v228 = vpop.f32.mrf.mxu0
  %v229 = vpop.f32.mrf.mxu0
  %v230 = vadd.f32 %v71, %v229
  %v231 = vpop.f32.mrf.mxu0
  %232 = vmatprep.mubr.bf16.mxu0 0
  %233 = vmatmul.mubr.bf16.gmra.mxu0 %v142
  %v234 = vpop.f32.mrf.mxu0
  %v235 = vadd.f32 %v71, %v234
  %v236 = vpop.f32.mrf.mxu0
  %v237 = vpop.f32.mrf.mxu0
  %v238 = vadd.f32 %v71, %v237
  %v239 = vpop.f32.mrf.mxu0
  %240 = vdwg.mxu0
  %vm241 = vcmp.ge.f32.partialorder %v179, 0.0
  %vm242 = vcmp.ge.f32.partialorder %v182, 0.0
  %vm243 = vcmp.ge.f32.partialorder %v187, 0.0
  %vm244 = vcmp.ge.f32.partialorder %v190, 0.0
  %vm245 = vcmp.ge.f32.partialorder %v195, 0.0
  %vm246 = vcmp.ge.f32.partialorder %v198, 0.0
  %vm247 = vcmp.ge.f32.partialorder %v203, 0.0
  %vm248 = vcmp.ge.f32.partialorder %v206, 0.0
  %vm249 = vcmp.ge.f32.partialorder %v211, 0.0
  %vm250 = vcmp.ge.f32.partialorder %v214, 0.0
  %vm251 = vcmp.ge.f32.partialorder %v219, 0.0
  %vm252 = vcmp.ge.f32.partialorder %v222, 0.0
  %vm253 = vcmp.ge.f32.partialorder %v227, 0.0
  %vm254 = vcmp.ge.f32.partialorder %v230, 0.0
  %vm255 = vcmp.ge.f32.partialorder %v235, 0.0
  %vm256 = vcmp.ge.f32.partialorder %v238, 0.0
  %v257 = vmul.f32 %v179, 0.2
  %v258 = vmul.f32 %v182, 0.2
  %v259 = vmul.f32 %v187, 0.2
  %v260 = vmul.f32 %v190, 0.2
  %v261 = vmul.f32 %v195, 0.2
  %v262 = vmul.f32 %v198, 0.2
  %v263 = vmul.f32 %v203, 0.2
  %v264 = vmul.f32 %v206, 0.2
  %v265 = vmul.f32 %v211, 0.2
  %v266 = vmul.f32 %v214, 0.2
  %v267 = vmul.f32 %v219, 0.2
  %v268 = vmul.f32 %v222, 0.2
  %v269 = vmul.f32 %v227, 0.2
  %v270 = vmul.f32 %v230, 0.2
  %v271 = vmul.f32 %v235, 0.2
  %v272 = vmul.f32 %v238, 0.2
  %v273 = vsel %vm241, %v179, %v257
  %v274 = vsel %vm242, %v182, %v258
  %v275 = vsel %vm243, %v187, %v259
  %v276 = vsel %vm244, %v190, %v260
  %v277 = vsel %vm245, %v195, %v261
  %v278 = vsel %vm246, %v198, %v262
  %v279 = vsel %vm247, %v203, %v263
  %v280 = vsel %vm248, %v206, %v264
  %v281 = vsel %vm249, %v211, %v265
  %v282 = vsel %vm250, %v214, %v266
  %v283 = vsel %vm251, %v219, %v267
  %v284 = vsel %vm252, %v222, %v268
  %v285 = vsel %vm253, %v227, %v269
  %v286 = vsel %vm254, %v230, %v270
  %v287 = vsel %vm255, %v235, %v271
  %v288 = vsel %vm256, %v238, %v272
  %v289 = vpack.c.bf16 %v274, %v273
  %v290 = vpack.c.bf16 %v276, %v275
  %v291 = vpack.c.bf16 %v278, %v277
  %v292 = vpack.c.bf16 %v280, %v279
  %v293 = vpack.c.bf16 %v282, %v281
  %v294 = vpack.c.bf16 %v284, %v283
  %v295 = vpack.c.bf16 %v286, %v285
  %v296 = vpack.c.bf16 %v288, %v287
  %v297 = vld [vmem:[%s5] sm:$0x1]
  %v298 = vld [vmem:[%s3] sm:$0xf]
  %v299 = vld [vmem:[%s3 + $0x4] sm:$0xf]
  %v300 = vld [vmem:[%s3 + $0x8] sm:$0xf]
  %v301 = vld [vmem:[%s3 + $0xc] sm:$0xf]
  %v306 = vunpack.c.l.b16 %v298
  %v307 = vunpack.c.l.b16 %v299
  %v308 = vunpack.c.l.b16 %v300
  %v309 = vunpack.c.l.b16 %v301
  %v310 = vpack.c.b16 %v307, %v306
  %v311 = vpack.c.b16 %v309, %v308
  %314 = vmatprep.subr.bf16.mxu0 0
  %315 = vmatpush1.bf16.msra.mxu0 %v296
  %316 = vmatprep.subr.bf16.mxu0 0
  %317 = vmatpush1.bf16.msra.mxu0 %v295
  %318 = vmatprep.subr.bf16.mxu0 0
  %319 = vmatpush1.bf16.msra.mxu0 %v294
  %320 = vmatprep.subr.bf16.mxu0 0
  %321 = vmatpush1.bf16.msra.mxu0 %v293
  %322 = vmatprep.subr.bf16.mxu0 0
  %323 = vmatpush1.bf16.msra.mxu0 %v292
  %324 = vmatprep.subr.bf16.mxu0 0
  %325 = vmatpush1.bf16.msra.mxu0 %v291
  %326 = vmatprep.subr.bf16.mxu0 0
  %327 = vmatpush1.bf16.msra.mxu0 %v290
  %328 = vmatprep.subr.bf16.mxu0 0
  %329 = vmatpush1.bf16.msra.mxu0 %v289
  %330 = vmatprep.subr.bf16.mxu0 0
  %331 = vmatpush2.bf16.msra.mxu0 0
  %332 = vmatprep.subr.bf16.mxu0 0
  %333 = vmatpush2.bf16.msra.mxu0 0
  %334 = vmatprep.subr.bf16.mxu0 0
  %335 = vmatpush2.bf16.msra.mxu0 0
  %336 = vmatprep.subr.bf16.mxu0 0
  %337 = vmatpush2.bf16.msra.mxu0 0
  %338 = vmatprep.subr.bf16.mxu0 0
  %339 = vmatpush2.bf16.msra.mxu0 0
  %340 = vmatprep.subr.bf16.mxu0 0
  %341 = vmatpush2.bf16.msra.mxu0 0
  %342 = vmatprep.subr.bf16.mxu0 0
  %343 = vmatpush2.bf16.msra.mxu0 0
  %344 = vmatprep.subr.bf16.mxu0 0
  %345 = vmatpush2.bf16.msra.mxu0 0
  %346 = vmatprep.mubr.bf16.mxu0 0
  %347 = vmatmul.mubr.bf16.gmra.mxu0 %v310
  %v348 = vpop.f32.mrf.mxu0
  %v349 = vadd.f32 0.0, %v348
  %v350 = vpop.f32.mrf.mxu0
  %v351 = vpop.f32.mrf.mxu0
  %v352 = vadd.f32 0.0, %v351
  %v353 = vpop.f32.mrf.mxu0
  %354 = vmatprep.mubr.bf16.mxu0 0
  %355 = vmatmul.mubr.bf16.gmra.mxu0 %v311
  %v356 = vpop.f32.mrf.mxu0
  %v357 = vadd.f32 0.0, %v356
  %v358 = vpop.f32.mrf.mxu0
  %v359 = vpop.f32.mrf.mxu0
  %v360 = vadd.f32 0.0, %v359
  %v361 = vpop.f32.mrf.mxu0
  %362 = vdwg.mxu0
  %v363 = vpack.c.bf16 %v352, %v349
  %v364 = vpack.c.bf16 %v360, %v357
  %v365 = vld [vmem:[%s4] sm:$0xf]
  %v366 = vld [vmem:[%s4 + $0x4] sm:$0xf]
  %v367 = vld [vmem:[%s4 + $0x8] sm:$0xf]
  %v368 = vld [vmem:[%s4 + $0xc] sm:$0xf]
  %v373 = vunpack.c.l.b16 %v365
  %v374 = vunpack.c.l.b16 %v366
  %v375 = vunpack.c.l.b16 %v367
  %v376 = vunpack.c.l.b16 %v368
  %v377 = vpack.c.b16 %v374, %v373
  %v378 = vpack.c.b16 %v376, %v375
  %vm381 = vcmask 261120
  %v383 = vsel %vm381, %v363, 0
  %v386 = vsel %vm381, %v364, 0
  %388 = vmatprep.subr.bf16.mxu0 0
  %389 = vmatpush1.bf16.msra.mxu0 0
  %390 = vmatprep.subr.bf16.mxu0 0
  %391 = vmatpush1.bf16.msra.mxu0 0
  %392 = vmatprep.subr.bf16.mxu0 0
  %393 = vmatpush1.bf16.msra.mxu0 0
  %394 = vmatprep.subr.bf16.mxu0 0
  %395 = vmatpush1.bf16.msra.mxu0 0
  %396 = vmatprep.subr.bf16.mxu0 0
  %397 = vmatpush1.bf16.msra.mxu0 0
  %398 = vmatprep.subr.bf16.mxu0 0
  %399 = vmatpush1.bf16.msra.mxu0 0
  %400 = vmatprep.subr.bf16.mxu0 0
  %401 = vmatpush1.bf16.msra.mxu0 %v378
  %402 = vmatprep.subr.bf16.mxu0 0
  %403 = vmatpush1.bf16.msra.mxu0 %v377
  %404 = vmatprep.subr.bf16.mxu0 0
  %405 = vmatpush2.bf16.msra.mxu0 0
  %406 = vmatprep.subr.bf16.mxu0 0
  %407 = vmatpush2.bf16.msra.mxu0 0
  %408 = vmatprep.subr.bf16.mxu0 0
  %409 = vmatpush2.bf16.msra.mxu0 0
  %410 = vmatprep.subr.bf16.mxu0 0
  %411 = vmatpush2.bf16.msra.mxu0 0
  %412 = vmatprep.subr.bf16.mxu0 0
  %413 = vmatpush2.bf16.msra.mxu0 0
  %414 = vmatprep.subr.bf16.mxu0 0
  %415 = vmatpush2.bf16.msra.mxu0 0
  %416 = vmatprep.subr.bf16.mxu0 0
  %417 = vmatpush2.bf16.msra.mxu0 0
  %418 = vmatprep.subr.bf16.mxu0 0
  %419 = vmatpush2.bf16.msra.mxu0 0
  %420 = vmatprep.mubr.bf16.mxu0 0
  %421 = vmatmul.mubr.bf16.gmra.mxu0 %v383
  %v422 = vpop.f32.mrf.mxu0
  %v423 = vadd.f32 0.0, %v422
  %v424 = vpop.f32.mrf.mxu0
  %v425 = vpop.f32.mrf.mxu0
  %v426 = vadd.f32 0.0, %v425
  %v427 = vpop.f32.mrf.mxu0
  %428 = vmatprep.mubr.bf16.mxu0 0
  %429 = vmatmul.mubr.bf16.gmra.mxu0 %v386
  %v430 = vpop.f32.mrf.mxu0
  %v431 = vadd.f32 0.0, %v430
  %v432 = vpop.f32.mrf.mxu0
  %v433 = vpop.f32.mrf.mxu0
  %v434 = vadd.f32 0.0, %v433
  %v435 = vpop.f32.mrf.mxu0
  %436 = vdwg.mxu0
  %v438 = vlaneseq
  %v439 = vshrl.u32 %v438, 7
  %v440 = vsub.s32 0, %v439
  %v441 = vrot.slane %v297, %v440
  %v443 = vadd.f32 %v441, %v423
  %v444 = vadd.f32 %v441, %v426
  %v445 = vadd.f32 %v441, %v431
  %v446 = vadd.f32 %v441, %v434
  %s447 = scalar_lea.vmem %s3, 16
  %v448 = vld [vmem:[%s447] sm:$0xf]
  %v449 = vld [vmem:[%s447 + $0x4] sm:$0xf]
  %v450 = vld [vmem:[%s447 + $0x8] sm:$0xf]
  %v451 = vld [vmem:[%s447 + $0xc] sm:$0xf]
  %v456 = vunpack.c.l.b16 %v448
  %v457 = vunpack.c.l.b16 %v449
  %v458 = vunpack.c.l.b16 %v450
  %v459 = vunpack.c.l.b16 %v451
  %v460 = vpack.c.b16 %v457, %v456
  %v461 = vpack.c.b16 %v459, %v458
  %464 = vmatprep.subr.bf16.mxu0 0
  %465 = vmatpush1.bf16.msra.mxu0 %v296
  %466 = vmatprep.subr.bf16.mxu0 0
  %467 = vmatpush1.bf16.msra.mxu0 %v295
  %468 = vmatprep.subr.bf16.mxu0 0
  %469 = vmatpush1.bf16.msra.mxu0 %v294
  %470 = vmatprep.subr.bf16.mxu0 0
  %471 = vmatpush1.bf16.msra.mxu0 %v293
  %472 = vmatprep.subr.bf16.mxu0 0
  %473 = vmatpush1.bf16.msra.mxu0 %v292
  %474 = vmatprep.subr.bf16.mxu0 0
  %475 = vmatpush1.bf16.msra.mxu0 %v291
  %476 = vmatprep.subr.bf16.mxu0 0
  %477 = vmatpush1.bf16.msra.mxu0 %v290
  %478 = vmatprep.subr.bf16.mxu0 0
  %479 = vmatpush1.bf16.msra.mxu0 %v289
  %480 = vmatprep.subr.bf16.mxu0 0
  %481 = vmatpush2.bf16.msra.mxu0 0
  %482 = vmatprep.subr.bf16.mxu0 0
  %483 = vmatpush2.bf16.msra.mxu0 0
  %484 = vmatprep.subr.bf16.mxu0 0
  %485 = vmatpush2.bf16.msra.mxu0 0
  %486 = vmatprep.subr.bf16.mxu0 0
  %487 = vmatpush2.bf16.msra.mxu0 0
  %488 = vmatprep.subr.bf16.mxu0 0
  %489 = vmatpush2.bf16.msra.mxu0 0
  %490 = vmatprep.subr.bf16.mxu0 0
  %491 = vmatpush2.bf16.msra.mxu0 0
  %492 = vmatprep.subr.bf16.mxu0 0
  %493 = vmatpush2.bf16.msra.mxu0 0
  %494 = vmatprep.subr.bf16.mxu0 0
  %495 = vmatpush2.bf16.msra.mxu0 0
  %496 = vmatprep.mubr.bf16.mxu0 0
  %497 = vmatmul.mubr.bf16.gmra.mxu0 %v460
  %v498 = vpop.f32.mrf.mxu0
  %v499 = vadd.f32 0.0, %v498
  %v500 = vpop.f32.mrf.mxu0
  %v501 = vpop.f32.mrf.mxu0
  %v502 = vadd.f32 0.0, %v501
  %v503 = vpop.f32.mrf.mxu0
  %504 = vmatprep.mubr.bf16.mxu0 0
  %505 = vmatmul.mubr.bf16.gmra.mxu0 %v461
  %v506 = vpop.f32.mrf.mxu0
  %v507 = vadd.f32 0.0, %v506
  %v508 = vpop.f32.mrf.mxu0
  %v509 = vpop.f32.mrf.mxu0
  %v510 = vadd.f32 0.0, %v509
  %v511 = vpop.f32.mrf.mxu0
  %512 = vdwg.mxu0
  %v513 = vpack.c.bf16 %v502, %v499
  %v514 = vpack.c.bf16 %v510, %v507
  %s515 = scalar_lea.vmem %s4, 16
  %v516 = vld [vmem:[%s515] sm:$0xf]
  %v517 = vld [vmem:[%s515 + $0x4] sm:$0xf]
  %v518 = vld [vmem:[%s515 + $0x8] sm:$0xf]
  %v519 = vld [vmem:[%s515 + $0xc] sm:$0xf]
  %v524 = vunpack.c.l.b16 %v516
  %v525 = vunpack.c.l.b16 %v517
  %v526 = vunpack.c.l.b16 %v518
  %v527 = vunpack.c.l.b16 %v519
  %v528 = vpack.c.b16 %v525, %v524
  %v529 = vpack.c.b16 %v527, %v526
  %v533 = vsel %vm381, %v513, 0
  %v536 = vsel %vm381, %v514, 0
  %538 = vmatprep.subr.bf16.mxu0 0
  %539 = vmatpush1.bf16.msra.mxu0 0
  %540 = vmatprep.subr.bf16.mxu0 0
  %541 = vmatpush1.bf16.msra.mxu0 0
  %542 = vmatprep.subr.bf16.mxu0 0
  %543 = vmatpush1.bf16.msra.mxu0 0
  %544 = vmatprep.subr.bf16.mxu0 0
  %545 = vmatpush1.bf16.msra.mxu0 0
  %546 = vmatprep.subr.bf16.mxu0 0
  %547 = vmatpush1.bf16.msra.mxu0 0
  %548 = vmatprep.subr.bf16.mxu0 0
  %549 = vmatpush1.bf16.msra.mxu0 0
  %550 = vmatprep.subr.bf16.mxu0 0
  %551 = vmatpush1.bf16.msra.mxu0 %v529
  %552 = vmatprep.subr.bf16.mxu0 0
  %553 = vmatpush1.bf16.msra.mxu0 %v528
  %554 = vmatprep.subr.bf16.mxu0 0
  %555 = vmatpush2.bf16.msra.mxu0 0
  %556 = vmatprep.subr.bf16.mxu0 0
  %557 = vmatpush2.bf16.msra.mxu0 0
  %558 = vmatprep.subr.bf16.mxu0 0
  %559 = vmatpush2.bf16.msra.mxu0 0
  %560 = vmatprep.subr.bf16.mxu0 0
  %561 = vmatpush2.bf16.msra.mxu0 0
  %562 = vmatprep.subr.bf16.mxu0 0
  %563 = vmatpush2.bf16.msra.mxu0 0
  %564 = vmatprep.subr.bf16.mxu0 0
  %565 = vmatpush2.bf16.msra.mxu0 0
  %566 = vmatprep.subr.bf16.mxu0 0
  %567 = vmatpush2.bf16.msra.mxu0 0
  %568 = vmatprep.subr.bf16.mxu0 0
  %569 = vmatpush2.bf16.msra.mxu0 0
  %570 = vmatprep.mubr.bf16.mxu0 0
  %571 = vmatmul.mubr.bf16.gmra.mxu0 %v533
  %v572 = vpop.f32.mrf.mxu0
  %v573 = vadd.f32 0.0, %v572
  %v574 = vpop.f32.mrf.mxu0
  %v575 = vpop.f32.mrf.mxu0
  %v576 = vadd.f32 0.0, %v575
  %v577 = vpop.f32.mrf.mxu0
  %578 = vmatprep.mubr.bf16.mxu0 0
  %579 = vmatmul.mubr.bf16.gmra.mxu0 %v536
  %v580 = vpop.f32.mrf.mxu0
  %v581 = vadd.f32 0.0, %v580
  %v582 = vpop.f32.mrf.mxu0
  %v583 = vpop.f32.mrf.mxu0
  %v584 = vadd.f32 0.0, %v583
  %v585 = vpop.f32.mrf.mxu0
  %586 = vdwg.mxu0
  %v587 = vadd.f32 %v443, %v573
  %v588 = vadd.f32 %v444, %v576
  %v589 = vadd.f32 %v445, %v581
  %v590 = vadd.f32 %v446, %v584
  %s591 = scalar_lea.vmem %s3, 32
  %v592 = vld [vmem:[%s591] sm:$0xf]
  %v593 = vld [vmem:[%s591 + $0x4] sm:$0xf]
  %v594 = vld [vmem:[%s591 + $0x8] sm:$0xf]
  %v595 = vld [vmem:[%s591 + $0xc] sm:$0xf]
  %v600 = vunpack.c.l.b16 %v592
  %v601 = vunpack.c.l.b16 %v593
  %v602 = vunpack.c.l.b16 %v594
  %v603 = vunpack.c.l.b16 %v595
  %v604 = vpack.c.b16 %v601, %v600
  %v605 = vpack.c.b16 %v603, %v602
  %608 = vmatprep.subr.bf16.mxu0 0
  %609 = vmatpush1.bf16.msra.mxu0 %v296
  %610 = vmatprep.subr.bf16.mxu0 0
  %611 = vmatpush1.bf16.msra.mxu0 %v295
  %612 = vmatprep.subr.bf16.mxu0 0
  %613 = vmatpush1.bf16.msra.mxu0 %v294
  %614 = vmatprep.subr.bf16.mxu0 0
  %615 = vmatpush1.bf16.msra.mxu0 %v293
  %616 = vmatprep.subr.bf16.mxu0 0
  %617 = vmatpush1.bf16.msra.mxu0 %v292
  %618 = vmatprep.subr.bf16.mxu0 0
  %619 = vmatpush1.bf16.msra.mxu0 %v291
  %620 = vmatprep.subr.bf16.mxu0 0
  %621 = vmatpush1.bf16.msra.mxu0 %v290
  %622 = vmatprep.subr.bf16.mxu0 0
  %623 = vmatpush1.bf16.msra.mxu0 %v289
  %624 = vmatprep.subr.bf16.mxu0 0
  %625 = vmatpush2.bf16.msra.mxu0 0
  %626 = vmatprep.subr.bf16.mxu0 0
  %627 = vmatpush2.bf16.msra.mxu0 0
  %628 = vmatprep.subr.bf16.mxu0 0
  %629 = vmatpush2.bf16.msra.mxu0 0
  %630 = vmatprep.subr.bf16.mxu0 0
  %631 = vmatpush2.bf16.msra.mxu0 0
  %632 = vmatprep.subr.bf16.mxu0 0
  %633 = vmatpush2.bf16.msra.mxu0 0
  %634 = vmatprep.subr.bf16.mxu0 0
  %635 = vmatpush2.bf16.msra.mxu0 0
  %636 = vmatprep.subr.bf16.mxu0 0
  %637 = vmatpush2.bf16.msra.mxu0 0
  %638 = vmatprep.subr.bf16.mxu0 0
  %639 = vmatpush2.bf16.msra.mxu0 0
  %640 = vmatprep.mubr.bf16.mxu0 0
  %641 = vmatmul.mubr.bf16.gmra.mxu0 %v604
  %v642 = vpop.f32.mrf.mxu0
  %v643 = vadd.f32 0.0, %v642
  %v644 = vpop.f32.mrf.mxu0
  %v645 = vpop.f32.mrf.mxu0
  %v646 = vadd.f32 0.0, %v645
  %v647 = vpop.f32.mrf.mxu0
  %648 = vmatprep.mubr.bf16.mxu0 0
  %649 = vmatmul.mubr.bf16.gmra.mxu0 %v605
  %v650 = vpop.f32.mrf.mxu0
  %v651 = vadd.f32 0.0, %v650
  %v652 = vpop.f32.mrf.mxu0
  %v653 = vpop.f32.mrf.mxu0
  %v654 = vadd.f32 0.0, %v653
  %v655 = vpop.f32.mrf.mxu0
  %656 = vdwg.mxu0
  %v657 = vpack.c.bf16 %v646, %v643
  %v658 = vpack.c.bf16 %v654, %v651
  %s659 = scalar_lea.vmem %s4, 32
  %v660 = vld [vmem:[%s659] sm:$0xf]
  %v661 = vld [vmem:[%s659 + $0x4] sm:$0xf]
  %v662 = vld [vmem:[%s659 + $0x8] sm:$0xf]
  %v663 = vld [vmem:[%s659 + $0xc] sm:$0xf]
  %v668 = vunpack.c.l.b16 %v660
  %v669 = vunpack.c.l.b16 %v661
  %v670 = vunpack.c.l.b16 %v662
  %v671 = vunpack.c.l.b16 %v663
  %v672 = vpack.c.b16 %v669, %v668
  %v673 = vpack.c.b16 %v671, %v670
  %v677 = vsel %vm381, %v657, 0
  %v680 = vsel %vm381, %v658, 0
  %682 = vmatprep.subr.bf16.mxu0 0
  %683 = vmatpush1.bf16.msra.mxu0 0
  %684 = vmatprep.subr.bf16.mxu0 0
  %685 = vmatpush1.bf16.msra.mxu0 0
  %686 = vmatprep.subr.bf16.mxu0 0
  %687 = vmatpush1.bf16.msra.mxu0 0
  %688 = vmatprep.subr.bf16.mxu0 0
  %689 = vmatpush1.bf16.msra.mxu0 0
  %690 = vmatprep.subr.bf16.mxu0 0
  %691 = vmatpush1.bf16.msra.mxu0 0
  %692 = vmatprep.subr.bf16.mxu0 0
  %693 = vmatpush1.bf16.msra.mxu0 0
  %694 = vmatprep.subr.bf16.mxu0 0
  %695 = vmatpush1.bf16.msra.mxu0 %v673
  %696 = vmatprep.subr.bf16.mxu0 0
  %697 = vmatpush1.bf16.msra.mxu0 %v672
  %698 = vmatprep.subr.bf16.mxu0 0
  %699 = vmatpush2.bf16.msra.mxu0 0
  %700 = vmatprep.subr.bf16.mxu0 0
  %701 = vmatpush2.bf16.msra.mxu0 0
  %702 = vmatprep.subr.bf16.mxu0 0
  %703 = vmatpush2.bf16.msra.mxu0 0
  %704 = vmatprep.subr.bf16.mxu0 0
  %705 = vmatpush2.bf16.msra.mxu0 0
  %706 = vmatprep.subr.bf16.mxu0 0
  %707 = vmatpush2.bf16.msra.mxu0 0
  %708 = vmatprep.subr.bf16.mxu0 0
  %709 = vmatpush2.bf16.msra.mxu0 0
  %710 = vmatprep.subr.bf16.mxu0 0
  %711 = vmatpush2.bf16.msra.mxu0 0
  %712 = vmatprep.subr.bf16.mxu0 0
  %713 = vmatpush2.bf16.msra.mxu0 0
  %714 = vmatprep.mubr.bf16.mxu0 0
  %715 = vmatmul.mubr.bf16.gmra.mxu0 %v677
  %v716 = vpop.f32.mrf.mxu0
  %v717 = vadd.f32 0.0, %v716
  %v718 = vpop.f32.mrf.mxu0
  %v719 = vpop.f32.mrf.mxu0
  %v720 = vadd.f32 0.0, %v719
  %v721 = vpop.f32.mrf.mxu0
  %722 = vmatprep.mubr.bf16.mxu0 0
  %723 = vmatmul.mubr.bf16.gmra.mxu0 %v680
  %v724 = vpop.f32.mrf.mxu0
  %v725 = vadd.f32 0.0, %v724
  %v726 = vpop.f32.mrf.mxu0
  %v727 = vpop.f32.mrf.mxu0
  %v728 = vadd.f32 0.0, %v727
  %v729 = vpop.f32.mrf.mxu0
  %730 = vdwg.mxu0
  %v731 = vadd.f32 %v587, %v717
  %v732 = vadd.f32 %v588, %v720
  %v733 = vadd.f32 %v589, %v725
  %v734 = vadd.f32 %v590, %v728
  %s735 = scalar_lea.vmem %s3, 48
  %v736 = vld [vmem:[%s735] sm:$0xf]
  %v737 = vld [vmem:[%s735 + $0x4] sm:$0xf]
  %v738 = vld [vmem:[%s735 + $0x8] sm:$0xf]
  %v739 = vld [vmem:[%s735 + $0xc] sm:$0xf]
  %v744 = vunpack.c.l.b16 %v736
  %v745 = vunpack.c.l.b16 %v737
  %v746 = vunpack.c.l.b16 %v738
  %v747 = vunpack.c.l.b16 %v739
  %v748 = vpack.c.b16 %v745, %v744
  %v749 = vpack.c.b16 %v747, %v746
  %752 = vmatprep.subr.bf16.mxu0 0
  %753 = vmatpush1.bf16.msra.mxu0 %v296
  %754 = vmatprep.subr.bf16.mxu0 0
  %755 = vmatpush1.bf16.msra.mxu0 %v295
  %756 = vmatprep.subr.bf16.mxu0 0
  %757 = vmatpush1.bf16.msra.mxu0 %v294
  %758 = vmatprep.subr.bf16.mxu0 0
  %759 = vmatpush1.bf16.msra.mxu0 %v293
  %760 = vmatprep.subr.bf16.mxu0 0
  %761 = vmatpush1.bf16.msra.mxu0 %v292
  %762 = vmatprep.subr.bf16.mxu0 0
  %763 = vmatpush1.bf16.msra.mxu0 %v291
  %764 = vmatprep.subr.bf16.mxu0 0
  %765 = vmatpush1.bf16.msra.mxu0 %v290
  %766 = vmatprep.subr.bf16.mxu0 0
  %767 = vmatpush1.bf16.msra.mxu0 %v289
  %768 = vmatprep.subr.bf16.mxu0 0
  %769 = vmatpush2.bf16.msra.mxu0 0
  %770 = vmatprep.subr.bf16.mxu0 0
  %771 = vmatpush2.bf16.msra.mxu0 0
  %772 = vmatprep.subr.bf16.mxu0 0
  %773 = vmatpush2.bf16.msra.mxu0 0
  %774 = vmatprep.subr.bf16.mxu0 0
  %775 = vmatpush2.bf16.msra.mxu0 0
  %776 = vmatprep.subr.bf16.mxu0 0
  %777 = vmatpush2.bf16.msra.mxu0 0
  %778 = vmatprep.subr.bf16.mxu0 0
  %779 = vmatpush2.bf16.msra.mxu0 0
  %780 = vmatprep.subr.bf16.mxu0 0
  %781 = vmatpush2.bf16.msra.mxu0 0
  %782 = vmatprep.subr.bf16.mxu0 0
  %783 = vmatpush2.bf16.msra.mxu0 0
  %784 = vmatprep.mubr.bf16.mxu0 0
  %785 = vmatmul.mubr.bf16.gmra.mxu0 %v748
  %v786 = vpop.f32.mrf.mxu0
  %v787 = vadd.f32 0.0, %v786
  %v788 = vpop.f32.mrf.mxu0
  %v789 = vpop.f32.mrf.mxu0
  %v790 = vadd.f32 0.0, %v789
  %v791 = vpop.f32.mrf.mxu0
  %792 = vmatprep.mubr.bf16.mxu0 0
  %793 = vmatmul.mubr.bf16.gmra.mxu0 %v749
  %v794 = vpop.f32.mrf.mxu0
  %v795 = vadd.f32 0.0, %v794
  %v796 = vpop.f32.mrf.mxu0
  %v797 = vpop.f32.mrf.mxu0
  %v798 = vadd.f32 0.0, %v797
  %v799 = vpop.f32.mrf.mxu0
  %800 = vdwg.mxu0
  %v801 = vpack.c.bf16 %v790, %v787
  %v802 = vpack.c.bf16 %v798, %v795
  %s803 = scalar_lea.vmem %s4, 48
  %v804 = vld [vmem:[%s803] sm:$0xf]
  %v805 = vld [vmem:[%s803 + $0x4] sm:$0xf]
  %v806 = vld [vmem:[%s803 + $0x8] sm:$0xf]
  %v807 = vld [vmem:[%s803 + $0xc] sm:$0xf]
  %v812 = vunpack.c.l.b16 %v804
  %v813 = vunpack.c.l.b16 %v805
  %v814 = vunpack.c.l.b16 %v806
  %v815 = vunpack.c.l.b16 %v807
  %v816 = vpack.c.b16 %v813, %v812
  %v817 = vpack.c.b16 %v815, %v814
  %v821 = vsel %vm381, %v801, 0
  %v824 = vsel %vm381, %v802, 0
  %826 = vmatprep.subr.bf16.mxu0 0
  %827 = vmatpush1.bf16.msra.mxu0 0
  %828 = vmatprep.subr.bf16.mxu0 0
  %829 = vmatpush1.bf16.msra.mxu0 0
  %830 = vmatprep.subr.bf16.mxu0 0
  %831 = vmatpush1.bf16.msra.mxu0 0
  %832 = vmatprep.subr.bf16.mxu0 0
  %833 = vmatpush1.bf16.msra.mxu0 0
  %834 = vmatprep.subr.bf16.mxu0 0
  %835 = vmatpush1.bf16.msra.mxu0 0
  %836 = vmatprep.subr.bf16.mxu0 0
  %837 = vmatpush1.bf16.msra.mxu0 0
  %838 = vmatprep.subr.bf16.mxu0 0
  %839 = vmatpush1.bf16.msra.mxu0 %v817
  %840 = vmatprep.subr.bf16.mxu0 0
  %841 = vmatpush1.bf16.msra.mxu0 %v816
  %842 = vmatprep.subr.bf16.mxu0 0
  %843 = vmatpush2.bf16.msra.mxu0 0
  %844 = vmatprep.subr.bf16.mxu0 0
  %845 = vmatpush2.bf16.msra.mxu0 0
  %846 = vmatprep.subr.bf16.mxu0 0
  %847 = vmatpush2.bf16.msra.mxu0 0
  %848 = vmatprep.subr.bf16.mxu0 0
  %849 = vmatpush2.bf16.msra.mxu0 0
  %850 = vmatprep.subr.bf16.mxu0 0
  %851 = vmatpush2.bf16.msra.mxu0 0
  %852 = vmatprep.subr.bf16.mxu0 0
  %853 = vmatpush2.bf16.msra.mxu0 0
  %854 = vmatprep.subr.bf16.mxu0 0
  %855 = vmatpush2.bf16.msra.mxu0 0
  %856 = vmatprep.subr.bf16.mxu0 0
  %857 = vmatpush2.bf16.msra.mxu0 0
  %858 = vmatprep.mubr.bf16.mxu0 0
  %859 = vmatmul.mubr.bf16.gmra.mxu0 %v821
  %v860 = vpop.f32.mrf.mxu0
  %v861 = vadd.f32 0.0, %v860
  %v862 = vpop.f32.mrf.mxu0
  %v863 = vpop.f32.mrf.mxu0
  %v864 = vadd.f32 0.0, %v863
  %v865 = vpop.f32.mrf.mxu0
  %866 = vmatprep.mubr.bf16.mxu0 0
  %867 = vmatmul.mubr.bf16.gmra.mxu0 %v824
  %v868 = vpop.f32.mrf.mxu0
  %v869 = vadd.f32 0.0, %v868
  %v870 = vpop.f32.mrf.mxu0
  %v871 = vpop.f32.mrf.mxu0
  %v872 = vadd.f32 0.0, %v871
  %v873 = vpop.f32.mrf.mxu0
  %874 = vdwg.mxu0
  %v875 = vadd.f32 %v731, %v861
  %v876 = vadd.f32 %v732, %v864
  %v877 = vadd.f32 %v733, %v869
  %v878 = vadd.f32 %v734, %v872
  %s879 = scalar_lea.vmem %s3, 64
  %v880 = vld [vmem:[%s879] sm:$0xf]
  %v881 = vld [vmem:[%s879 + $0x4] sm:$0xf]
  %v882 = vld [vmem:[%s879 + $0x8] sm:$0xf]
  %v883 = vld [vmem:[%s879 + $0xc] sm:$0xf]
  %v888 = vunpack.c.l.b16 %v880
  %v889 = vunpack.c.l.b16 %v881
  %v890 = vunpack.c.l.b16 %v882
  %v891 = vunpack.c.l.b16 %v883
  %v892 = vpack.c.b16 %v889, %v888
  %v893 = vpack.c.b16 %v891, %v890
  %896 = vmatprep.subr.bf16.mxu0 0
  %897 = vmatpush1.bf16.msra.mxu0 %v296
  %898 = vmatprep.subr.bf16.mxu0 0
  %899 = vmatpush1.bf16.msra.mxu0 %v295
  %900 = vmatprep.subr.bf16.mxu0 0
  %901 = vmatpush1.bf16.msra.mxu0 %v294
  %902 = vmatprep.subr.bf16.mxu0 0
  %903 = vmatpush1.bf16.msra.mxu0 %v293
  %904 = vmatprep.subr.bf16.mxu0 0
  %905 = vmatpush1.bf16.msra.mxu0 %v292
  %906 = vmatprep.subr.bf16.mxu0 0
  %907 = vmatpush1.bf16.msra.mxu0 %v291
  %908 = vmatprep.subr.bf16.mxu0 0
  %909 = vmatpush1.bf16.msra.mxu0 %v290
  %910 = vmatprep.subr.bf16.mxu0 0
  %911 = vmatpush1.bf16.msra.mxu0 %v289
  %912 = vmatprep.subr.bf16.mxu0 0
  %913 = vmatpush2.bf16.msra.mxu0 0
  %914 = vmatprep.subr.bf16.mxu0 0
  %915 = vmatpush2.bf16.msra.mxu0 0
  %916 = vmatprep.subr.bf16.mxu0 0
  %917 = vmatpush2.bf16.msra.mxu0 0
  %918 = vmatprep.subr.bf16.mxu0 0
  %919 = vmatpush2.bf16.msra.mxu0 0
  %920 = vmatprep.subr.bf16.mxu0 0
  %921 = vmatpush2.bf16.msra.mxu0 0
  %922 = vmatprep.subr.bf16.mxu0 0
  %923 = vmatpush2.bf16.msra.mxu0 0
  %924 = vmatprep.subr.bf16.mxu0 0
  %925 = vmatpush2.bf16.msra.mxu0 0
  %926 = vmatprep.subr.bf16.mxu0 0
  %927 = vmatpush2.bf16.msra.mxu0 0
  %928 = vmatprep.mubr.bf16.mxu0 0
  %929 = vmatmul.mubr.bf16.gmra.mxu0 %v892
  %v930 = vpop.f32.mrf.mxu0
  %v931 = vadd.f32 0.0, %v930
  %v932 = vpop.f32.mrf.mxu0
  %v933 = vpop.f32.mrf.mxu0
  %v934 = vadd.f32 0.0, %v933
  %v935 = vpop.f32.mrf.mxu0
  %936 = vmatprep.mubr.bf16.mxu0 0
  %937 = vmatmul.mubr.bf16.gmra.mxu0 %v893
  %v938 = vpop.f32.mrf.mxu0
  %v939 = vadd.f32 0.0, %v938
  %v940 = vpop.f32.mrf.mxu0
  %v941 = vpop.f32.mrf.mxu0
  %v942 = vadd.f32 0.0, %v941
  %v943 = vpop.f32.mrf.mxu0
  %944 = vdwg.mxu0
  %v945 = vpack.c.bf16 %v934, %v931
  %v946 = vpack.c.bf16 %v942, %v939
  %s947 = scalar_lea.vmem %s4, 64
  %v948 = vld [vmem:[%s947] sm:$0xf]
  %v949 = vld [vmem:[%s947 + $0x4] sm:$0xf]
  %v950 = vld [vmem:[%s947 + $0x8] sm:$0xf]
  %v951 = vld [vmem:[%s947 + $0xc] sm:$0xf]
  %v956 = vunpack.c.l.b16 %v948
  %v957 = vunpack.c.l.b16 %v949
  %v958 = vunpack.c.l.b16 %v950
  %v959 = vunpack.c.l.b16 %v951
  %v960 = vpack.c.b16 %v957, %v956
  %v961 = vpack.c.b16 %v959, %v958
  %v965 = vsel %vm381, %v945, 0
  %v968 = vsel %vm381, %v946, 0
  %970 = vmatprep.subr.bf16.mxu0 0
  %971 = vmatpush1.bf16.msra.mxu0 0
  %972 = vmatprep.subr.bf16.mxu0 0
  %973 = vmatpush1.bf16.msra.mxu0 0
  %974 = vmatprep.subr.bf16.mxu0 0
  %975 = vmatpush1.bf16.msra.mxu0 0
  %976 = vmatprep.subr.bf16.mxu0 0
  %977 = vmatpush1.bf16.msra.mxu0 0
  %978 = vmatprep.subr.bf16.mxu0 0
  %979 = vmatpush1.bf16.msra.mxu0 0
  %980 = vmatprep.subr.bf16.mxu0 0
  %981 = vmatpush1.bf16.msra.mxu0 0
  %982 = vmatprep.subr.bf16.mxu0 0
  %983 = vmatpush1.bf16.msra.mxu0 %v961
  %984 = vmatprep.subr.bf16.mxu0 0
  %985 = vmatpush1.bf16.msra.mxu0 %v960
  %986 = vmatprep.subr.bf16.mxu0 0
  %987 = vmatpush2.bf16.msra.mxu0 0
  %988 = vmatprep.subr.bf16.mxu0 0
  %989 = vmatpush2.bf16.msra.mxu0 0
  %990 = vmatprep.subr.bf16.mxu0 0
  %991 = vmatpush2.bf16.msra.mxu0 0
  %992 = vmatprep.subr.bf16.mxu0 0
  %993 = vmatpush2.bf16.msra.mxu0 0
  %994 = vmatprep.subr.bf16.mxu0 0
  %995 = vmatpush2.bf16.msra.mxu0 0
  %996 = vmatprep.subr.bf16.mxu0 0
  %997 = vmatpush2.bf16.msra.mxu0 0
  %998 = vmatprep.subr.bf16.mxu0 0
  %999 = vmatpush2.bf16.msra.mxu0 0
  %1000 = vmatprep.subr.bf16.mxu0 0
  %1001 = vmatpush2.bf16.msra.mxu0 0
  %1002 = vmatprep.mubr.bf16.mxu0 0
  %1003 = vmatmul.mubr.bf16.gmra.mxu0 %v965
  %v1004 = vpop.f32.mrf.mxu0
  %v1005 = vadd.f32 0.0, %v1004
  %v1006 = vpop.f32.mrf.mxu0
  %v1007 = vpop.f32.mrf.mxu0
  %v1008 = vadd.f32 0.0, %v1007
  %v1009 = vpop.f32.mrf.mxu0
  %1010 = vmatprep.mubr.bf16.mxu0 0
  %1011 = vmatmul.mubr.bf16.gmra.mxu0 %v968
  %v1012 = vpop.f32.mrf.mxu0
  %v1013 = vadd.f32 0.0, %v1012
  %v1014 = vpop.f32.mrf.mxu0
  %v1015 = vpop.f32.mrf.mxu0
  %v1016 = vadd.f32 0.0, %v1015
  %v1017 = vpop.f32.mrf.mxu0
  %1018 = vdwg.mxu0
  %v1019 = vadd.f32 %v875, %v1005
  %v1020 = vadd.f32 %v876, %v1008
  %v1021 = vadd.f32 %v877, %v1013
  %v1022 = vadd.f32 %v878, %v1016
  %s1023 = scalar_lea.vmem %s3, 80
  %v1024 = vld [vmem:[%s1023] sm:$0xf]
  %v1025 = vld [vmem:[%s1023 + $0x4] sm:$0xf]
  %v1026 = vld [vmem:[%s1023 + $0x8] sm:$0xf]
  %v1027 = vld [vmem:[%s1023 + $0xc] sm:$0xf]
  %v1032 = vunpack.c.l.b16 %v1024
  %v1033 = vunpack.c.l.b16 %v1025
  %v1034 = vunpack.c.l.b16 %v1026
  %v1035 = vunpack.c.l.b16 %v1027
  %v1036 = vpack.c.b16 %v1033, %v1032
  %v1037 = vpack.c.b16 %v1035, %v1034
  %1040 = vmatprep.subr.bf16.mxu0 0
  %1041 = vmatpush1.bf16.msra.mxu0 %v296
  %1042 = vmatprep.subr.bf16.mxu0 0
  %1043 = vmatpush1.bf16.msra.mxu0 %v295
  %1044 = vmatprep.subr.bf16.mxu0 0
  %1045 = vmatpush1.bf16.msra.mxu0 %v294
  %1046 = vmatprep.subr.bf16.mxu0 0
  %1047 = vmatpush1.bf16.msra.mxu0 %v293
  %1048 = vmatprep.subr.bf16.mxu0 0
  %1049 = vmatpush1.bf16.msra.mxu0 %v292
  %1050 = vmatprep.subr.bf16.mxu0 0
  %1051 = vmatpush1.bf16.msra.mxu0 %v291
  %1052 = vmatprep.subr.bf16.mxu0 0
  %1053 = vmatpush1.bf16.msra.mxu0 %v290
  %1054 = vmatprep.subr.bf16.mxu0 0
  %1055 = vmatpush1.bf16.msra.mxu0 %v289
  %1056 = vmatprep.subr.bf16.mxu0 0
  %1057 = vmatpush2.bf16.msra.mxu0 0
  %1058 = vmatprep.subr.bf16.mxu0 0
  %1059 = vmatpush2.bf16.msra.mxu0 0
  %1060 = vmatprep.subr.bf16.mxu0 0
  %1061 = vmatpush2.bf16.msra.mxu0 0
  %1062 = vmatprep.subr.bf16.mxu0 0
  %1063 = vmatpush2.bf16.msra.mxu0 0
  %1064 = vmatprep.subr.bf16.mxu0 0
  %1065 = vmatpush2.bf16.msra.mxu0 0
  %1066 = vmatprep.subr.bf16.mxu0 0
  %1067 = vmatpush2.bf16.msra.mxu0 0
  %1068 = vmatprep.subr.bf16.mxu0 0
  %1069 = vmatpush2.bf16.msra.mxu0 0
  %1070 = vmatprep.subr.bf16.mxu0 0
  %1071 = vmatpush2.bf16.msra.mxu0 0
  %1072 = vmatprep.mubr.bf16.mxu0 0
  %1073 = vmatmul.mubr.bf16.gmra.mxu0 %v1036
  %v1074 = vpop.f32.mrf.mxu0
  %v1075 = vadd.f32 0.0, %v1074
  %v1076 = vpop.f32.mrf.mxu0
  %v1077 = vpop.f32.mrf.mxu0
  %v1078 = vadd.f32 0.0, %v1077
  %v1079 = vpop.f32.mrf.mxu0
  %1080 = vmatprep.mubr.bf16.mxu0 0
  %1081 = vmatmul.mubr.bf16.gmra.mxu0 %v1037
  %v1082 = vpop.f32.mrf.mxu0
  %v1083 = vadd.f32 0.0, %v1082
  %v1084 = vpop.f32.mrf.mxu0
  %v1085 = vpop.f32.mrf.mxu0
  %v1086 = vadd.f32 0.0, %v1085
  %v1087 = vpop.f32.mrf.mxu0
  %1088 = vdwg.mxu0
  %v1089 = vpack.c.bf16 %v1078, %v1075
  %v1090 = vpack.c.bf16 %v1086, %v1083
  %s1091 = scalar_lea.vmem %s4, 80
  %v1092 = vld [vmem:[%s1091] sm:$0xf]
  %v1093 = vld [vmem:[%s1091 + $0x4] sm:$0xf]
  %v1094 = vld [vmem:[%s1091 + $0x8] sm:$0xf]
  %v1095 = vld [vmem:[%s1091 + $0xc] sm:$0xf]
  %v1100 = vunpack.c.l.b16 %v1092
  %v1101 = vunpack.c.l.b16 %v1093
  %v1102 = vunpack.c.l.b16 %v1094
  %v1103 = vunpack.c.l.b16 %v1095
  %v1104 = vpack.c.b16 %v1101, %v1100
  %v1105 = vpack.c.b16 %v1103, %v1102
  %v1109 = vsel %vm381, %v1089, 0
  %v1112 = vsel %vm381, %v1090, 0
  %1114 = vmatprep.subr.bf16.mxu0 0
  %1115 = vmatpush1.bf16.msra.mxu0 0
  %1116 = vmatprep.subr.bf16.mxu0 0
  %1117 = vmatpush1.bf16.msra.mxu0 0
  %1118 = vmatprep.subr.bf16.mxu0 0
  %1119 = vmatpush1.bf16.msra.mxu0 0
  %1120 = vmatprep.subr.bf16.mxu0 0
  %1121 = vmatpush1.bf16.msra.mxu0 0
  %1122 = vmatprep.subr.bf16.mxu0 0
  %1123 = vmatpush1.bf16.msra.mxu0 0
  %1124 = vmatprep.subr.bf16.mxu0 0
  %1125 = vmatpush1.bf16.msra.mxu0 0
  %1126 = vmatprep.subr.bf16.mxu0 0
  %1127 = vmatpush1.bf16.msra.mxu0 %v1105
  %1128 = vmatprep.subr.bf16.mxu0 0
  %1129 = vmatpush1.bf16.msra.mxu0 %v1104
  %1130 = vmatprep.subr.bf16.mxu0 0
  %1131 = vmatpush2.bf16.msra.mxu0 0
  %1132 = vmatprep.subr.bf16.mxu0 0
  %1133 = vmatpush2.bf16.msra.mxu0 0
  %1134 = vmatprep.subr.bf16.mxu0 0
  %1135 = vmatpush2.bf16.msra.mxu0 0
  %1136 = vmatprep.subr.bf16.mxu0 0
  %1137 = vmatpush2.bf16.msra.mxu0 0
  %1138 = vmatprep.subr.bf16.mxu0 0
  %1139 = vmatpush2.bf16.msra.mxu0 0
  %1140 = vmatprep.subr.bf16.mxu0 0
  %1141 = vmatpush2.bf16.msra.mxu0 0
  %1142 = vmatprep.subr.bf16.mxu0 0
  %1143 = vmatpush2.bf16.msra.mxu0 0
  %1144 = vmatprep.subr.bf16.mxu0 0
  %1145 = vmatpush2.bf16.msra.mxu0 0
  %1146 = vmatprep.mubr.bf16.mxu0 0
  %1147 = vmatmul.mubr.bf16.gmra.mxu0 %v1109
  %v1148 = vpop.f32.mrf.mxu0
  %v1149 = vadd.f32 0.0, %v1148
  %v1150 = vpop.f32.mrf.mxu0
  %v1151 = vpop.f32.mrf.mxu0
  %v1152 = vadd.f32 0.0, %v1151
  %v1153 = vpop.f32.mrf.mxu0
  %1154 = vmatprep.mubr.bf16.mxu0 0
  %1155 = vmatmul.mubr.bf16.gmra.mxu0 %v1112
  %v1156 = vpop.f32.mrf.mxu0
  %v1157 = vadd.f32 0.0, %v1156
  %v1158 = vpop.f32.mrf.mxu0
  %v1159 = vpop.f32.mrf.mxu0
  %v1160 = vadd.f32 0.0, %v1159
  %v1161 = vpop.f32.mrf.mxu0
  %1162 = vdwg.mxu0
  %v1163 = vadd.f32 %v1019, %v1149
  %v1164 = vadd.f32 %v1020, %v1152
  %v1165 = vadd.f32 %v1021, %v1157
  %v1166 = vadd.f32 %v1022, %v1160
  %s1167 = scalar_lea.vmem %s3, 96
  %v1168 = vld [vmem:[%s1167] sm:$0xf]
  %v1169 = vld [vmem:[%s1167 + $0x4] sm:$0xf]
  %v1170 = vld [vmem:[%s1167 + $0x8] sm:$0xf]
  %v1171 = vld [vmem:[%s1167 + $0xc] sm:$0xf]
  %v1176 = vunpack.c.l.b16 %v1168
  %v1177 = vunpack.c.l.b16 %v1169
  %v1178 = vunpack.c.l.b16 %v1170
  %v1179 = vunpack.c.l.b16 %v1171
  %v1180 = vpack.c.b16 %v1177, %v1176
  %v1181 = vpack.c.b16 %v1179, %v1178
  %1184 = vmatprep.subr.bf16.mxu0 0
  %1185 = vmatpush1.bf16.msra.mxu0 %v296
  %1186 = vmatprep.subr.bf16.mxu0 0
  %1187 = vmatpush1.bf16.msra.mxu0 %v295
  %1188 = vmatprep.subr.bf16.mxu0 0
  %1189 = vmatpush1.bf16.msra.mxu0 %v294
  %1190 = vmatprep.subr.bf16.mxu0 0
  %1191 = vmatpush1.bf16.msra.mxu0 %v293
  %1192 = vmatprep.subr.bf16.mxu0 0
  %1193 = vmatpush1.bf16.msra.mxu0 %v292
  %1194 = vmatprep.subr.bf16.mxu0 0
  %1195 = vmatpush1.bf16.msra.mxu0 %v291
  %1196 = vmatprep.subr.bf16.mxu0 0
  %1197 = vmatpush1.bf16.msra.mxu0 %v290
  %1198 = vmatprep.subr.bf16.mxu0 0
  %1199 = vmatpush1.bf16.msra.mxu0 %v289
  %1200 = vmatprep.subr.bf16.mxu0 0
  %1201 = vmatpush2.bf16.msra.mxu0 0
  %1202 = vmatprep.subr.bf16.mxu0 0
  %1203 = vmatpush2.bf16.msra.mxu0 0
  %1204 = vmatprep.subr.bf16.mxu0 0
  %1205 = vmatpush2.bf16.msra.mxu0 0
  %1206 = vmatprep.subr.bf16.mxu0 0
  %1207 = vmatpush2.bf16.msra.mxu0 0
  %1208 = vmatprep.subr.bf16.mxu0 0
  %1209 = vmatpush2.bf16.msra.mxu0 0
  %1210 = vmatprep.subr.bf16.mxu0 0
  %1211 = vmatpush2.bf16.msra.mxu0 0
  %1212 = vmatprep.subr.bf16.mxu0 0
  %1213 = vmatpush2.bf16.msra.mxu0 0
  %1214 = vmatprep.subr.bf16.mxu0 0
  %1215 = vmatpush2.bf16.msra.mxu0 0
  %1216 = vmatprep.mubr.bf16.mxu0 0
  %1217 = vmatmul.mubr.bf16.gmra.mxu0 %v1180
  %v1218 = vpop.f32.mrf.mxu0
  %v1219 = vadd.f32 0.0, %v1218
  %v1220 = vpop.f32.mrf.mxu0
  %v1221 = vpop.f32.mrf.mxu0
  %v1222 = vadd.f32 0.0, %v1221
  %v1223 = vpop.f32.mrf.mxu0
  %1224 = vmatprep.mubr.bf16.mxu0 0
  %1225 = vmatmul.mubr.bf16.gmra.mxu0 %v1181
  %v1226 = vpop.f32.mrf.mxu0
  %v1227 = vadd.f32 0.0, %v1226
  %v1228 = vpop.f32.mrf.mxu0
  %v1229 = vpop.f32.mrf.mxu0
  %v1230 = vadd.f32 0.0, %v1229
  %v1231 = vpop.f32.mrf.mxu0
  %1232 = vdwg.mxu0
  %v1233 = vpack.c.bf16 %v1222, %v1219
  %v1234 = vpack.c.bf16 %v1230, %v1227
  %s1235 = scalar_lea.vmem %s4, 96
  %v1236 = vld [vmem:[%s1235] sm:$0xf]
  %v1237 = vld [vmem:[%s1235 + $0x4] sm:$0xf]
  %v1238 = vld [vmem:[%s1235 + $0x8] sm:$0xf]
  %v1239 = vld [vmem:[%s1235 + $0xc] sm:$0xf]
  %v1244 = vunpack.c.l.b16 %v1236
  %v1245 = vunpack.c.l.b16 %v1237
  %v1246 = vunpack.c.l.b16 %v1238
  %v1247 = vunpack.c.l.b16 %v1239
  %v1248 = vpack.c.b16 %v1245, %v1244
  %v1249 = vpack.c.b16 %v1247, %v1246
  %v1253 = vsel %vm381, %v1233, 0
  %v1256 = vsel %vm381, %v1234, 0
  %1258 = vmatprep.subr.bf16.mxu0 0
  %1259 = vmatpush1.bf16.msra.mxu0 0
  %1260 = vmatprep.subr.bf16.mxu0 0
  %1261 = vmatpush1.bf16.msra.mxu0 0
  %1262 = vmatprep.subr.bf16.mxu0 0
  %1263 = vmatpush1.bf16.msra.mxu0 0
  %1264 = vmatprep.subr.bf16.mxu0 0
  %1265 = vmatpush1.bf16.msra.mxu0 0
  %1266 = vmatprep.subr.bf16.mxu0 0
  %1267 = vmatpush1.bf16.msra.mxu0 0
  %1268 = vmatprep.subr.bf16.mxu0 0
  %1269 = vmatpush1.bf16.msra.mxu0 0
  %1270 = vmatprep.subr.bf16.mxu0 0
  %1271 = vmatpush1.bf16.msra.mxu0 %v1249
  %1272 = vmatprep.subr.bf16.mxu0 0
  %1273 = vmatpush1.bf16.msra.mxu0 %v1248
  %1274 = vmatprep.subr.bf16.mxu0 0
  %1275 = vmatpush2.bf16.msra.mxu0 0
  %1276 = vmatprep.subr.bf16.mxu0 0
  %1277 = vmatpush2.bf16.msra.mxu0 0
  %1278 = vmatprep.subr.bf16.mxu0 0
  %1279 = vmatpush2.bf16.msra.mxu0 0
  %1280 = vmatprep.subr.bf16.mxu0 0
  %1281 = vmatpush2.bf16.msra.mxu0 0
  %1282 = vmatprep.subr.bf16.mxu0 0
  %1283 = vmatpush2.bf16.msra.mxu0 0
  %1284 = vmatprep.subr.bf16.mxu0 0
  %1285 = vmatpush2.bf16.msra.mxu0 0
  %1286 = vmatprep.subr.bf16.mxu0 0
  %1287 = vmatpush2.bf16.msra.mxu0 0
  %1288 = vmatprep.subr.bf16.mxu0 0
  %1289 = vmatpush2.bf16.msra.mxu0 0
  %1290 = vmatprep.mubr.bf16.mxu0 0
  %1291 = vmatmul.mubr.bf16.gmra.mxu0 %v1253
  %v1292 = vpop.f32.mrf.mxu0
  %v1293 = vadd.f32 0.0, %v1292
  %v1294 = vpop.f32.mrf.mxu0
  %v1295 = vpop.f32.mrf.mxu0
  %v1296 = vadd.f32 0.0, %v1295
  %v1297 = vpop.f32.mrf.mxu0
  %1298 = vmatprep.mubr.bf16.mxu0 0
  %1299 = vmatmul.mubr.bf16.gmra.mxu0 %v1256
  %v1300 = vpop.f32.mrf.mxu0
  %v1301 = vadd.f32 0.0, %v1300
  %v1302 = vpop.f32.mrf.mxu0
  %v1303 = vpop.f32.mrf.mxu0
  %v1304 = vadd.f32 0.0, %v1303
  %v1305 = vpop.f32.mrf.mxu0
  %1306 = vdwg.mxu0
  %v1307 = vadd.f32 %v1163, %v1293
  %v1308 = vadd.f32 %v1164, %v1296
  %v1309 = vadd.f32 %v1165, %v1301
  %v1310 = vadd.f32 %v1166, %v1304
  %s1311 = scalar_lea.vmem %s3, 112
  %v1312 = vld [vmem:[%s1311] sm:$0xf]
  %v1313 = vld [vmem:[%s1311 + $0x4] sm:$0xf]
  %v1314 = vld [vmem:[%s1311 + $0x8] sm:$0xf]
  %v1315 = vld [vmem:[%s1311 + $0xc] sm:$0xf]
  %v1320 = vunpack.c.l.b16 %v1312
  %v1321 = vunpack.c.l.b16 %v1313
  %v1322 = vunpack.c.l.b16 %v1314
  %v1323 = vunpack.c.l.b16 %v1315
  %v1324 = vpack.c.b16 %v1321, %v1320
  %v1325 = vpack.c.b16 %v1323, %v1322
  %1328 = vmatprep.subr.bf16.mxu0 0
  %1329 = vmatpush1.bf16.msra.mxu0 %v296
  %1330 = vmatprep.subr.bf16.mxu0 0
  %1331 = vmatpush1.bf16.msra.mxu0 %v295
  %1332 = vmatprep.subr.bf16.mxu0 0
  %1333 = vmatpush1.bf16.msra.mxu0 %v294
  %1334 = vmatprep.subr.bf16.mxu0 0
  %1335 = vmatpush1.bf16.msra.mxu0 %v293
  %1336 = vmatprep.subr.bf16.mxu0 0
  %1337 = vmatpush1.bf16.msra.mxu0 %v292
  %1338 = vmatprep.subr.bf16.mxu0 0
  %1339 = vmatpush1.bf16.msra.mxu0 %v291
  %1340 = vmatprep.subr.bf16.mxu0 0
  %1341 = vmatpush1.bf16.msra.mxu0 %v290
  %1342 = vmatprep.subr.bf16.mxu0 0
  %1343 = vmatpush1.bf16.msra.mxu0 %v289
  %1344 = vmatprep.subr.bf16.mxu0 0
  %1345 = vmatpush2.bf16.msra.mxu0 0
  %1346 = vmatprep.subr.bf16.mxu0 0
  %1347 = vmatpush2.bf16.msra.mxu0 0
  %1348 = vmatprep.subr.bf16.mxu0 0
  %1349 = vmatpush2.bf16.msra.mxu0 0
  %1350 = vmatprep.subr.bf16.mxu0 0
  %1351 = vmatpush2.bf16.msra.mxu0 0
  %1352 = vmatprep.subr.bf16.mxu0 0
  %1353 = vmatpush2.bf16.msra.mxu0 0
  %1354 = vmatprep.subr.bf16.mxu0 0
  %1355 = vmatpush2.bf16.msra.mxu0 0
  %1356 = vmatprep.subr.bf16.mxu0 0
  %1357 = vmatpush2.bf16.msra.mxu0 0
  %1358 = vmatprep.subr.bf16.mxu0 0
  %1359 = vmatpush2.bf16.msra.mxu0 0
  %1360 = vmatprep.mubr.bf16.mxu0 0
  %1361 = vmatmul.mubr.bf16.gmra.mxu0 %v1324
  %v1362 = vpop.f32.mrf.mxu0
  %v1363 = vadd.f32 0.0, %v1362
  %v1364 = vpop.f32.mrf.mxu0
  %v1365 = vpop.f32.mrf.mxu0
  %v1366 = vadd.f32 0.0, %v1365
  %v1367 = vpop.f32.mrf.mxu0
  %1368 = vmatprep.mubr.bf16.mxu0 0
  %1369 = vmatmul.mubr.bf16.gmra.mxu0 %v1325
  %v1370 = vpop.f32.mrf.mxu0
  %v1371 = vadd.f32 0.0, %v1370
  %v1372 = vpop.f32.mrf.mxu0
  %v1373 = vpop.f32.mrf.mxu0
  %v1374 = vadd.f32 0.0, %v1373
  %v1375 = vpop.f32.mrf.mxu0
  %1376 = vdwg.mxu0
  %v1377 = vpack.c.bf16 %v1366, %v1363
  %v1378 = vpack.c.bf16 %v1374, %v1371
  %s1379 = scalar_lea.vmem %s4, 112
  %v1380 = vld [vmem:[%s1379] sm:$0xf]
  %v1381 = vld [vmem:[%s1379 + $0x4] sm:$0xf]
  %v1382 = vld [vmem:[%s1379 + $0x8] sm:$0xf]
  %v1383 = vld [vmem:[%s1379 + $0xc] sm:$0xf]
  %v1388 = vunpack.c.l.b16 %v1380
  %v1389 = vunpack.c.l.b16 %v1381
  %v1390 = vunpack.c.l.b16 %v1382
  %v1391 = vunpack.c.l.b16 %v1383
  %v1392 = vpack.c.b16 %v1389, %v1388
  %v1393 = vpack.c.b16 %v1391, %v1390
  %v1397 = vsel %vm381, %v1377, 0
  %v1400 = vsel %vm381, %v1378, 0
  %1402 = vmatprep.subr.bf16.mxu0 0
  %1403 = vmatpush1.bf16.msra.mxu0 0
  %1404 = vmatprep.subr.bf16.mxu0 0
  %1405 = vmatpush1.bf16.msra.mxu0 0
  %1406 = vmatprep.subr.bf16.mxu0 0
  %1407 = vmatpush1.bf16.msra.mxu0 0
  %1408 = vmatprep.subr.bf16.mxu0 0
  %1409 = vmatpush1.bf16.msra.mxu0 0
  %1410 = vmatprep.subr.bf16.mxu0 0
  %1411 = vmatpush1.bf16.msra.mxu0 0
  %1412 = vmatprep.subr.bf16.mxu0 0
  %1413 = vmatpush1.bf16.msra.mxu0 0
  %1414 = vmatprep.subr.bf16.mxu0 0
  %1415 = vmatpush1.bf16.msra.mxu0 %v1393
  %1416 = vmatprep.subr.bf16.mxu0 0
  %1417 = vmatpush1.bf16.msra.mxu0 %v1392
  %1418 = vmatprep.subr.bf16.mxu0 0
  %1419 = vmatpush2.bf16.msra.mxu0 0
  %1420 = vmatprep.subr.bf16.mxu0 0
  %1421 = vmatpush2.bf16.msra.mxu0 0
  %1422 = vmatprep.subr.bf16.mxu0 0
  %1423 = vmatpush2.bf16.msra.mxu0 0
  %1424 = vmatprep.subr.bf16.mxu0 0
  %1425 = vmatpush2.bf16.msra.mxu0 0
  %1426 = vmatprep.subr.bf16.mxu0 0
  %1427 = vmatpush2.bf16.msra.mxu0 0
  %1428 = vmatprep.subr.bf16.mxu0 0
  %1429 = vmatpush2.bf16.msra.mxu0 0
  %1430 = vmatprep.subr.bf16.mxu0 0
  %1431 = vmatpush2.bf16.msra.mxu0 0
  %1432 = vmatprep.subr.bf16.mxu0 0
  %1433 = vmatpush2.bf16.msra.mxu0 0
  %1434 = vmatprep.mubr.bf16.mxu0 0
  %1435 = vmatmul.mubr.bf16.gmra.mxu0 %v1397
  %v1436 = vpop.f32.mrf.mxu0
  %v1437 = vadd.f32 0.0, %v1436
  %v1438 = vpop.f32.mrf.mxu0
  %v1439 = vpop.f32.mrf.mxu0
  %v1440 = vadd.f32 0.0, %v1439
  %v1441 = vpop.f32.mrf.mxu0
  %1442 = vmatprep.mubr.bf16.mxu0 0
  %1443 = vmatmul.mubr.bf16.gmra.mxu0 %v1400
  %v1444 = vpop.f32.mrf.mxu0
  %v1445 = vadd.f32 0.0, %v1444
  %v1446 = vpop.f32.mrf.mxu0
  %v1447 = vpop.f32.mrf.mxu0
  %v1448 = vadd.f32 0.0, %v1447
  %v1449 = vpop.f32.mrf.mxu0
  %1450 = vdwg.mxu0
  %v1451 = vadd.f32 %v1307, %v1437
  %v1452 = vadd.f32 %v1308, %v1440
  %v1453 = vadd.f32 %v1309, %v1445
  %v1454 = vadd.f32 %v1310, %v1448
  %s1455 = scalar_lea.vmem %s3, 128
  %v1456 = vld [vmem:[%s1455] sm:$0xf]
  %v1457 = vld [vmem:[%s1455 + $0x4] sm:$0xf]
  %v1458 = vld [vmem:[%s1455 + $0x8] sm:$0xf]
  %v1459 = vld [vmem:[%s1455 + $0xc] sm:$0xf]
  %v1464 = vunpack.c.l.b16 %v1456
  %v1465 = vunpack.c.l.b16 %v1457
  %v1466 = vunpack.c.l.b16 %v1458
  %v1467 = vunpack.c.l.b16 %v1459
  %v1468 = vpack.c.b16 %v1465, %v1464
  %v1469 = vpack.c.b16 %v1467, %v1466
  %1472 = vmatprep.subr.bf16.mxu0 0
  %1473 = vmatpush1.bf16.msra.mxu0 %v296
  %1474 = vmatprep.subr.bf16.mxu0 0
  %1475 = vmatpush1.bf16.msra.mxu0 %v295
  %1476 = vmatprep.subr.bf16.mxu0 0
  %1477 = vmatpush1.bf16.msra.mxu0 %v294
  %1478 = vmatprep.subr.bf16.mxu0 0
  %1479 = vmatpush1.bf16.msra.mxu0 %v293
  %1480 = vmatprep.subr.bf16.mxu0 0
  %1481 = vmatpush1.bf16.msra.mxu0 %v292
  %1482 = vmatprep.subr.bf16.mxu0 0
  %1483 = vmatpush1.bf16.msra.mxu0 %v291
  %1484 = vmatprep.subr.bf16.mxu0 0
  %1485 = vmatpush1.bf16.msra.mxu0 %v290
  %1486 = vmatprep.subr.bf16.mxu0 0
  %1487 = vmatpush1.bf16.msra.mxu0 %v289
  %1488 = vmatprep.subr.bf16.mxu0 0
  %1489 = vmatpush2.bf16.msra.mxu0 0
  %1490 = vmatprep.subr.bf16.mxu0 0
  %1491 = vmatpush2.bf16.msra.mxu0 0
  %1492 = vmatprep.subr.bf16.mxu0 0
  %1493 = vmatpush2.bf16.msra.mxu0 0
  %1494 = vmatprep.subr.bf16.mxu0 0
  %1495 = vmatpush2.bf16.msra.mxu0 0
  %1496 = vmatprep.subr.bf16.mxu0 0
  %1497 = vmatpush2.bf16.msra.mxu0 0
  %1498 = vmatprep.subr.bf16.mxu0 0
  %1499 = vmatpush2.bf16.msra.mxu0 0
  %1500 = vmatprep.subr.bf16.mxu0 0
  %1501 = vmatpush2.bf16.msra.mxu0 0
  %1502 = vmatprep.subr.bf16.mxu0 0
  %1503 = vmatpush2.bf16.msra.mxu0 0
  %1504 = vmatprep.mubr.bf16.mxu0 0
  %1505 = vmatmul.mubr.bf16.gmra.mxu0 %v1468
  %v1506 = vpop.f32.mrf.mxu0
  %v1507 = vadd.f32 0.0, %v1506
  %v1508 = vpop.f32.mrf.mxu0
  %v1509 = vpop.f32.mrf.mxu0
  %v1510 = vadd.f32 0.0, %v1509
  %v1511 = vpop.f32.mrf.mxu0
  %1512 = vmatprep.mubr.bf16.mxu0 0
  %1513 = vmatmul.mubr.bf16.gmra.mxu0 %v1469
  %v1514 = vpop.f32.mrf.mxu0
  %v1515 = vadd.f32 0.0, %v1514
  %v1516 = vpop.f32.mrf.mxu0
  %v1517 = vpop.f32.mrf.mxu0
  %v1518 = vadd.f32 0.0, %v1517
  %v1519 = vpop.f32.mrf.mxu0
  %1520 = vdwg.mxu0
  %v1521 = vpack.c.bf16 %v1510, %v1507
  %v1522 = vpack.c.bf16 %v1518, %v1515
  %s1523 = scalar_lea.vmem %s4, 128
  %v1524 = vld [vmem:[%s1523] sm:$0xf]
  %v1525 = vld [vmem:[%s1523 + $0x4] sm:$0xf]
  %v1526 = vld [vmem:[%s1523 + $0x8] sm:$0xf]
  %v1527 = vld [vmem:[%s1523 + $0xc] sm:$0xf]
  %v1532 = vunpack.c.l.b16 %v1524
  %v1533 = vunpack.c.l.b16 %v1525
  %v1534 = vunpack.c.l.b16 %v1526
  %v1535 = vunpack.c.l.b16 %v1527
  %v1536 = vpack.c.b16 %v1533, %v1532
  %v1537 = vpack.c.b16 %v1535, %v1534
  %v1541 = vsel %vm381, %v1521, 0
  %v1544 = vsel %vm381, %v1522, 0
  %1546 = vmatprep.subr.bf16.mxu0 0
  %1547 = vmatpush1.bf16.msra.mxu0 0
  %1548 = vmatprep.subr.bf16.mxu0 0
  %1549 = vmatpush1.bf16.msra.mxu0 0
  %1550 = vmatprep.subr.bf16.mxu0 0
  %1551 = vmatpush1.bf16.msra.mxu0 0
  %1552 = vmatprep.subr.bf16.mxu0 0
  %1553 = vmatpush1.bf16.msra.mxu0 0
  %1554 = vmatprep.subr.bf16.mxu0 0
  %1555 = vmatpush1.bf16.msra.mxu0 0
  %1556 = vmatprep.subr.bf16.mxu0 0
  %1557 = vmatpush1.bf16.msra.mxu0 0
  %1558 = vmatprep.subr.bf16.mxu0 0
  %1559 = vmatpush1.bf16.msra.mxu0 %v1537
  %1560 = vmatprep.subr.bf16.mxu0 0
  %1561 = vmatpush1.bf16.msra.mxu0 %v1536
  %1562 = vmatprep.subr.bf16.mxu0 0
  %1563 = vmatpush2.bf16.msra.mxu0 0
  %1564 = vmatprep.subr.bf16.mxu0 0
  %1565 = vmatpush2.bf16.msra.mxu0 0
  %1566 = vmatprep.subr.bf16.mxu0 0
  %1567 = vmatpush2.bf16.msra.mxu0 0
  %1568 = vmatprep.subr.bf16.mxu0 0
  %1569 = vmatpush2.bf16.msra.mxu0 0
  %1570 = vmatprep.subr.bf16.mxu0 0
  %1571 = vmatpush2.bf16.msra.mxu0 0
  %1572 = vmatprep.subr.bf16.mxu0 0
  %1573 = vmatpush2.bf16.msra.mxu0 0
  %1574 = vmatprep.subr.bf16.mxu0 0
  %1575 = vmatpush2.bf16.msra.mxu0 0
  %1576 = vmatprep.subr.bf16.mxu0 0
  %1577 = vmatpush2.bf16.msra.mxu0 0
  %1578 = vmatprep.mubr.bf16.mxu0 0
  %1579 = vmatmul.mubr.bf16.gmra.mxu0 %v1541
  %v1580 = vpop.f32.mrf.mxu0
  %v1581 = vadd.f32 0.0, %v1580
  %v1582 = vpop.f32.mrf.mxu0
  %v1583 = vpop.f32.mrf.mxu0
  %v1584 = vadd.f32 0.0, %v1583
  %v1585 = vpop.f32.mrf.mxu0
  %1586 = vmatprep.mubr.bf16.mxu0 0
  %1587 = vmatmul.mubr.bf16.gmra.mxu0 %v1544
  %v1588 = vpop.f32.mrf.mxu0
  %v1589 = vadd.f32 0.0, %v1588
  %v1590 = vpop.f32.mrf.mxu0
  %v1591 = vpop.f32.mrf.mxu0
  %v1592 = vadd.f32 0.0, %v1591
  %v1593 = vpop.f32.mrf.mxu0
  %1594 = vdwg.mxu0
  %v1595 = vadd.f32 %v1451, %v1581
  %v1596 = vadd.f32 %v1452, %v1584
  %v1597 = vadd.f32 %v1453, %v1589
  %v1598 = vadd.f32 %v1454, %v1592
  %s1599 = scalar_lea.vmem %s3, 144
  %v1600 = vld [vmem:[%s1599] sm:$0xf]
  %v1601 = vld [vmem:[%s1599 + $0x4] sm:$0xf]
  %v1602 = vld [vmem:[%s1599 + $0x8] sm:$0xf]
  %v1603 = vld [vmem:[%s1599 + $0xc] sm:$0xf]
  %v1608 = vunpack.c.l.b16 %v1600
  %v1609 = vunpack.c.l.b16 %v1601
  %v1610 = vunpack.c.l.b16 %v1602
  %v1611 = vunpack.c.l.b16 %v1603
  %v1612 = vpack.c.b16 %v1609, %v1608
  %v1613 = vpack.c.b16 %v1611, %v1610
  %1616 = vmatprep.subr.bf16.mxu0 0
  %1617 = vmatpush1.bf16.msra.mxu0 %v296
  %1618 = vmatprep.subr.bf16.mxu0 0
  %1619 = vmatpush1.bf16.msra.mxu0 %v295
  %1620 = vmatprep.subr.bf16.mxu0 0
  %1621 = vmatpush1.bf16.msra.mxu0 %v294
  %1622 = vmatprep.subr.bf16.mxu0 0
  %1623 = vmatpush1.bf16.msra.mxu0 %v293
  %1624 = vmatprep.subr.bf16.mxu0 0
  %1625 = vmatpush1.bf16.msra.mxu0 %v292
  %1626 = vmatprep.subr.bf16.mxu0 0
  %1627 = vmatpush1.bf16.msra.mxu0 %v291
  %1628 = vmatprep.subr.bf16.mxu0 0
  %1629 = vmatpush1.bf16.msra.mxu0 %v290
  %1630 = vmatprep.subr.bf16.mxu0 0
  %1631 = vmatpush1.bf16.msra.mxu0 %v289
  %1632 = vmatprep.subr.bf16.mxu0 0
  %1633 = vmatpush2.bf16.msra.mxu0 0
  %1634 = vmatprep.subr.bf16.mxu0 0
  %1635 = vmatpush2.bf16.msra.mxu0 0
  %1636 = vmatprep.subr.bf16.mxu0 0
  %1637 = vmatpush2.bf16.msra.mxu0 0
  %1638 = vmatprep.subr.bf16.mxu0 0
  %1639 = vmatpush2.bf16.msra.mxu0 0
  %1640 = vmatprep.subr.bf16.mxu0 0
  %1641 = vmatpush2.bf16.msra.mxu0 0
  %1642 = vmatprep.subr.bf16.mxu0 0
  %1643 = vmatpush2.bf16.msra.mxu0 0
  %1644 = vmatprep.subr.bf16.mxu0 0
  %1645 = vmatpush2.bf16.msra.mxu0 0
  %1646 = vmatprep.subr.bf16.mxu0 0
  %1647 = vmatpush2.bf16.msra.mxu0 0
  %1648 = vmatprep.mubr.bf16.mxu0 0
  %1649 = vmatmul.mubr.bf16.gmra.mxu0 %v1612
  %v1650 = vpop.f32.mrf.mxu0
  %v1651 = vadd.f32 0.0, %v1650
  %v1652 = vpop.f32.mrf.mxu0
  %v1653 = vpop.f32.mrf.mxu0
  %v1654 = vadd.f32 0.0, %v1653
  %v1655 = vpop.f32.mrf.mxu0
  %1656 = vmatprep.mubr.bf16.mxu0 0
  %1657 = vmatmul.mubr.bf16.gmra.mxu0 %v1613
  %v1658 = vpop.f32.mrf.mxu0
  %v1659 = vadd.f32 0.0, %v1658
  %v1660 = vpop.f32.mrf.mxu0
  %v1661 = vpop.f32.mrf.mxu0
  %v1662 = vadd.f32 0.0, %v1661
  %v1663 = vpop.f32.mrf.mxu0
  %1664 = vdwg.mxu0
  %v1665 = vpack.c.bf16 %v1654, %v1651
  %v1666 = vpack.c.bf16 %v1662, %v1659
  %s1667 = scalar_lea.vmem %s4, 144
  %v1668 = vld [vmem:[%s1667] sm:$0xf]
  %v1669 = vld [vmem:[%s1667 + $0x4] sm:$0xf]
  %v1670 = vld [vmem:[%s1667 + $0x8] sm:$0xf]
  %v1671 = vld [vmem:[%s1667 + $0xc] sm:$0xf]
  %v1676 = vunpack.c.l.b16 %v1668
  %v1677 = vunpack.c.l.b16 %v1669
  %v1678 = vunpack.c.l.b16 %v1670
  %v1679 = vunpack.c.l.b16 %v1671
  %v1680 = vpack.c.b16 %v1677, %v1676
  %v1681 = vpack.c.b16 %v1679, %v1678
  %v1685 = vsel %vm381, %v1665, 0
  %v1688 = vsel %vm381, %v1666, 0
  %1690 = vmatprep.subr.bf16.mxu0 0
  %1691 = vmatpush1.bf16.msra.mxu0 0
  %1692 = vmatprep.subr.bf16.mxu0 0
  %1693 = vmatpush1.bf16.msra.mxu0 0
  %1694 = vmatprep.subr.bf16.mxu0 0
  %1695 = vmatpush1.bf16.msra.mxu0 0
  %1696 = vmatprep.subr.bf16.mxu0 0
  %1697 = vmatpush1.bf16.msra.mxu0 0
  %1698 = vmatprep.subr.bf16.mxu0 0
  %1699 = vmatpush1.bf16.msra.mxu0 0
  %1700 = vmatprep.subr.bf16.mxu0 0
  %1701 = vmatpush1.bf16.msra.mxu0 0
  %1702 = vmatprep.subr.bf16.mxu0 0
  %1703 = vmatpush1.bf16.msra.mxu0 %v1681
  %1704 = vmatprep.subr.bf16.mxu0 0
  %1705 = vmatpush1.bf16.msra.mxu0 %v1680
  %1706 = vmatprep.subr.bf16.mxu0 0
  %1707 = vmatpush2.bf16.msra.mxu0 0
  %1708 = vmatprep.subr.bf16.mxu0 0
  %1709 = vmatpush2.bf16.msra.mxu0 0
  %1710 = vmatprep.subr.bf16.mxu0 0
  %1711 = vmatpush2.bf16.msra.mxu0 0
  %1712 = vmatprep.subr.bf16.mxu0 0
  %1713 = vmatpush2.bf16.msra.mxu0 0
  %1714 = vmatprep.subr.bf16.mxu0 0
  %1715 = vmatpush2.bf16.msra.mxu0 0
  %1716 = vmatprep.subr.bf16.mxu0 0
  %1717 = vmatpush2.bf16.msra.mxu0 0
  %1718 = vmatprep.subr.bf16.mxu0 0
  %1719 = vmatpush2.bf16.msra.mxu0 0
  %1720 = vmatprep.subr.bf16.mxu0 0
  %1721 = vmatpush2.bf16.msra.mxu0 0
  %1722 = vmatprep.mubr.bf16.mxu0 0
  %1723 = vmatmul.mubr.bf16.gmra.mxu0 %v1685
  %v1724 = vpop.f32.mrf.mxu0
  %v1725 = vadd.f32 0.0, %v1724
  %v1726 = vpop.f32.mrf.mxu0
  %v1727 = vpop.f32.mrf.mxu0
  %v1728 = vadd.f32 0.0, %v1727
  %v1729 = vpop.f32.mrf.mxu0
  %1730 = vmatprep.mubr.bf16.mxu0 0
  %1731 = vmatmul.mubr.bf16.gmra.mxu0 %v1688
  %v1732 = vpop.f32.mrf.mxu0
  %v1733 = vadd.f32 0.0, %v1732
  %v1734 = vpop.f32.mrf.mxu0
  %v1735 = vpop.f32.mrf.mxu0
  %v1736 = vadd.f32 0.0, %v1735
  %v1737 = vpop.f32.mrf.mxu0
  %1738 = vdwg.mxu0
  %v1739 = vadd.f32 %v1595, %v1725
  %v1740 = vadd.f32 %v1596, %v1728
  %v1741 = vadd.f32 %v1597, %v1733
  %v1742 = vadd.f32 %v1598, %v1736
  %s1743 = scalar_lea.vmem %s3, 160
  %v1744 = vld [vmem:[%s1743] sm:$0xf]
  %v1745 = vld [vmem:[%s1743 + $0x4] sm:$0xf]
  %v1746 = vld [vmem:[%s1743 + $0x8] sm:$0xf]
  %v1747 = vld [vmem:[%s1743 + $0xc] sm:$0xf]
  %v1752 = vunpack.c.l.b16 %v1744
  %v1753 = vunpack.c.l.b16 %v1745
  %v1754 = vunpack.c.l.b16 %v1746
  %v1755 = vunpack.c.l.b16 %v1747
  %v1756 = vpack.c.b16 %v1753, %v1752
  %v1757 = vpack.c.b16 %v1755, %v1754
  %1760 = vmatprep.subr.bf16.mxu0 0
  %1761 = vmatpush1.bf16.msra.mxu0 %v296
  %1762 = vmatprep.subr.bf16.mxu0 0
  %1763 = vmatpush1.bf16.msra.mxu0 %v295
  %1764 = vmatprep.subr.bf16.mxu0 0
  %1765 = vmatpush1.bf16.msra.mxu0 %v294
  %1766 = vmatprep.subr.bf16.mxu0 0
  %1767 = vmatpush1.bf16.msra.mxu0 %v293
  %1768 = vmatprep.subr.bf16.mxu0 0
  %1769 = vmatpush1.bf16.msra.mxu0 %v292
  %1770 = vmatprep.subr.bf16.mxu0 0
  %1771 = vmatpush1.bf16.msra.mxu0 %v291
  %1772 = vmatprep.subr.bf16.mxu0 0
  %1773 = vmatpush1.bf16.msra.mxu0 %v290
  %1774 = vmatprep.subr.bf16.mxu0 0
  %1775 = vmatpush1.bf16.msra.mxu0 %v289
  %1776 = vmatprep.subr.bf16.mxu0 0
  %1777 = vmatpush2.bf16.msra.mxu0 0
  %1778 = vmatprep.subr.bf16.mxu0 0
  %1779 = vmatpush2.bf16.msra.mxu0 0
  %1780 = vmatprep.subr.bf16.mxu0 0
  %1781 = vmatpush2.bf16.msra.mxu0 0
  %1782 = vmatprep.subr.bf16.mxu0 0
  %1783 = vmatpush2.bf16.msra.mxu0 0
  %1784 = vmatprep.subr.bf16.mxu0 0
  %1785 = vmatpush2.bf16.msra.mxu0 0
  %1786 = vmatprep.subr.bf16.mxu0 0
  %1787 = vmatpush2.bf16.msra.mxu0 0
  %1788 = vmatprep.subr.bf16.mxu0 0
  %1789 = vmatpush2.bf16.msra.mxu0 0
  %1790 = vmatprep.subr.bf16.mxu0 0
  %1791 = vmatpush2.bf16.msra.mxu0 0
  %1792 = vmatprep.mubr.bf16.mxu0 0
  %1793 = vmatmul.mubr.bf16.gmra.mxu0 %v1756
  %v1794 = vpop.f32.mrf.mxu0
  %v1795 = vadd.f32 0.0, %v1794
  %v1796 = vpop.f32.mrf.mxu0
  %v1797 = vpop.f32.mrf.mxu0
  %v1798 = vadd.f32 0.0, %v1797
  %v1799 = vpop.f32.mrf.mxu0
  %1800 = vmatprep.mubr.bf16.mxu0 0
  %1801 = vmatmul.mubr.bf16.gmra.mxu0 %v1757
  %v1802 = vpop.f32.mrf.mxu0
  %v1803 = vadd.f32 0.0, %v1802
  %v1804 = vpop.f32.mrf.mxu0
  %v1805 = vpop.f32.mrf.mxu0
  %v1806 = vadd.f32 0.0, %v1805
  %v1807 = vpop.f32.mrf.mxu0
  %1808 = vdwg.mxu0
  %v1809 = vpack.c.bf16 %v1798, %v1795
  %v1810 = vpack.c.bf16 %v1806, %v1803
  %s1811 = scalar_lea.vmem %s4, 160
  %v1812 = vld [vmem:[%s1811] sm:$0xf]
  %v1813 = vld [vmem:[%s1811 + $0x4] sm:$0xf]
  %v1814 = vld [vmem:[%s1811 + $0x8] sm:$0xf]
  %v1815 = vld [vmem:[%s1811 + $0xc] sm:$0xf]
  %v1820 = vunpack.c.l.b16 %v1812
  %v1821 = vunpack.c.l.b16 %v1813
  %v1822 = vunpack.c.l.b16 %v1814
  %v1823 = vunpack.c.l.b16 %v1815
  %v1824 = vpack.c.b16 %v1821, %v1820
  %v1825 = vpack.c.b16 %v1823, %v1822
  %v1829 = vsel %vm381, %v1809, 0
  %v1832 = vsel %vm381, %v1810, 0
  %1834 = vmatprep.subr.bf16.mxu0 0
  %1835 = vmatpush1.bf16.msra.mxu0 0
  %1836 = vmatprep.subr.bf16.mxu0 0
  %1837 = vmatpush1.bf16.msra.mxu0 0
  %1838 = vmatprep.subr.bf16.mxu0 0
  %1839 = vmatpush1.bf16.msra.mxu0 0
  %1840 = vmatprep.subr.bf16.mxu0 0
  %1841 = vmatpush1.bf16.msra.mxu0 0
  %1842 = vmatprep.subr.bf16.mxu0 0
  %1843 = vmatpush1.bf16.msra.mxu0 0
  %1844 = vmatprep.subr.bf16.mxu0 0
  %1845 = vmatpush1.bf16.msra.mxu0 0
  %1846 = vmatprep.subr.bf16.mxu0 0
  %1847 = vmatpush1.bf16.msra.mxu0 %v1825
  %1848 = vmatprep.subr.bf16.mxu0 0
  %1849 = vmatpush1.bf16.msra.mxu0 %v1824
  %1850 = vmatprep.subr.bf16.mxu0 0
  %1851 = vmatpush2.bf16.msra.mxu0 0
  %1852 = vmatprep.subr.bf16.mxu0 0
  %1853 = vmatpush2.bf16.msra.mxu0 0
  %1854 = vmatprep.subr.bf16.mxu0 0
  %1855 = vmatpush2.bf16.msra.mxu0 0
  %1856 = vmatprep.subr.bf16.mxu0 0
  %1857 = vmatpush2.bf16.msra.mxu0 0
  %1858 = vmatprep.subr.bf16.mxu0 0
  %1859 = vmatpush2.bf16.msra.mxu0 0
  %1860 = vmatprep.subr.bf16.mxu0 0
  %1861 = vmatpush2.bf16.msra.mxu0 0
  %1862 = vmatprep.subr.bf16.mxu0 0
  %1863 = vmatpush2.bf16.msra.mxu0 0
  %1864 = vmatprep.subr.bf16.mxu0 0
  %1865 = vmatpush2.bf16.msra.mxu0 0
  %1866 = vmatprep.mubr.bf16.mxu0 0
  %1867 = vmatmul.mubr.bf16.gmra.mxu0 %v1829
  %v1868 = vpop.f32.mrf.mxu0
  %v1869 = vadd.f32 0.0, %v1868
  %v1870 = vpop.f32.mrf.mxu0
  %v1871 = vpop.f32.mrf.mxu0
  %v1872 = vadd.f32 0.0, %v1871
  %v1873 = vpop.f32.mrf.mxu0
  %1874 = vmatprep.mubr.bf16.mxu0 0
  %1875 = vmatmul.mubr.bf16.gmra.mxu0 %v1832
  %v1876 = vpop.f32.mrf.mxu0
  %v1877 = vadd.f32 0.0, %v1876
  %v1878 = vpop.f32.mrf.mxu0
  %v1879 = vpop.f32.mrf.mxu0
  %v1880 = vadd.f32 0.0, %v1879
  %v1881 = vpop.f32.mrf.mxu0
  %1882 = vdwg.mxu0
  %v1883 = vadd.f32 %v1739, %v1869
  %v1884 = vadd.f32 %v1740, %v1872
  %v1885 = vadd.f32 %v1741, %v1877
  %v1886 = vadd.f32 %v1742, %v1880
  %s1887 = scalar_lea.vmem %s3, 176
  %v1888 = vld [vmem:[%s1887] sm:$0xf]
  %v1889 = vld [vmem:[%s1887 + $0x4] sm:$0xf]
  %v1890 = vld [vmem:[%s1887 + $0x8] sm:$0xf]
  %v1891 = vld [vmem:[%s1887 + $0xc] sm:$0xf]
  %v1896 = vunpack.c.l.b16 %v1888
  %v1897 = vunpack.c.l.b16 %v1889
  %v1898 = vunpack.c.l.b16 %v1890
  %v1899 = vunpack.c.l.b16 %v1891
  %v1900 = vpack.c.b16 %v1897, %v1896
  %v1901 = vpack.c.b16 %v1899, %v1898
  %1904 = vmatprep.subr.bf16.mxu0 0
  %1905 = vmatpush1.bf16.msra.mxu0 %v296
  %1906 = vmatprep.subr.bf16.mxu0 0
  %1907 = vmatpush1.bf16.msra.mxu0 %v295
  %1908 = vmatprep.subr.bf16.mxu0 0
  %1909 = vmatpush1.bf16.msra.mxu0 %v294
  %1910 = vmatprep.subr.bf16.mxu0 0
  %1911 = vmatpush1.bf16.msra.mxu0 %v293
  %1912 = vmatprep.subr.bf16.mxu0 0
  %1913 = vmatpush1.bf16.msra.mxu0 %v292
  %1914 = vmatprep.subr.bf16.mxu0 0
  %1915 = vmatpush1.bf16.msra.mxu0 %v291
  %1916 = vmatprep.subr.bf16.mxu0 0
  %1917 = vmatpush1.bf16.msra.mxu0 %v290
  %1918 = vmatprep.subr.bf16.mxu0 0
  %1919 = vmatpush1.bf16.msra.mxu0 %v289
  %1920 = vmatprep.subr.bf16.mxu0 0
  %1921 = vmatpush2.bf16.msra.mxu0 0
  %1922 = vmatprep.subr.bf16.mxu0 0
  %1923 = vmatpush2.bf16.msra.mxu0 0
  %1924 = vmatprep.subr.bf16.mxu0 0
  %1925 = vmatpush2.bf16.msra.mxu0 0
  %1926 = vmatprep.subr.bf16.mxu0 0
  %1927 = vmatpush2.bf16.msra.mxu0 0
  %1928 = vmatprep.subr.bf16.mxu0 0
  %1929 = vmatpush2.bf16.msra.mxu0 0
  %1930 = vmatprep.subr.bf16.mxu0 0
  %1931 = vmatpush2.bf16.msra.mxu0 0
  %1932 = vmatprep.subr.bf16.mxu0 0
  %1933 = vmatpush2.bf16.msra.mxu0 0
  %1934 = vmatprep.subr.bf16.mxu0 0
  %1935 = vmatpush2.bf16.msra.mxu0 0
  %1936 = vmatprep.mubr.bf16.mxu0 0
  %1937 = vmatmul.mubr.bf16.gmra.mxu0 %v1900
  %v1938 = vpop.f32.mrf.mxu0
  %v1939 = vadd.f32 0.0, %v1938
  %v1940 = vpop.f32.mrf.mxu0
  %v1941 = vpop.f32.mrf.mxu0
  %v1942 = vadd.f32 0.0, %v1941
  %v1943 = vpop.f32.mrf.mxu0
  %1944 = vmatprep.mubr.bf16.mxu0 0
  %1945 = vmatmul.mubr.bf16.gmra.mxu0 %v1901
  %v1946 = vpop.f32.mrf.mxu0
  %v1947 = vadd.f32 0.0, %v1946
  %v1948 = vpop.f32.mrf.mxu0
  %v1949 = vpop.f32.mrf.mxu0
  %v1950 = vadd.f32 0.0, %v1949
  %v1951 = vpop.f32.mrf.mxu0
  %1952 = vdwg.mxu0
  %v1953 = vpack.c.bf16 %v1942, %v1939
  %v1954 = vpack.c.bf16 %v1950, %v1947
  %s1955 = scalar_lea.vmem %s4, 176
  %v1956 = vld [vmem:[%s1955] sm:$0xf]
  %v1957 = vld [vmem:[%s1955 + $0x4] sm:$0xf]
  %v1958 = vld [vmem:[%s1955 + $0x8] sm:$0xf]
  %v1959 = vld [vmem:[%s1955 + $0xc] sm:$0xf]
  %v1964 = vunpack.c.l.b16 %v1956
  %v1965 = vunpack.c.l.b16 %v1957
  %v1966 = vunpack.c.l.b16 %v1958
  %v1967 = vunpack.c.l.b16 %v1959
  %v1968 = vpack.c.b16 %v1965, %v1964
  %v1969 = vpack.c.b16 %v1967, %v1966
  %v1973 = vsel %vm381, %v1953, 0
  %v1976 = vsel %vm381, %v1954, 0
  %1978 = vmatprep.subr.bf16.mxu0 0
  %1979 = vmatpush1.bf16.msra.mxu0 0
  %1980 = vmatprep.subr.bf16.mxu0 0
  %1981 = vmatpush1.bf16.msra.mxu0 0
  %1982 = vmatprep.subr.bf16.mxu0 0
  %1983 = vmatpush1.bf16.msra.mxu0 0
  %1984 = vmatprep.subr.bf16.mxu0 0
  %1985 = vmatpush1.bf16.msra.mxu0 0
  %1986 = vmatprep.subr.bf16.mxu0 0
  %1987 = vmatpush1.bf16.msra.mxu0 0
  %1988 = vmatprep.subr.bf16.mxu0 0
  %1989 = vmatpush1.bf16.msra.mxu0 0
  %1990 = vmatprep.subr.bf16.mxu0 0
  %1991 = vmatpush1.bf16.msra.mxu0 %v1969
  %1992 = vmatprep.subr.bf16.mxu0 0
  %1993 = vmatpush1.bf16.msra.mxu0 %v1968
  %1994 = vmatprep.subr.bf16.mxu0 0
  %1995 = vmatpush2.bf16.msra.mxu0 0
  %1996 = vmatprep.subr.bf16.mxu0 0
  %1997 = vmatpush2.bf16.msra.mxu0 0
  %1998 = vmatprep.subr.bf16.mxu0 0
  %1999 = vmatpush2.bf16.msra.mxu0 0
  %2000 = vmatprep.subr.bf16.mxu0 0
  %2001 = vmatpush2.bf16.msra.mxu0 0
  %2002 = vmatprep.subr.bf16.mxu0 0
  %2003 = vmatpush2.bf16.msra.mxu0 0
  %2004 = vmatprep.subr.bf16.mxu0 0
  %2005 = vmatpush2.bf16.msra.mxu0 0
  %2006 = vmatprep.subr.bf16.mxu0 0
  %2007 = vmatpush2.bf16.msra.mxu0 0
  %2008 = vmatprep.subr.bf16.mxu0 0
  %2009 = vmatpush2.bf16.msra.mxu0 0
  %2010 = vmatprep.mubr.bf16.mxu0 0
  %2011 = vmatmul.mubr.bf16.gmra.mxu0 %v1973
  %v2012 = vpop.f32.mrf.mxu0
  %v2013 = vadd.f32 0.0, %v2012
  %v2014 = vpop.f32.mrf.mxu0
  %v2015 = vpop.f32.mrf.mxu0
  %v2016 = vadd.f32 0.0, %v2015
  %v2017 = vpop.f32.mrf.mxu0
  %2018 = vmatprep.mubr.bf16.mxu0 0
  %2019 = vmatmul.mubr.bf16.gmra.mxu0 %v1976
  %v2020 = vpop.f32.mrf.mxu0
  %v2021 = vadd.f32 0.0, %v2020
  %v2022 = vpop.f32.mrf.mxu0
  %v2023 = vpop.f32.mrf.mxu0
  %v2024 = vadd.f32 0.0, %v2023
  %v2025 = vpop.f32.mrf.mxu0
  %2026 = vdwg.mxu0
  %v2027 = vadd.f32 %v1883, %v2013
  %v2028 = vadd.f32 %v1884, %v2016
  %v2029 = vadd.f32 %v1885, %v2021
  %v2030 = vadd.f32 %v1886, %v2024
  %s2031 = scalar_lea.vmem %s3, 192
  %v2032 = vld [vmem:[%s2031] sm:$0xf]
  %v2033 = vld [vmem:[%s2031 + $0x4] sm:$0xf]
  %v2034 = vld [vmem:[%s2031 + $0x8] sm:$0xf]
  %v2035 = vld [vmem:[%s2031 + $0xc] sm:$0xf]
  %v2040 = vunpack.c.l.b16 %v2032
  %v2041 = vunpack.c.l.b16 %v2033
  %v2042 = vunpack.c.l.b16 %v2034
  %v2043 = vunpack.c.l.b16 %v2035
  %v2044 = vpack.c.b16 %v2041, %v2040
  %v2045 = vpack.c.b16 %v2043, %v2042
  %2048 = vmatprep.subr.bf16.mxu0 0
  %2049 = vmatpush1.bf16.msra.mxu0 %v296
  %2050 = vmatprep.subr.bf16.mxu0 0
  %2051 = vmatpush1.bf16.msra.mxu0 %v295
  %2052 = vmatprep.subr.bf16.mxu0 0
  %2053 = vmatpush1.bf16.msra.mxu0 %v294
  %2054 = vmatprep.subr.bf16.mxu0 0
  %2055 = vmatpush1.bf16.msra.mxu0 %v293
  %2056 = vmatprep.subr.bf16.mxu0 0
  %2057 = vmatpush1.bf16.msra.mxu0 %v292
  %2058 = vmatprep.subr.bf16.mxu0 0
  %2059 = vmatpush1.bf16.msra.mxu0 %v291
  %2060 = vmatprep.subr.bf16.mxu0 0
  %2061 = vmatpush1.bf16.msra.mxu0 %v290
  %2062 = vmatprep.subr.bf16.mxu0 0
  %2063 = vmatpush1.bf16.msra.mxu0 %v289
  %2064 = vmatprep.subr.bf16.mxu0 0
  %2065 = vmatpush2.bf16.msra.mxu0 0
  %2066 = vmatprep.subr.bf16.mxu0 0
  %2067 = vmatpush2.bf16.msra.mxu0 0
  %2068 = vmatprep.subr.bf16.mxu0 0
  %2069 = vmatpush2.bf16.msra.mxu0 0
  %2070 = vmatprep.subr.bf16.mxu0 0
  %2071 = vmatpush2.bf16.msra.mxu0 0
  %2072 = vmatprep.subr.bf16.mxu0 0
  %2073 = vmatpush2.bf16.msra.mxu0 0
  %2074 = vmatprep.subr.bf16.mxu0 0
  %2075 = vmatpush2.bf16.msra.mxu0 0
  %2076 = vmatprep.subr.bf16.mxu0 0
  %2077 = vmatpush2.bf16.msra.mxu0 0
  %2078 = vmatprep.subr.bf16.mxu0 0
  %2079 = vmatpush2.bf16.msra.mxu0 0
  %2080 = vmatprep.mubr.bf16.mxu0 0
  %2081 = vmatmul.mubr.bf16.gmra.mxu0 %v2044
  %v2082 = vpop.f32.mrf.mxu0
  %v2083 = vadd.f32 0.0, %v2082
  %v2084 = vpop.f32.mrf.mxu0
  %v2085 = vpop.f32.mrf.mxu0
  %v2086 = vadd.f32 0.0, %v2085
  %v2087 = vpop.f32.mrf.mxu0
  %2088 = vmatprep.mubr.bf16.mxu0 0
  %2089 = vmatmul.mubr.bf16.gmra.mxu0 %v2045
  %v2090 = vpop.f32.mrf.mxu0
  %v2091 = vadd.f32 0.0, %v2090
  %v2092 = vpop.f32.mrf.mxu0
  %v2093 = vpop.f32.mrf.mxu0
  %v2094 = vadd.f32 0.0, %v2093
  %v2095 = vpop.f32.mrf.mxu0
  %2096 = vdwg.mxu0
  %v2097 = vpack.c.bf16 %v2086, %v2083
  %v2098 = vpack.c.bf16 %v2094, %v2091
  %s2099 = scalar_lea.vmem %s4, 192
  %v2100 = vld [vmem:[%s2099] sm:$0xf]
  %v2101 = vld [vmem:[%s2099 + $0x4] sm:$0xf]
  %v2102 = vld [vmem:[%s2099 + $0x8] sm:$0xf]
  %v2103 = vld [vmem:[%s2099 + $0xc] sm:$0xf]
  %v2108 = vunpack.c.l.b16 %v2100
  %v2109 = vunpack.c.l.b16 %v2101
  %v2110 = vunpack.c.l.b16 %v2102
  %v2111 = vunpack.c.l.b16 %v2103
  %v2112 = vpack.c.b16 %v2109, %v2108
  %v2113 = vpack.c.b16 %v2111, %v2110
  %v2117 = vsel %vm381, %v2097, 0
  %v2120 = vsel %vm381, %v2098, 0
  %2122 = vmatprep.subr.bf16.mxu0 0
  %2123 = vmatpush1.bf16.msra.mxu0 0
  %2124 = vmatprep.subr.bf16.mxu0 0
  %2125 = vmatpush1.bf16.msra.mxu0 0
  %2126 = vmatprep.subr.bf16.mxu0 0
  %2127 = vmatpush1.bf16.msra.mxu0 0
  %2128 = vmatprep.subr.bf16.mxu0 0
  %2129 = vmatpush1.bf16.msra.mxu0 0
  %2130 = vmatprep.subr.bf16.mxu0 0
  %2131 = vmatpush1.bf16.msra.mxu0 0
  %2132 = vmatprep.subr.bf16.mxu0 0
  %2133 = vmatpush1.bf16.msra.mxu0 0
  %2134 = vmatprep.subr.bf16.mxu0 0
  %2135 = vmatpush1.bf16.msra.mxu0 %v2113
  %2136 = vmatprep.subr.bf16.mxu0 0
  %2137 = vmatpush1.bf16.msra.mxu0 %v2112
  %2138 = vmatprep.subr.bf16.mxu0 0
  %2139 = vmatpush2.bf16.msra.mxu0 0
  %2140 = vmatprep.subr.bf16.mxu0 0
  %2141 = vmatpush2.bf16.msra.mxu0 0
  %2142 = vmatprep.subr.bf16.mxu0 0
  %2143 = vmatpush2.bf16.msra.mxu0 0
  %2144 = vmatprep.subr.bf16.mxu0 0
  %2145 = vmatpush2.bf16.msra.mxu0 0
  %2146 = vmatprep.subr.bf16.mxu0 0
  %2147 = vmatpush2.bf16.msra.mxu0 0
  %2148 = vmatprep.subr.bf16.mxu0 0
  %2149 = vmatpush2.bf16.msra.mxu0 0
  %2150 = vmatprep.subr.bf16.mxu0 0
  %2151 = vmatpush2.bf16.msra.mxu0 0
  %2152 = vmatprep.subr.bf16.mxu0 0
  %2153 = vmatpush2.bf16.msra.mxu0 0
  %2154 = vmatprep.mubr.bf16.mxu0 0
  %2155 = vmatmul.mubr.bf16.gmra.mxu0 %v2117
  %v2156 = vpop.f32.mrf.mxu0
  %v2157 = vadd.f32 0.0, %v2156
  %v2158 = vpop.f32.mrf.mxu0
  %v2159 = vpop.f32.mrf.mxu0
  %v2160 = vadd.f32 0.0, %v2159
  %v2161 = vpop.f32.mrf.mxu0
  %2162 = vmatprep.mubr.bf16.mxu0 0
  %2163 = vmatmul.mubr.bf16.gmra.mxu0 %v2120
  %v2164 = vpop.f32.mrf.mxu0
  %v2165 = vadd.f32 0.0, %v2164
  %v2166 = vpop.f32.mrf.mxu0
  %v2167 = vpop.f32.mrf.mxu0
  %v2168 = vadd.f32 0.0, %v2167
  %v2169 = vpop.f32.mrf.mxu0
  %2170 = vdwg.mxu0
  %v2171 = vadd.f32 %v2027, %v2157
  %v2172 = vadd.f32 %v2028, %v2160
  %v2173 = vadd.f32 %v2029, %v2165
  %v2174 = vadd.f32 %v2030, %v2168
  %s2175 = scalar_lea.vmem %s3, 208
  %v2176 = vld [vmem:[%s2175] sm:$0xf]
  %v2177 = vld [vmem:[%s2175 + $0x4] sm:$0xf]
  %v2178 = vld [vmem:[%s2175 + $0x8] sm:$0xf]
  %v2179 = vld [vmem:[%s2175 + $0xc] sm:$0xf]
  %v2184 = vunpack.c.l.b16 %v2176
  %v2185 = vunpack.c.l.b16 %v2177
  %v2186 = vunpack.c.l.b16 %v2178
  %v2187 = vunpack.c.l.b16 %v2179
  %v2188 = vpack.c.b16 %v2185, %v2184
  %v2189 = vpack.c.b16 %v2187, %v2186
  %2192 = vmatprep.subr.bf16.mxu0 0
  %2193 = vmatpush1.bf16.msra.mxu0 %v296
  %2194 = vmatprep.subr.bf16.mxu0 0
  %2195 = vmatpush1.bf16.msra.mxu0 %v295
  %2196 = vmatprep.subr.bf16.mxu0 0
  %2197 = vmatpush1.bf16.msra.mxu0 %v294
  %2198 = vmatprep.subr.bf16.mxu0 0
  %2199 = vmatpush1.bf16.msra.mxu0 %v293
  %2200 = vmatprep.subr.bf16.mxu0 0
  %2201 = vmatpush1.bf16.msra.mxu0 %v292
  %2202 = vmatprep.subr.bf16.mxu0 0
  %2203 = vmatpush1.bf16.msra.mxu0 %v291
  %2204 = vmatprep.subr.bf16.mxu0 0
  %2205 = vmatpush1.bf16.msra.mxu0 %v290
  %2206 = vmatprep.subr.bf16.mxu0 0
  %2207 = vmatpush1.bf16.msra.mxu0 %v289
  %2208 = vmatprep.subr.bf16.mxu0 0
  %2209 = vmatpush2.bf16.msra.mxu0 0
  %2210 = vmatprep.subr.bf16.mxu0 0
  %2211 = vmatpush2.bf16.msra.mxu0 0
  %2212 = vmatprep.subr.bf16.mxu0 0
  %2213 = vmatpush2.bf16.msra.mxu0 0
  %2214 = vmatprep.subr.bf16.mxu0 0
  %2215 = vmatpush2.bf16.msra.mxu0 0
  %2216 = vmatprep.subr.bf16.mxu0 0
  %2217 = vmatpush2.bf16.msra.mxu0 0
  %2218 = vmatprep.subr.bf16.mxu0 0
  %2219 = vmatpush2.bf16.msra.mxu0 0
  %2220 = vmatprep.subr.bf16.mxu0 0
  %2221 = vmatpush2.bf16.msra.mxu0 0
  %2222 = vmatprep.subr.bf16.mxu0 0
  %2223 = vmatpush2.bf16.msra.mxu0 0
  %2224 = vmatprep.mubr.bf16.mxu0 0
  %2225 = vmatmul.mubr.bf16.gmra.mxu0 %v2188
  %v2226 = vpop.f32.mrf.mxu0
  %v2227 = vadd.f32 0.0, %v2226
  %v2228 = vpop.f32.mrf.mxu0
  %v2229 = vpop.f32.mrf.mxu0
  %v2230 = vadd.f32 0.0, %v2229
  %v2231 = vpop.f32.mrf.mxu0
  %2232 = vmatprep.mubr.bf16.mxu0 0
  %2233 = vmatmul.mubr.bf16.gmra.mxu0 %v2189
  %v2234 = vpop.f32.mrf.mxu0
  %v2235 = vadd.f32 0.0, %v2234
  %v2236 = vpop.f32.mrf.mxu0
  %v2237 = vpop.f32.mrf.mxu0
  %v2238 = vadd.f32 0.0, %v2237
  %v2239 = vpop.f32.mrf.mxu0
  %2240 = vdwg.mxu0
  %v2241 = vpack.c.bf16 %v2230, %v2227
  %v2242 = vpack.c.bf16 %v2238, %v2235
  %s2243 = scalar_lea.vmem %s4, 208
  %v2244 = vld [vmem:[%s2243] sm:$0xf]
  %v2245 = vld [vmem:[%s2243 + $0x4] sm:$0xf]
  %v2246 = vld [vmem:[%s2243 + $0x8] sm:$0xf]
  %v2247 = vld [vmem:[%s2243 + $0xc] sm:$0xf]
  %v2252 = vunpack.c.l.b16 %v2244
  %v2253 = vunpack.c.l.b16 %v2245
  %v2254 = vunpack.c.l.b16 %v2246
  %v2255 = vunpack.c.l.b16 %v2247
  %v2256 = vpack.c.b16 %v2253, %v2252
  %v2257 = vpack.c.b16 %v2255, %v2254
  %v2261 = vsel %vm381, %v2241, 0
  %v2264 = vsel %vm381, %v2242, 0
  %2266 = vmatprep.subr.bf16.mxu0 0
  %2267 = vmatpush1.bf16.msra.mxu0 0
  %2268 = vmatprep.subr.bf16.mxu0 0
  %2269 = vmatpush1.bf16.msra.mxu0 0
  %2270 = vmatprep.subr.bf16.mxu0 0
  %2271 = vmatpush1.bf16.msra.mxu0 0
  %2272 = vmatprep.subr.bf16.mxu0 0
  %2273 = vmatpush1.bf16.msra.mxu0 0
  %2274 = vmatprep.subr.bf16.mxu0 0
  %2275 = vmatpush1.bf16.msra.mxu0 0
  %2276 = vmatprep.subr.bf16.mxu0 0
  %2277 = vmatpush1.bf16.msra.mxu0 0
  %2278 = vmatprep.subr.bf16.mxu0 0
  %2279 = vmatpush1.bf16.msra.mxu0 %v2257
  %2280 = vmatprep.subr.bf16.mxu0 0
  %2281 = vmatpush1.bf16.msra.mxu0 %v2256
  %2282 = vmatprep.subr.bf16.mxu0 0
  %2283 = vmatpush2.bf16.msra.mxu0 0
  %2284 = vmatprep.subr.bf16.mxu0 0
  %2285 = vmatpush2.bf16.msra.mxu0 0
  %2286 = vmatprep.subr.bf16.mxu0 0
  %2287 = vmatpush2.bf16.msra.mxu0 0
  %2288 = vmatprep.subr.bf16.mxu0 0
  %2289 = vmatpush2.bf16.msra.mxu0 0
  %2290 = vmatprep.subr.bf16.mxu0 0
  %2291 = vmatpush2.bf16.msra.mxu0 0
  %2292 = vmatprep.subr.bf16.mxu0 0
  %2293 = vmatpush2.bf16.msra.mxu0 0
  %2294 = vmatprep.subr.bf16.mxu0 0
  %2295 = vmatpush2.bf16.msra.mxu0 0
  %2296 = vmatprep.subr.bf16.mxu0 0
  %2297 = vmatpush2.bf16.msra.mxu0 0
  %2298 = vmatprep.mubr.bf16.mxu0 0
  %2299 = vmatmul.mubr.bf16.gmra.mxu0 %v2261
  %v2300 = vpop.f32.mrf.mxu0
  %v2301 = vadd.f32 0.0, %v2300
  %v2302 = vpop.f32.mrf.mxu0
  %v2303 = vpop.f32.mrf.mxu0
  %v2304 = vadd.f32 0.0, %v2303
  %v2305 = vpop.f32.mrf.mxu0
  %2306 = vmatprep.mubr.bf16.mxu0 0
  %2307 = vmatmul.mubr.bf16.gmra.mxu0 %v2264
  %v2308 = vpop.f32.mrf.mxu0
  %v2309 = vadd.f32 0.0, %v2308
  %v2310 = vpop.f32.mrf.mxu0
  %v2311 = vpop.f32.mrf.mxu0
  %v2312 = vadd.f32 0.0, %v2311
  %v2313 = vpop.f32.mrf.mxu0
  %2314 = vdwg.mxu0
  %v2315 = vadd.f32 %v2171, %v2301
  %v2316 = vadd.f32 %v2172, %v2304
  %v2317 = vadd.f32 %v2173, %v2309
  %v2318 = vadd.f32 %v2174, %v2312
  %s2319 = scalar_lea.vmem %s3, 224
  %v2320 = vld [vmem:[%s2319] sm:$0xf]
  %v2321 = vld [vmem:[%s2319 + $0x4] sm:$0xf]
  %v2322 = vld [vmem:[%s2319 + $0x8] sm:$0xf]
  %v2323 = vld [vmem:[%s2319 + $0xc] sm:$0xf]
  %v2328 = vunpack.c.l.b16 %v2320
  %v2329 = vunpack.c.l.b16 %v2321
  %v2330 = vunpack.c.l.b16 %v2322
  %v2331 = vunpack.c.l.b16 %v2323
  %v2332 = vpack.c.b16 %v2329, %v2328
  %v2333 = vpack.c.b16 %v2331, %v2330
  %2336 = vmatprep.subr.bf16.mxu0 0
  %2337 = vmatpush1.bf16.msra.mxu0 %v296
  %2338 = vmatprep.subr.bf16.mxu0 0
  %2339 = vmatpush1.bf16.msra.mxu0 %v295
  %2340 = vmatprep.subr.bf16.mxu0 0
  %2341 = vmatpush1.bf16.msra.mxu0 %v294
  %2342 = vmatprep.subr.bf16.mxu0 0
  %2343 = vmatpush1.bf16.msra.mxu0 %v293
  %2344 = vmatprep.subr.bf16.mxu0 0
  %2345 = vmatpush1.bf16.msra.mxu0 %v292
  %2346 = vmatprep.subr.bf16.mxu0 0
  %2347 = vmatpush1.bf16.msra.mxu0 %v291
  %2348 = vmatprep.subr.bf16.mxu0 0
  %2349 = vmatpush1.bf16.msra.mxu0 %v290
  %2350 = vmatprep.subr.bf16.mxu0 0
  %2351 = vmatpush1.bf16.msra.mxu0 %v289
  %2352 = vmatprep.subr.bf16.mxu0 0
  %2353 = vmatpush2.bf16.msra.mxu0 0
  %2354 = vmatprep.subr.bf16.mxu0 0
  %2355 = vmatpush2.bf16.msra.mxu0 0
  %2356 = vmatprep.subr.bf16.mxu0 0
  %2357 = vmatpush2.bf16.msra.mxu0 0
  %2358 = vmatprep.subr.bf16.mxu0 0
  %2359 = vmatpush2.bf16.msra.mxu0 0
  %2360 = vmatprep.subr.bf16.mxu0 0
  %2361 = vmatpush2.bf16.msra.mxu0 0
  %2362 = vmatprep.subr.bf16.mxu0 0
  %2363 = vmatpush2.bf16.msra.mxu0 0
  %2364 = vmatprep.subr.bf16.mxu0 0
  %2365 = vmatpush2.bf16.msra.mxu0 0
  %2366 = vmatprep.subr.bf16.mxu0 0
  %2367 = vmatpush2.bf16.msra.mxu0 0
  %2368 = vmatprep.mubr.bf16.mxu0 0
  %2369 = vmatmul.mubr.bf16.gmra.mxu0 %v2332
  %v2370 = vpop.f32.mrf.mxu0
  %v2371 = vadd.f32 0.0, %v2370
  %v2372 = vpop.f32.mrf.mxu0
  %v2373 = vpop.f32.mrf.mxu0
  %v2374 = vadd.f32 0.0, %v2373
  %v2375 = vpop.f32.mrf.mxu0
  %2376 = vmatprep.mubr.bf16.mxu0 0
  %2377 = vmatmul.mubr.bf16.gmra.mxu0 %v2333
  %v2378 = vpop.f32.mrf.mxu0
  %v2379 = vadd.f32 0.0, %v2378
  %v2380 = vpop.f32.mrf.mxu0
  %v2381 = vpop.f32.mrf.mxu0
  %v2382 = vadd.f32 0.0, %v2381
  %v2383 = vpop.f32.mrf.mxu0
  %2384 = vdwg.mxu0
  %v2385 = vpack.c.bf16 %v2374, %v2371
  %v2386 = vpack.c.bf16 %v2382, %v2379
  %s2387 = scalar_lea.vmem %s4, 224
  %v2388 = vld [vmem:[%s2387] sm:$0xf]
  %v2389 = vld [vmem:[%s2387 + $0x4] sm:$0xf]
  %v2390 = vld [vmem:[%s2387 + $0x8] sm:$0xf]
  %v2391 = vld [vmem:[%s2387 + $0xc] sm:$0xf]
  %v2396 = vunpack.c.l.b16 %v2388
  %v2397 = vunpack.c.l.b16 %v2389
  %v2398 = vunpack.c.l.b16 %v2390
  %v2399 = vunpack.c.l.b16 %v2391
  %v2400 = vpack.c.b16 %v2397, %v2396
  %v2401 = vpack.c.b16 %v2399, %v2398
  %v2405 = vsel %vm381, %v2385, 0
  %v2408 = vsel %vm381, %v2386, 0
  %2410 = vmatprep.subr.bf16.mxu0 0
  %2411 = vmatpush1.bf16.msra.mxu0 0
  %2412 = vmatprep.subr.bf16.mxu0 0
  %2413 = vmatpush1.bf16.msra.mxu0 0
  %2414 = vmatprep.subr.bf16.mxu0 0
  %2415 = vmatpush1.bf16.msra.mxu0 0
  %2416 = vmatprep.subr.bf16.mxu0 0
  %2417 = vmatpush1.bf16.msra.mxu0 0
  %2418 = vmatprep.subr.bf16.mxu0 0
  %2419 = vmatpush1.bf16.msra.mxu0 0
  %2420 = vmatprep.subr.bf16.mxu0 0
  %2421 = vmatpush1.bf16.msra.mxu0 0
  %2422 = vmatprep.subr.bf16.mxu0 0
  %2423 = vmatpush1.bf16.msra.mxu0 %v2401
  %2424 = vmatprep.subr.bf16.mxu0 0
  %2425 = vmatpush1.bf16.msra.mxu0 %v2400
  %2426 = vmatprep.subr.bf16.mxu0 0
  %2427 = vmatpush2.bf16.msra.mxu0 0
  %2428 = vmatprep.subr.bf16.mxu0 0
  %2429 = vmatpush2.bf16.msra.mxu0 0
  %2430 = vmatprep.subr.bf16.mxu0 0
  %2431 = vmatpush2.bf16.msra.mxu0 0
  %2432 = vmatprep.subr.bf16.mxu0 0
  %2433 = vmatpush2.bf16.msra.mxu0 0
  %2434 = vmatprep.subr.bf16.mxu0 0
  %2435 = vmatpush2.bf16.msra.mxu0 0
  %2436 = vmatprep.subr.bf16.mxu0 0
  %2437 = vmatpush2.bf16.msra.mxu0 0
  %2438 = vmatprep.subr.bf16.mxu0 0
  %2439 = vmatpush2.bf16.msra.mxu0 0
  %2440 = vmatprep.subr.bf16.mxu0 0
  %2441 = vmatpush2.bf16.msra.mxu0 0
  %2442 = vmatprep.mubr.bf16.mxu0 0
  %2443 = vmatmul.mubr.bf16.gmra.mxu0 %v2405
  %v2444 = vpop.f32.mrf.mxu0
  %v2445 = vadd.f32 0.0, %v2444
  %v2446 = vpop.f32.mrf.mxu0
  %v2447 = vpop.f32.mrf.mxu0
  %v2448 = vadd.f32 0.0, %v2447
  %v2449 = vpop.f32.mrf.mxu0
  %2450 = vmatprep.mubr.bf16.mxu0 0
  %2451 = vmatmul.mubr.bf16.gmra.mxu0 %v2408
  %v2452 = vpop.f32.mrf.mxu0
  %v2453 = vadd.f32 0.0, %v2452
  %v2454 = vpop.f32.mrf.mxu0
  %v2455 = vpop.f32.mrf.mxu0
  %v2456 = vadd.f32 0.0, %v2455
  %v2457 = vpop.f32.mrf.mxu0
  %2458 = vdwg.mxu0
  %v2459 = vadd.f32 %v2315, %v2445
  %v2460 = vadd.f32 %v2316, %v2448
  %v2461 = vadd.f32 %v2317, %v2453
  %v2462 = vadd.f32 %v2318, %v2456
  %s2463 = scalar_lea.vmem %s3, 240
  %v2464 = vld [vmem:[%s2463] sm:$0xf]
  %v2465 = vld [vmem:[%s2463 + $0x4] sm:$0xf]
  %v2466 = vld [vmem:[%s2463 + $0x8] sm:$0xf]
  %v2467 = vld [vmem:[%s2463 + $0xc] sm:$0xf]
  %v2472 = vunpack.c.l.b16 %v2464
  %v2473 = vunpack.c.l.b16 %v2465
  %v2474 = vunpack.c.l.b16 %v2466
  %v2475 = vunpack.c.l.b16 %v2467
  %v2476 = vpack.c.b16 %v2473, %v2472
  %v2477 = vpack.c.b16 %v2475, %v2474
  %2480 = vmatprep.subr.bf16.mxu0 0
  %2481 = vmatpush1.bf16.msra.mxu0 %v296
  %2482 = vmatprep.subr.bf16.mxu0 0
  %2483 = vmatpush1.bf16.msra.mxu0 %v295
  %2484 = vmatprep.subr.bf16.mxu0 0
  %2485 = vmatpush1.bf16.msra.mxu0 %v294
  %2486 = vmatprep.subr.bf16.mxu0 0
  %2487 = vmatpush1.bf16.msra.mxu0 %v293
  %2488 = vmatprep.subr.bf16.mxu0 0
  %2489 = vmatpush1.bf16.msra.mxu0 %v292
  %2490 = vmatprep.subr.bf16.mxu0 0
  %2491 = vmatpush1.bf16.msra.mxu0 %v291
  %2492 = vmatprep.subr.bf16.mxu0 0
  %2493 = vmatpush1.bf16.msra.mxu0 %v290
  %2494 = vmatprep.subr.bf16.mxu0 0
  %2495 = vmatpush1.bf16.msra.mxu0 %v289
  %2496 = vmatprep.subr.bf16.mxu0 0
  %2497 = vmatpush2.bf16.msra.mxu0 0
  %2498 = vmatprep.subr.bf16.mxu0 0
  %2499 = vmatpush2.bf16.msra.mxu0 0
  %2500 = vmatprep.subr.bf16.mxu0 0
  %2501 = vmatpush2.bf16.msra.mxu0 0
  %2502 = vmatprep.subr.bf16.mxu0 0
  %2503 = vmatpush2.bf16.msra.mxu0 0
  %2504 = vmatprep.subr.bf16.mxu0 0
  %2505 = vmatpush2.bf16.msra.mxu0 0
  %2506 = vmatprep.subr.bf16.mxu0 0
  %2507 = vmatpush2.bf16.msra.mxu0 0
  %2508 = vmatprep.subr.bf16.mxu0 0
  %2509 = vmatpush2.bf16.msra.mxu0 0
  %2510 = vmatprep.subr.bf16.mxu0 0
  %2511 = vmatpush2.bf16.msra.mxu0 0
  %2512 = vmatprep.mubr.bf16.mxu0 0
  %2513 = vmatmul.mubr.bf16.gmra.mxu0 %v2476
  %v2514 = vpop.f32.mrf.mxu0
  %v2515 = vadd.f32 0.0, %v2514
  %v2516 = vpop.f32.mrf.mxu0
  %v2517 = vpop.f32.mrf.mxu0
  %v2518 = vadd.f32 0.0, %v2517
  %v2519 = vpop.f32.mrf.mxu0
  %2520 = vmatprep.mubr.bf16.mxu0 0
  %2521 = vmatmul.mubr.bf16.gmra.mxu0 %v2477
  %v2522 = vpop.f32.mrf.mxu0
  %v2523 = vadd.f32 0.0, %v2522
  %v2524 = vpop.f32.mrf.mxu0
  %v2525 = vpop.f32.mrf.mxu0
  %v2526 = vadd.f32 0.0, %v2525
  %v2527 = vpop.f32.mrf.mxu0
  %2528 = vdwg.mxu0
  %v2529 = vpack.c.bf16 %v2518, %v2515
  %v2530 = vpack.c.bf16 %v2526, %v2523
  %s2531 = scalar_lea.vmem %s4, 240
  %v2532 = vld [vmem:[%s2531] sm:$0xf]
  %v2533 = vld [vmem:[%s2531 + $0x4] sm:$0xf]
  %v2534 = vld [vmem:[%s2531 + $0x8] sm:$0xf]
  %v2535 = vld [vmem:[%s2531 + $0xc] sm:$0xf]
  %v2540 = vunpack.c.l.b16 %v2532
  %v2541 = vunpack.c.l.b16 %v2533
  %v2542 = vunpack.c.l.b16 %v2534
  %v2543 = vunpack.c.l.b16 %v2535
  %v2544 = vpack.c.b16 %v2541, %v2540
  %v2545 = vpack.c.b16 %v2543, %v2542
  %v2549 = vsel %vm381, %v2529, 0
  %v2552 = vsel %vm381, %v2530, 0
  %2554 = vmatprep.subr.bf16.mxu0 0
  %2555 = vmatpush1.bf16.msra.mxu0 0
  %2556 = vmatprep.subr.bf16.mxu0 0
  %2557 = vmatpush1.bf16.msra.mxu0 0
  %2558 = vmatprep.subr.bf16.mxu0 0
  %2559 = vmatpush1.bf16.msra.mxu0 0
  %2560 = vmatprep.subr.bf16.mxu0 0
  %2561 = vmatpush1.bf16.msra.mxu0 0
  %2562 = vmatprep.subr.bf16.mxu0 0
  %2563 = vmatpush1.bf16.msra.mxu0 0
  %2564 = vmatprep.subr.bf16.mxu0 0
  %2565 = vmatpush1.bf16.msra.mxu0 0
  %2566 = vmatprep.subr.bf16.mxu0 0
  %2567 = vmatpush1.bf16.msra.mxu0 %v2545
  %2568 = vmatprep.subr.bf16.mxu0 0
  %2569 = vmatpush1.bf16.msra.mxu0 %v2544
  %2570 = vmatprep.subr.bf16.mxu0 0
  %2571 = vmatpush2.bf16.msra.mxu0 0
  %2572 = vmatprep.subr.bf16.mxu0 0
  %2573 = vmatpush2.bf16.msra.mxu0 0
  %2574 = vmatprep.subr.bf16.mxu0 0
  %2575 = vmatpush2.bf16.msra.mxu0 0
  %2576 = vmatprep.subr.bf16.mxu0 0
  %2577 = vmatpush2.bf16.msra.mxu0 0
  %2578 = vmatprep.subr.bf16.mxu0 0
  %2579 = vmatpush2.bf16.msra.mxu0 0
  %2580 = vmatprep.subr.bf16.mxu0 0
  %2581 = vmatpush2.bf16.msra.mxu0 0
  %2582 = vmatprep.subr.bf16.mxu0 0
  %2583 = vmatpush2.bf16.msra.mxu0 0
  %2584 = vmatprep.subr.bf16.mxu0 0
  %2585 = vmatpush2.bf16.msra.mxu0 0
  %2586 = vmatprep.mubr.bf16.mxu0 0
  %2587 = vmatmul.mubr.bf16.gmra.mxu0 %v2549
  %v2588 = vpop.f32.mrf.mxu0
  %v2589 = vadd.f32 0.0, %v2588
  %v2590 = vpop.f32.mrf.mxu0
  %v2591 = vpop.f32.mrf.mxu0
  %v2592 = vadd.f32 0.0, %v2591
  %v2593 = vpop.f32.mrf.mxu0
  %2594 = vmatprep.mubr.bf16.mxu0 0
  %2595 = vmatmul.mubr.bf16.gmra.mxu0 %v2552
  %v2596 = vpop.f32.mrf.mxu0
  %v2597 = vadd.f32 0.0, %v2596
  %v2598 = vpop.f32.mrf.mxu0
  %v2599 = vpop.f32.mrf.mxu0
  %v2600 = vadd.f32 0.0, %v2599
  %v2601 = vpop.f32.mrf.mxu0
  %2602 = vdwg.mxu0
  %v2603 = vadd.f32 %v2459, %v2589
  %v2604 = vadd.f32 %v2460, %v2592
  %v2605 = vadd.f32 %v2461, %v2597
  %v2606 = vadd.f32 %v2462, %v2600
  %vm2607 = vcmp.ge.f32.partialorder %v2603, 0.0
  %vm2608 = vcmp.ge.f32.partialorder %v2604, 0.0
  %vm2609 = vcmp.ge.f32.partialorder %v2605, 0.0
  %vm2610 = vcmp.ge.f32.partialorder %v2606, 0.0
  %v2611 = vmul.f32 %v2603, 0.2
  %v2612 = vmul.f32 %v2604, 0.2
  %v2613 = vmul.f32 %v2605, 0.2
  %v2614 = vmul.f32 %v2606, 0.2
  %v2615 = vsel %vm2607, %v2603, %v2611
  %v2616 = vsel %vm2608, %v2604, %v2612
  %v2617 = vsel %vm2609, %v2605, %v2613
  %v2618 = vsel %vm2610, %v2606, %v2614
  %v2619 = vpack.c.bf16 %v2616, %v2615
  %v2620 = vpack.c.bf16 %v2618, %v2617
  %v2621 = vld [vmem:[%s8] sm:$0x1]
  %v2622 = vld [vmem:[%s6] sm:$0xf]
  %v2624 = vsel %vm381, %v2622, 0
  %2626 = vmatprep.subr.bf16.mxu0 0
  %2627 = vmatpush1.bf16.msra.mxu0 0
  %2628 = vmatprep.subr.bf16.mxu0 0
  %2629 = vmatpush1.bf16.msra.mxu0 0
  %2630 = vmatprep.subr.bf16.mxu0 0
  %2631 = vmatpush1.bf16.msra.mxu0 0
  %2632 = vmatprep.subr.bf16.mxu0 0
  %2633 = vmatpush1.bf16.msra.mxu0 0
  %2634 = vmatprep.subr.bf16.mxu0 0
  %2635 = vmatpush1.bf16.msra.mxu0 0
  %2636 = vmatprep.subr.bf16.mxu0 0
  %2637 = vmatpush1.bf16.msra.mxu0 0
  %2638 = vmatprep.subr.bf16.mxu0 0
  %2639 = vmatpush1.bf16.msra.mxu0 %v2620
  %2640 = vmatprep.subr.bf16.mxu0 0
  %2641 = vmatpush1.bf16.msra.mxu0 %v2619
  %2642 = vmatprep.subr.bf16.mxu0 0
  %2643 = vmatpush2.bf16.msra.mxu0 0
  %2644 = vmatprep.subr.bf16.mxu0 0
  %2645 = vmatpush2.bf16.msra.mxu0 0
  %2646 = vmatprep.subr.bf16.mxu0 0
  %2647 = vmatpush2.bf16.msra.mxu0 0
  %2648 = vmatprep.subr.bf16.mxu0 0
  %2649 = vmatpush2.bf16.msra.mxu0 0
  %2650 = vmatprep.subr.bf16.mxu0 0
  %2651 = vmatpush2.bf16.msra.mxu0 0
  %2652 = vmatprep.subr.bf16.mxu0 0
  %2653 = vmatpush2.bf16.msra.mxu0 0
  %2654 = vmatprep.subr.bf16.mxu0 0
  %2655 = vmatpush2.bf16.msra.mxu0 0
  %2656 = vmatprep.subr.bf16.mxu0 0
  %2657 = vmatpush2.bf16.msra.mxu0 0
  %2658 = vmatprep.mubr.bf16.mxu0 0
  %2659 = vmatmul.mubr.bf16.gmra.mxu0 %v2624
  %v2660 = vpop.f32.mrf.mxu0
  %v2661 = vadd.f32 0.0, %v2660
  %v2662 = vpop.f32.mrf.mxu0
  %v2663 = vpop.f32.mrf.mxu0
  %v2664 = vpop.f32.mrf.mxu0
  %2665 = vdwg.mxu0
  %v2666 = vpack.c.bf16 %v2661, %v2661
  %v2667 = vld [vmem:[%s7] sm:$0xf]
  %v2668 = vld [vmem:[%s7 + $0x4] sm:$0xf]
  %v2669 = vld [vmem:[%s7 + $0x8] sm:$0xf]
  %v2670 = vld [vmem:[%s7 + $0xc] sm:$0xf]
  %v2671 = vld [vmem:[%s7 + $0x10] sm:$0xf]
  %v2672 = vld [vmem:[%s7 + $0x14] sm:$0xf]
  %v2673 = vld [vmem:[%s7 + $0x18] sm:$0xf]
  %v2674 = vld [vmem:[%s7 + $0x1c] sm:$0xf]
  %v2683 = vunpack.c.l.b16 %v2667
  %v2684 = vunpack.c.l.b16 %v2668
  %v2685 = vunpack.c.l.b16 %v2669
  %v2686 = vunpack.c.l.b16 %v2670
  %v2687 = vunpack.c.l.b16 %v2671
  %v2688 = vunpack.c.l.b16 %v2672
  %v2689 = vunpack.c.l.b16 %v2673
  %v2690 = vunpack.c.l.b16 %v2674
  %v2691 = vpack.c.b16 %v2684, %v2683
  %v2692 = vpack.c.b16 %v2686, %v2685
  %v2693 = vpack.c.b16 %v2688, %v2687
  %v2694 = vpack.c.b16 %v2690, %v2689
  %vm2699 = vcmask 523264
  %v2701 = vsel %vm2699, %v2666, 0
  %2703 = vmatprep.subr.bf16.mxu0 0
  %2704 = vmatpush1.bf16.msra.mxu0 0
  %2705 = vmatprep.subr.bf16.mxu0 0
  %2706 = vmatpush1.bf16.msra.mxu0 0
  %2707 = vmatprep.subr.bf16.mxu0 0
  %2708 = vmatpush1.bf16.msra.mxu0 0
  %2709 = vmatprep.subr.bf16.mxu0 0
  %2710 = vmatpush1.bf16.msra.mxu0 0
  %2711 = vmatprep.subr.bf16.mxu0 0
  %2712 = vmatpush1.bf16.msra.mxu0 %v2694
  %2713 = vmatprep.subr.bf16.mxu0 0
  %2714 = vmatpush1.bf16.msra.mxu0 %v2693
  %2715 = vmatprep.subr.bf16.mxu0 0
  %2716 = vmatpush1.bf16.msra.mxu0 %v2692
  %2717 = vmatprep.subr.bf16.mxu0 0
  %2718 = vmatpush1.bf16.msra.mxu0 %v2691
  %2719 = vmatprep.subr.bf16.mxu0 0
  %2720 = vmatpush2.bf16.msra.mxu0 0
  %2721 = vmatprep.subr.bf16.mxu0 0
  %2722 = vmatpush2.bf16.msra.mxu0 0
  %2723 = vmatprep.subr.bf16.mxu0 0
  %2724 = vmatpush2.bf16.msra.mxu0 0
  %2725 = vmatprep.subr.bf16.mxu0 0
  %2726 = vmatpush2.bf16.msra.mxu0 0
  %2727 = vmatprep.subr.bf16.mxu0 0
  %2728 = vmatpush2.bf16.msra.mxu0 0
  %2729 = vmatprep.subr.bf16.mxu0 0
  %2730 = vmatpush2.bf16.msra.mxu0 0
  %2731 = vmatprep.subr.bf16.mxu0 0
  %2732 = vmatpush2.bf16.msra.mxu0 0
  %2733 = vmatprep.subr.bf16.mxu0 0
  %2734 = vmatpush2.bf16.msra.mxu0 0
  %2735 = vmatprep.mubr.bf16.mxu0 0
  %2736 = vmatmul.mubr.bf16.gmra.mxu0 %v2701
  %v2737 = vpop.f32.mrf.mxu0
  %v2738 = vadd.f32 0.0, %v2737
  %v2739 = vpop.f32.mrf.mxu0
  %v2740 = vpop.f32.mrf.mxu0
  %v2741 = vpop.f32.mrf.mxu0
  %2742 = vdwg.mxu0
  %v2744 = vlaneseq
  %v2745 = vshrl.u32 %v2744, 7
  %v2746 = vsub.s32 0, %v2745
  %v2747 = vrot.slane %v2621, %v2746
  %v2749 = vadd.f32 %v2747, %v2738
  %s2750 = scalar_lea.vmem %s6, 4
  %v2751 = vld [vmem:[%s2750] sm:$0xf]
  %v2753 = vsel %vm381, %v2751, 0
  %2755 = vmatprep.subr.bf16.mxu0 0
  %2756 = vmatpush1.bf16.msra.mxu0 0
  %2757 = vmatprep.subr.bf16.mxu0 0
  %2758 = vmatpush1.bf16.msra.mxu0 0
  %2759 = vmatprep.subr.bf16.mxu0 0
  %2760 = vmatpush1.bf16.msra.mxu0 0
  %2761 = vmatprep.subr.bf16.mxu0 0
  %2762 = vmatpush1.bf16.msra.mxu0 0
  %2763 = vmatprep.subr.bf16.mxu0 0
  %2764 = vmatpush1.bf16.msra.mxu0 0
  %2765 = vmatprep.subr.bf16.mxu0 0
  %2766 = vmatpush1.bf16.msra.mxu0 0
  %2767 = vmatprep.subr.bf16.mxu0 0
  %2768 = vmatpush1.bf16.msra.mxu0 %v2620
  %2769 = vmatprep.subr.bf16.mxu0 0
  %2770 = vmatpush1.bf16.msra.mxu0 %v2619
  %2771 = vmatprep.subr.bf16.mxu0 0
  %2772 = vmatpush2.bf16.msra.mxu0 0
  %2773 = vmatprep.subr.bf16.mxu0 0
  %2774 = vmatpush2.bf16.msra.mxu0 0
  %2775 = vmatprep.subr.bf16.mxu0 0
  %2776 = vmatpush2.bf16.msra.mxu0 0
  %2777 = vmatprep.subr.bf16.mxu0 0
  %2778 = vmatpush2.bf16.msra.mxu0 0
  %2779 = vmatprep.subr.bf16.mxu0 0
  %2780 = vmatpush2.bf16.msra.mxu0 0
  %2781 = vmatprep.subr.bf16.mxu0 0
  %2782 = vmatpush2.bf16.msra.mxu0 0
  %2783 = vmatprep.subr.bf16.mxu0 0
  %2784 = vmatpush2.bf16.msra.mxu0 0
  %2785 = vmatprep.subr.bf16.mxu0 0
  %2786 = vmatpush2.bf16.msra.mxu0 0
  %2787 = vmatprep.mubr.bf16.mxu0 0
  %2788 = vmatmul.mubr.bf16.gmra.mxu0 %v2753
  %v2789 = vpop.f32.mrf.mxu0
  %v2790 = vadd.f32 0.0, %v2789
  %v2791 = vpop.f32.mrf.mxu0
  %v2792 = vpop.f32.mrf.mxu0
  %v2793 = vpop.f32.mrf.mxu0
  %2794 = vdwg.mxu0
  %v2795 = vpack.c.bf16 %v2790, %v2790
  %s2796 = scalar_lea.vmem %s7, 32
  %v2797 = vld [vmem:[%s2796] sm:$0xf]
  %v2798 = vld [vmem:[%s2796 + $0x4] sm:$0xf]
  %v2799 = vld [vmem:[%s2796 + $0x8] sm:$0xf]
  %v2800 = vld [vmem:[%s2796 + $0xc] sm:$0xf]
  %v2801 = vld [vmem:[%s2796 + $0x10] sm:$0xf]
  %v2802 = vld [vmem:[%s2796 + $0x14] sm:$0xf]
  %v2803 = vld [vmem:[%s2796 + $0x18] sm:$0xf]
  %v2804 = vld [vmem:[%s2796 + $0x1c] sm:$0xf]
  %v2813 = vunpack.c.l.b16 %v2797
  %v2814 = vunpack.c.l.b16 %v2798
  %v2815 = vunpack.c.l.b16 %v2799
  %v2816 = vunpack.c.l.b16 %v2800
  %v2817 = vunpack.c.l.b16 %v2801
  %v2818 = vunpack.c.l.b16 %v2802
  %v2819 = vunpack.c.l.b16 %v2803
  %v2820 = vunpack.c.l.b16 %v2804
  %v2821 = vpack.c.b16 %v2814, %v2813
  %v2822 = vpack.c.b16 %v2816, %v2815
  %v2823 = vpack.c.b16 %v2818, %v2817
  %v2824 = vpack.c.b16 %v2820, %v2819
  %v2830 = vsel %vm2699, %v2795, 0
  %2832 = vmatprep.subr.bf16.mxu0 0
  %2833 = vmatpush1.bf16.msra.mxu0 0
  %2834 = vmatprep.subr.bf16.mxu0 0
  %2835 = vmatpush1.bf16.msra.mxu0 0
  %2836 = vmatprep.subr.bf16.mxu0 0
  %2837 = vmatpush1.bf16.msra.mxu0 0
  %2838 = vmatprep.subr.bf16.mxu0 0
  %2839 = vmatpush1.bf16.msra.mxu0 0
  %2840 = vmatprep.subr.bf16.mxu0 0
  %2841 = vmatpush1.bf16.msra.mxu0 %v2824
  %2842 = vmatprep.subr.bf16.mxu0 0
  %2843 = vmatpush1.bf16.msra.mxu0 %v2823
  %2844 = vmatprep.subr.bf16.mxu0 0
  %2845 = vmatpush1.bf16.msra.mxu0 %v2822
  %2846 = vmatprep.subr.bf16.mxu0 0
  %2847 = vmatpush1.bf16.msra.mxu0 %v2821
  %2848 = vmatprep.subr.bf16.mxu0 0
  %2849 = vmatpush2.bf16.msra.mxu0 0
  %2850 = vmatprep.subr.bf16.mxu0 0
  %2851 = vmatpush2.bf16.msra.mxu0 0
  %2852 = vmatprep.subr.bf16.mxu0 0
  %2853 = vmatpush2.bf16.msra.mxu0 0
  %2854 = vmatprep.subr.bf16.mxu0 0
  %2855 = vmatpush2.bf16.msra.mxu0 0
  %2856 = vmatprep.subr.bf16.mxu0 0
  %2857 = vmatpush2.bf16.msra.mxu0 0
  %2858 = vmatprep.subr.bf16.mxu0 0
  %2859 = vmatpush2.bf16.msra.mxu0 0
  %2860 = vmatprep.subr.bf16.mxu0 0
  %2861 = vmatpush2.bf16.msra.mxu0 0
  %2862 = vmatprep.subr.bf16.mxu0 0
  %2863 = vmatpush2.bf16.msra.mxu0 0
  %2864 = vmatprep.mubr.bf16.mxu0 0
  %2865 = vmatmul.mubr.bf16.gmra.mxu0 %v2830
  %v2866 = vpop.f32.mrf.mxu0
  %v2867 = vadd.f32 0.0, %v2866
  %v2868 = vpop.f32.mrf.mxu0
  %v2869 = vpop.f32.mrf.mxu0
  %v2870 = vpop.f32.mrf.mxu0
  %2871 = vdwg.mxu0
  %v2872 = vadd.f32 %v2749, %v2867
  %s2873 = scalar_lea.vmem %s6, 8
  %v2874 = vld [vmem:[%s2873] sm:$0xf]
  %v2876 = vsel %vm381, %v2874, 0
  %2878 = vmatprep.subr.bf16.mxu0 0
  %2879 = vmatpush1.bf16.msra.mxu0 0
  %2880 = vmatprep.subr.bf16.mxu0 0
  %2881 = vmatpush1.bf16.msra.mxu0 0
  %2882 = vmatprep.subr.bf16.mxu0 0
  %2883 = vmatpush1.bf16.msra.mxu0 0
  %2884 = vmatprep.subr.bf16.mxu0 0
  %2885 = vmatpush1.bf16.msra.mxu0 0
  %2886 = vmatprep.subr.bf16.mxu0 0
  %2887 = vmatpush1.bf16.msra.mxu0 0
  %2888 = vmatprep.subr.bf16.mxu0 0
  %2889 = vmatpush1.bf16.msra.mxu0 0
  %2890 = vmatprep.subr.bf16.mxu0 0
  %2891 = vmatpush1.bf16.msra.mxu0 %v2620
  %2892 = vmatprep.subr.bf16.mxu0 0
  %2893 = vmatpush1.bf16.msra.mxu0 %v2619
  %2894 = vmatprep.subr.bf16.mxu0 0
  %2895 = vmatpush2.bf16.msra.mxu0 0
  %2896 = vmatprep.subr.bf16.mxu0 0
  %2897 = vmatpush2.bf16.msra.mxu0 0
  %2898 = vmatprep.subr.bf16.mxu0 0
  %2899 = vmatpush2.bf16.msra.mxu0 0
  %2900 = vmatprep.subr.bf16.mxu0 0
  %2901 = vmatpush2.bf16.msra.mxu0 0
  %2902 = vmatprep.subr.bf16.mxu0 0
  %2903 = vmatpush2.bf16.msra.mxu0 0
  %2904 = vmatprep.subr.bf16.mxu0 0
  %2905 = vmatpush2.bf16.msra.mxu0 0
  %2906 = vmatprep.subr.bf16.mxu0 0
  %2907 = vmatpush2.bf16.msra.mxu0 0
  %2908 = vmatprep.subr.bf16.mxu0 0
  %2909 = vmatpush2.bf16.msra.mxu0 0
  %2910 = vmatprep.mubr.bf16.mxu0 0
  %2911 = vmatmul.mubr.bf16.gmra.mxu0 %v2876
  %v2912 = vpop.f32.mrf.mxu0
  %v2913 = vadd.f32 0.0, %v2912
  %v2914 = vpop.f32.mrf.mxu0
  %v2915 = vpop.f32.mrf.mxu0
  %v2916 = vpop.f32.mrf.mxu0
  %2917 = vdwg.mxu0
  %v2918 = vpack.c.bf16 %v2913, %v2913
  %s2919 = scalar_lea.vmem %s7, 64
  %v2920 = vld [vmem:[%s2919] sm:$0xf]
  %v2921 = vld [vmem:[%s2919 + $0x4] sm:$0xf]
  %v2922 = vld [vmem:[%s2919 + $0x8] sm:$0xf]
  %v2923 = vld [vmem:[%s2919 + $0xc] sm:$0xf]
  %v2924 = vld [vmem:[%s2919 + $0x10] sm:$0xf]
  %v2925 = vld [vmem:[%s2919 + $0x14] sm:$0xf]
  %v2926 = vld [vmem:[%s2919 + $0x18] sm:$0xf]
  %v2927 = vld [vmem:[%s2919 + $0x1c] sm:$0xf]
  %v2936 = vunpack.c.l.b16 %v2920
  %v2937 = vunpack.c.l.b16 %v2921
  %v2938 = vunpack.c.l.b16 %v2922
  %v2939 = vunpack.c.l.b16 %v2923
  %v2940 = vunpack.c.l.b16 %v2924
  %v2941 = vunpack.c.l.b16 %v2925
  %v2942 = vunpack.c.l.b16 %v2926
  %v2943 = vunpack.c.l.b16 %v2927
  %v2944 = vpack.c.b16 %v2937, %v2936
  %v2945 = vpack.c.b16 %v2939, %v2938
  %v2946 = vpack.c.b16 %v2941, %v2940
  %v2947 = vpack.c.b16 %v2943, %v2942
  %v2953 = vsel %vm2699, %v2918, 0
  %2955 = vmatprep.subr.bf16.mxu0 0
  %2956 = vmatpush1.bf16.msra.mxu0 0
  %2957 = vmatprep.subr.bf16.mxu0 0
  %2958 = vmatpush1.bf16.msra.mxu0 0
  %2959 = vmatprep.subr.bf16.mxu0 0
  %2960 = vmatpush1.bf16.msra.mxu0 0
  %2961 = vmatprep.subr.bf16.mxu0 0
  %2962 = vmatpush1.bf16.msra.mxu0 0
  %2963 = vmatprep.subr.bf16.mxu0 0
  %2964 = vmatpush1.bf16.msra.mxu0 %v2947
  %2965 = vmatprep.subr.bf16.mxu0 0
  %2966 = vmatpush1.bf16.msra.mxu0 %v2946
  %2967 = vmatprep.subr.bf16.mxu0 0
  %2968 = vmatpush1.bf16.msra.mxu0 %v2945
  %2969 = vmatprep.subr.bf16.mxu0 0
  %2970 = vmatpush1.bf16.msra.mxu0 %v2944
  %2971 = vmatprep.subr.bf16.mxu0 0
  %2972 = vmatpush2.bf16.msra.mxu0 0
  %2973 = vmatprep.subr.bf16.mxu0 0
  %2974 = vmatpush2.bf16.msra.mxu0 0
  %2975 = vmatprep.subr.bf16.mxu0 0
  %2976 = vmatpush2.bf16.msra.mxu0 0
  %2977 = vmatprep.subr.bf16.mxu0 0
  %2978 = vmatpush2.bf16.msra.mxu0 0
  %2979 = vmatprep.subr.bf16.mxu0 0
  %2980 = vmatpush2.bf16.msra.mxu0 0
  %2981 = vmatprep.subr.bf16.mxu0 0
  %2982 = vmatpush2.bf16.msra.mxu0 0
  %2983 = vmatprep.subr.bf16.mxu0 0
  %2984 = vmatpush2.bf16.msra.mxu0 0
  %2985 = vmatprep.subr.bf16.mxu0 0
  %2986 = vmatpush2.bf16.msra.mxu0 0
  %2987 = vmatprep.mubr.bf16.mxu0 0
  %2988 = vmatmul.mubr.bf16.gmra.mxu0 %v2953
  %v2989 = vpop.f32.mrf.mxu0
  %v2990 = vadd.f32 0.0, %v2989
  %v2991 = vpop.f32.mrf.mxu0
  %v2992 = vpop.f32.mrf.mxu0
  %v2993 = vpop.f32.mrf.mxu0
  %2994 = vdwg.mxu0
  %v2995 = vadd.f32 %v2872, %v2990
  %s2996 = scalar_lea.vmem %s6, 12
  %v2997 = vld [vmem:[%s2996] sm:$0xf]
  %v2999 = vsel %vm381, %v2997, 0
  %3001 = vmatprep.subr.bf16.mxu0 0
  %3002 = vmatpush1.bf16.msra.mxu0 0
  %3003 = vmatprep.subr.bf16.mxu0 0
  %3004 = vmatpush1.bf16.msra.mxu0 0
  %3005 = vmatprep.subr.bf16.mxu0 0
  %3006 = vmatpush1.bf16.msra.mxu0 0
  %3007 = vmatprep.subr.bf16.mxu0 0
  %3008 = vmatpush1.bf16.msra.mxu0 0
  %3009 = vmatprep.subr.bf16.mxu0 0
  %3010 = vmatpush1.bf16.msra.mxu0 0
  %3011 = vmatprep.subr.bf16.mxu0 0
  %3012 = vmatpush1.bf16.msra.mxu0 0
  %3013 = vmatprep.subr.bf16.mxu0 0
  %3014 = vmatpush1.bf16.msra.mxu0 %v2620
  %3015 = vmatprep.subr.bf16.mxu0 0
  %3016 = vmatpush1.bf16.msra.mxu0 %v2619
  %3017 = vmatprep.subr.bf16.mxu0 0
  %3018 = vmatpush2.bf16.msra.mxu0 0
  %3019 = vmatprep.subr.bf16.mxu0 0
  %3020 = vmatpush2.bf16.msra.mxu0 0
  %3021 = vmatprep.subr.bf16.mxu0 0
  %3022 = vmatpush2.bf16.msra.mxu0 0
  %3023 = vmatprep.subr.bf16.mxu0 0
  %3024 = vmatpush2.bf16.msra.mxu0 0
  %3025 = vmatprep.subr.bf16.mxu0 0
  %3026 = vmatpush2.bf16.msra.mxu0 0
  %3027 = vmatprep.subr.bf16.mxu0 0
  %3028 = vmatpush2.bf16.msra.mxu0 0
  %3029 = vmatprep.subr.bf16.mxu0 0
  %3030 = vmatpush2.bf16.msra.mxu0 0
  %3031 = vmatprep.subr.bf16.mxu0 0
  %3032 = vmatpush2.bf16.msra.mxu0 0
  %3033 = vmatprep.mubr.bf16.mxu0 0
  %3034 = vmatmul.mubr.bf16.gmra.mxu0 %v2999
  %v3035 = vpop.f32.mrf.mxu0
  %v3036 = vadd.f32 0.0, %v3035
  %v3037 = vpop.f32.mrf.mxu0
  %v3038 = vpop.f32.mrf.mxu0
  %v3039 = vpop.f32.mrf.mxu0
  %3040 = vdwg.mxu0
  %v3041 = vpack.c.bf16 %v3036, %v3036
  %s3042 = scalar_lea.vmem %s7, 96
  %v3043 = vld [vmem:[%s3042] sm:$0xf]
  %v3044 = vld [vmem:[%s3042 + $0x4] sm:$0xf]
  %v3045 = vld [vmem:[%s3042 + $0x8] sm:$0xf]
  %v3046 = vld [vmem:[%s3042 + $0xc] sm:$0xf]
  %v3047 = vld [vmem:[%s3042 + $0x10] sm:$0xf]
  %v3048 = vld [vmem:[%s3042 + $0x14] sm:$0xf]
  %v3049 = vld [vmem:[%s3042 + $0x18] sm:$0xf]
  %v3050 = vld [vmem:[%s3042 + $0x1c] sm:$0xf]
  %v3059 = vunpack.c.l.b16 %v3043
  %v3060 = vunpack.c.l.b16 %v3044
  %v3061 = vunpack.c.l.b16 %v3045
  %v3062 = vunpack.c.l.b16 %v3046
  %v3063 = vunpack.c.l.b16 %v3047
  %v3064 = vunpack.c.l.b16 %v3048
  %v3065 = vunpack.c.l.b16 %v3049
  %v3066 = vunpack.c.l.b16 %v3050
  %v3067 = vpack.c.b16 %v3060, %v3059
  %v3068 = vpack.c.b16 %v3062, %v3061
  %v3069 = vpack.c.b16 %v3064, %v3063
  %v3070 = vpack.c.b16 %v3066, %v3065
  %v3076 = vsel %vm2699, %v3041, 0
  %3078 = vmatprep.subr.bf16.mxu0 0
  %3079 = vmatpush1.bf16.msra.mxu0 0
  %3080 = vmatprep.subr.bf16.mxu0 0
  %3081 = vmatpush1.bf16.msra.mxu0 0
  %3082 = vmatprep.subr.bf16.mxu0 0
  %3083 = vmatpush1.bf16.msra.mxu0 0
  %3084 = vmatprep.subr.bf16.mxu0 0
  %3085 = vmatpush1.bf16.msra.mxu0 0
  %3086 = vmatprep.subr.bf16.mxu0 0
  %3087 = vmatpush1.bf16.msra.mxu0 %v3070
  %3088 = vmatprep.subr.bf16.mxu0 0
  %3089 = vmatpush1.bf16.msra.mxu0 %v3069
  %3090 = vmatprep.subr.bf16.mxu0 0
  %3091 = vmatpush1.bf16.msra.mxu0 %v3068
  %3092 = vmatprep.subr.bf16.mxu0 0
  %3093 = vmatpush1.bf16.msra.mxu0 %v3067
  %3094 = vmatprep.subr.bf16.mxu0 0
  %3095 = vmatpush2.bf16.msra.mxu0 0
  %3096 = vmatprep.subr.bf16.mxu0 0
  %3097 = vmatpush2.bf16.msra.mxu0 0
  %3098 = vmatprep.subr.bf16.mxu0 0
  %3099 = vmatpush2.bf16.msra.mxu0 0
  %3100 = vmatprep.subr.bf16.mxu0 0
  %3101 = vmatpush2.bf16.msra.mxu0 0
  %3102 = vmatprep.subr.bf16.mxu0 0
  %3103 = vmatpush2.bf16.msra.mxu0 0
  %3104 = vmatprep.subr.bf16.mxu0 0
  %3105 = vmatpush2.bf16.msra.mxu0 0
  %3106 = vmatprep.subr.bf16.mxu0 0
  %3107 = vmatpush2.bf16.msra.mxu0 0
  %3108 = vmatprep.subr.bf16.mxu0 0
  %3109 = vmatpush2.bf16.msra.mxu0 0
  %3110 = vmatprep.mubr.bf16.mxu0 0
  %3111 = vmatmul.mubr.bf16.gmra.mxu0 %v3076
  %v3112 = vpop.f32.mrf.mxu0
  %v3113 = vadd.f32 0.0, %v3112
  %v3114 = vpop.f32.mrf.mxu0
  %v3115 = vpop.f32.mrf.mxu0
  %v3116 = vpop.f32.mrf.mxu0
  %3117 = vdwg.mxu0
  %v3118 = vadd.f32 %v2995, %v3113
  %s3119 = scalar_lea.vmem %s6, 16
  %v3120 = vld [vmem:[%s3119] sm:$0xf]
  %v3122 = vsel %vm381, %v3120, 0
  %3124 = vmatprep.subr.bf16.mxu0 0
  %3125 = vmatpush1.bf16.msra.mxu0 0
  %3126 = vmatprep.subr.bf16.mxu0 0
  %3127 = vmatpush1.bf16.msra.mxu0 0
  %3128 = vmatprep.subr.bf16.mxu0 0
  %3129 = vmatpush1.bf16.msra.mxu0 0
  %3130 = vmatprep.subr.bf16.mxu0 0
  %3131 = vmatpush1.bf16.msra.mxu0 0
  %3132 = vmatprep.subr.bf16.mxu0 0
  %3133 = vmatpush1.bf16.msra.mxu0 0
  %3134 = vmatprep.subr.bf16.mxu0 0
  %3135 = vmatpush1.bf16.msra.mxu0 0
  %3136 = vmatprep.subr.bf16.mxu0 0
  %3137 = vmatpush1.bf16.msra.mxu0 %v2620
  %3138 = vmatprep.subr.bf16.mxu0 0
  %3139 = vmatpush1.bf16.msra.mxu0 %v2619
  %3140 = vmatprep.subr.bf16.mxu0 0
  %3141 = vmatpush2.bf16.msra.mxu0 0
  %3142 = vmatprep.subr.bf16.mxu0 0
  %3143 = vmatpush2.bf16.msra.mxu0 0
  %3144 = vmatprep.subr.bf16.mxu0 0
  %3145 = vmatpush2.bf16.msra.mxu0 0
  %3146 = vmatprep.subr.bf16.mxu0 0
  %3147 = vmatpush2.bf16.msra.mxu0 0
  %3148 = vmatprep.subr.bf16.mxu0 0
  %3149 = vmatpush2.bf16.msra.mxu0 0
  %3150 = vmatprep.subr.bf16.mxu0 0
  %3151 = vmatpush2.bf16.msra.mxu0 0
  %3152 = vmatprep.subr.bf16.mxu0 0
  %3153 = vmatpush2.bf16.msra.mxu0 0
  %3154 = vmatprep.subr.bf16.mxu0 0
  %3155 = vmatpush2.bf16.msra.mxu0 0
  %3156 = vmatprep.mubr.bf16.mxu0 0
  %3157 = vmatmul.mubr.bf16.gmra.mxu0 %v3122
  %v3158 = vpop.f32.mrf.mxu0
  %v3159 = vadd.f32 0.0, %v3158
  %v3160 = vpop.f32.mrf.mxu0
  %v3161 = vpop.f32.mrf.mxu0
  %v3162 = vpop.f32.mrf.mxu0
  %3163 = vdwg.mxu0
  %v3164 = vpack.c.bf16 %v3159, %v3159
  %s3165 = scalar_lea.vmem %s7, 128
  %v3166 = vld [vmem:[%s3165] sm:$0xf]
  %v3167 = vld [vmem:[%s3165 + $0x4] sm:$0xf]
  %v3168 = vld [vmem:[%s3165 + $0x8] sm:$0xf]
  %v3169 = vld [vmem:[%s3165 + $0xc] sm:$0xf]
  %v3170 = vld [vmem:[%s3165 + $0x10] sm:$0xf]
  %v3171 = vld [vmem:[%s3165 + $0x14] sm:$0xf]
  %v3172 = vld [vmem:[%s3165 + $0x18] sm:$0xf]
  %v3173 = vld [vmem:[%s3165 + $0x1c] sm:$0xf]
  %v3182 = vunpack.c.l.b16 %v3166
  %v3183 = vunpack.c.l.b16 %v3167
  %v3184 = vunpack.c.l.b16 %v3168
  %v3185 = vunpack.c.l.b16 %v3169
  %v3186 = vunpack.c.l.b16 %v3170
  %v3187 = vunpack.c.l.b16 %v3171
  %v3188 = vunpack.c.l.b16 %v3172
  %v3189 = vunpack.c.l.b16 %v3173
  %v3190 = vpack.c.b16 %v3183, %v3182
  %v3191 = vpack.c.b16 %v3185, %v3184
  %v3192 = vpack.c.b16 %v3187, %v3186
  %v3193 = vpack.c.b16 %v3189, %v3188
  %v3199 = vsel %vm2699, %v3164, 0
  %3201 = vmatprep.subr.bf16.mxu0 0
  %3202 = vmatpush1.bf16.msra.mxu0 0
  %3203 = vmatprep.subr.bf16.mxu0 0
  %3204 = vmatpush1.bf16.msra.mxu0 0
  %3205 = vmatprep.subr.bf16.mxu0 0
  %3206 = vmatpush1.bf16.msra.mxu0 0
  %3207 = vmatprep.subr.bf16.mxu0 0
  %3208 = vmatpush1.bf16.msra.mxu0 0
  %3209 = vmatprep.subr.bf16.mxu0 0
  %3210 = vmatpush1.bf16.msra.mxu0 %v3193
  %3211 = vmatprep.subr.bf16.mxu0 0
  %3212 = vmatpush1.bf16.msra.mxu0 %v3192
  %3213 = vmatprep.subr.bf16.mxu0 0
  %3214 = vmatpush1.bf16.msra.mxu0 %v3191
  %3215 = vmatprep.subr.bf16.mxu0 0
  %3216 = vmatpush1.bf16.msra.mxu0 %v3190
  %3217 = vmatprep.subr.bf16.mxu0 0
  %3218 = vmatpush2.bf16.msra.mxu0 0
  %3219 = vmatprep.subr.bf16.mxu0 0
  %3220 = vmatpush2.bf16.msra.mxu0 0
  %3221 = vmatprep.subr.bf16.mxu0 0
  %3222 = vmatpush2.bf16.msra.mxu0 0
  %3223 = vmatprep.subr.bf16.mxu0 0
  %3224 = vmatpush2.bf16.msra.mxu0 0
  %3225 = vmatprep.subr.bf16.mxu0 0
  %3226 = vmatpush2.bf16.msra.mxu0 0
  %3227 = vmatprep.subr.bf16.mxu0 0
  %3228 = vmatpush2.bf16.msra.mxu0 0
  %3229 = vmatprep.subr.bf16.mxu0 0
  %3230 = vmatpush2.bf16.msra.mxu0 0
  %3231 = vmatprep.subr.bf16.mxu0 0
  %3232 = vmatpush2.bf16.msra.mxu0 0
  %3233 = vmatprep.mubr.bf16.mxu0 0
  %3234 = vmatmul.mubr.bf16.gmra.mxu0 %v3199
  %v3235 = vpop.f32.mrf.mxu0
  %v3236 = vadd.f32 0.0, %v3235
  %v3237 = vpop.f32.mrf.mxu0
  %v3238 = vpop.f32.mrf.mxu0
  %v3239 = vpop.f32.mrf.mxu0
  %3240 = vdwg.mxu0
  %v3241 = vadd.f32 %v3118, %v3236
  %s3242 = scalar_lea.vmem %s6, 20
  %v3243 = vld [vmem:[%s3242] sm:$0xf]
  %v3245 = vsel %vm381, %v3243, 0
  %3247 = vmatprep.subr.bf16.mxu0 0
  %3248 = vmatpush1.bf16.msra.mxu0 0
  %3249 = vmatprep.subr.bf16.mxu0 0
  %3250 = vmatpush1.bf16.msra.mxu0 0
  %3251 = vmatprep.subr.bf16.mxu0 0
  %3252 = vmatpush1.bf16.msra.mxu0 0
  %3253 = vmatprep.subr.bf16.mxu0 0
  %3254 = vmatpush1.bf16.msra.mxu0 0
  %3255 = vmatprep.subr.bf16.mxu0 0
  %3256 = vmatpush1.bf16.msra.mxu0 0
  %3257 = vmatprep.subr.bf16.mxu0 0
  %3258 = vmatpush1.bf16.msra.mxu0 0
  %3259 = vmatprep.subr.bf16.mxu0 0
  %3260 = vmatpush1.bf16.msra.mxu0 %v2620
  %3261 = vmatprep.subr.bf16.mxu0 0
  %3262 = vmatpush1.bf16.msra.mxu0 %v2619
  %3263 = vmatprep.subr.bf16.mxu0 0
  %3264 = vmatpush2.bf16.msra.mxu0 0
  %3265 = vmatprep.subr.bf16.mxu0 0
  %3266 = vmatpush2.bf16.msra.mxu0 0
  %3267 = vmatprep.subr.bf16.mxu0 0
  %3268 = vmatpush2.bf16.msra.mxu0 0
  %3269 = vmatprep.subr.bf16.mxu0 0
  %3270 = vmatpush2.bf16.msra.mxu0 0
  %3271 = vmatprep.subr.bf16.mxu0 0
  %3272 = vmatpush2.bf16.msra.mxu0 0
  %3273 = vmatprep.subr.bf16.mxu0 0
  %3274 = vmatpush2.bf16.msra.mxu0 0
  %3275 = vmatprep.subr.bf16.mxu0 0
  %3276 = vmatpush2.bf16.msra.mxu0 0
  %3277 = vmatprep.subr.bf16.mxu0 0
  %3278 = vmatpush2.bf16.msra.mxu0 0
  %3279 = vmatprep.mubr.bf16.mxu0 0
  %3280 = vmatmul.mubr.bf16.gmra.mxu0 %v3245
  %v3281 = vpop.f32.mrf.mxu0
  %v3282 = vadd.f32 0.0, %v3281
  %v3283 = vpop.f32.mrf.mxu0
  %v3284 = vpop.f32.mrf.mxu0
  %v3285 = vpop.f32.mrf.mxu0
  %3286 = vdwg.mxu0
  %v3287 = vpack.c.bf16 %v3282, %v3282
  %s3288 = scalar_lea.vmem %s7, 160
  %v3289 = vld [vmem:[%s3288] sm:$0xf]
  %v3290 = vld [vmem:[%s3288 + $0x4] sm:$0xf]
  %v3291 = vld [vmem:[%s3288 + $0x8] sm:$0xf]
  %v3292 = vld [vmem:[%s3288 + $0xc] sm:$0xf]
  %v3293 = vld [vmem:[%s3288 + $0x10] sm:$0xf]
  %v3294 = vld [vmem:[%s3288 + $0x14] sm:$0xf]
  %v3295 = vld [vmem:[%s3288 + $0x18] sm:$0xf]
  %v3296 = vld [vmem:[%s3288 + $0x1c] sm:$0xf]
  %v3305 = vunpack.c.l.b16 %v3289
  %v3306 = vunpack.c.l.b16 %v3290
  %v3307 = vunpack.c.l.b16 %v3291
  %v3308 = vunpack.c.l.b16 %v3292
  %v3309 = vunpack.c.l.b16 %v3293
  %v3310 = vunpack.c.l.b16 %v3294
  %v3311 = vunpack.c.l.b16 %v3295
  %v3312 = vunpack.c.l.b16 %v3296
  %v3313 = vpack.c.b16 %v3306, %v3305
  %v3314 = vpack.c.b16 %v3308, %v3307
  %v3315 = vpack.c.b16 %v3310, %v3309
  %v3316 = vpack.c.b16 %v3312, %v3311
  %v3322 = vsel %vm2699, %v3287, 0
  %3324 = vmatprep.subr.bf16.mxu0 0
  %3325 = vmatpush1.bf16.msra.mxu0 0
  %3326 = vmatprep.subr.bf16.mxu0 0
  %3327 = vmatpush1.bf16.msra.mxu0 0
  %3328 = vmatprep.subr.bf16.mxu0 0
  %3329 = vmatpush1.bf16.msra.mxu0 0
  %3330 = vmatprep.subr.bf16.mxu0 0
  %3331 = vmatpush1.bf16.msra.mxu0 0
  %3332 = vmatprep.subr.bf16.mxu0 0
  %3333 = vmatpush1.bf16.msra.mxu0 %v3316
  %3334 = vmatprep.subr.bf16.mxu0 0
  %3335 = vmatpush1.bf16.msra.mxu0 %v3315
  %3336 = vmatprep.subr.bf16.mxu0 0
  %3337 = vmatpush1.bf16.msra.mxu0 %v3314
  %3338 = vmatprep.subr.bf16.mxu0 0
  %3339 = vmatpush1.bf16.msra.mxu0 %v3313
  %3340 = vmatprep.subr.bf16.mxu0 0
  %3341 = vmatpush2.bf16.msra.mxu0 0
  %3342 = vmatprep.subr.bf16.mxu0 0
  %3343 = vmatpush2.bf16.msra.mxu0 0
  %3344 = vmatprep.subr.bf16.mxu0 0
  %3345 = vmatpush2.bf16.msra.mxu0 0
  %3346 = vmatprep.subr.bf16.mxu0 0
  %3347 = vmatpush2.bf16.msra.mxu0 0
  %3348 = vmatprep.subr.bf16.mxu0 0
  %3349 = vmatpush2.bf16.msra.mxu0 0
  %3350 = vmatprep.subr.bf16.mxu0 0
  %3351 = vmatpush2.bf16.msra.mxu0 0
  %3352 = vmatprep.subr.bf16.mxu0 0
  %3353 = vmatpush2.bf16.msra.mxu0 0
  %3354 = vmatprep.subr.bf16.mxu0 0
  %3355 = vmatpush2.bf16.msra.mxu0 0
  %3356 = vmatprep.mubr.bf16.mxu0 0
  %3357 = vmatmul.mubr.bf16.gmra.mxu0 %v3322
  %v3358 = vpop.f32.mrf.mxu0
  %v3359 = vadd.f32 0.0, %v3358
  %v3360 = vpop.f32.mrf.mxu0
  %v3361 = vpop.f32.mrf.mxu0
  %v3362 = vpop.f32.mrf.mxu0
  %3363 = vdwg.mxu0
  %v3364 = vadd.f32 %v3241, %v3359
  %s3365 = scalar_lea.vmem %s6, 24
  %v3366 = vld [vmem:[%s3365] sm:$0xf]
  %v3368 = vsel %vm381, %v3366, 0
  %3370 = vmatprep.subr.bf16.mxu0 0
  %3371 = vmatpush1.bf16.msra.mxu0 0
  %3372 = vmatprep.subr.bf16.mxu0 0
  %3373 = vmatpush1.bf16.msra.mxu0 0
  %3374 = vmatprep.subr.bf16.mxu0 0
  %3375 = vmatpush1.bf16.msra.mxu0 0
  %3376 = vmatprep.subr.bf16.mxu0 0
  %3377 = vmatpush1.bf16.msra.mxu0 0
  %3378 = vmatprep.subr.bf16.mxu0 0
  %3379 = vmatpush1.bf16.msra.mxu0 0
  %3380 = vmatprep.subr.bf16.mxu0 0
  %3381 = vmatpush1.bf16.msra.mxu0 0
  %3382 = vmatprep.subr.bf16.mxu0 0
  %3383 = vmatpush1.bf16.msra.mxu0 %v2620
  %3384 = vmatprep.subr.bf16.mxu0 0
  %3385 = vmatpush1.bf16.msra.mxu0 %v2619
  %3386 = vmatprep.subr.bf16.mxu0 0
  %3387 = vmatpush2.bf16.msra.mxu0 0
  %3388 = vmatprep.subr.bf16.mxu0 0
  %3389 = vmatpush2.bf16.msra.mxu0 0
  %3390 = vmatprep.subr.bf16.mxu0 0
  %3391 = vmatpush2.bf16.msra.mxu0 0
  %3392 = vmatprep.subr.bf16.mxu0 0
  %3393 = vmatpush2.bf16.msra.mxu0 0
  %3394 = vmatprep.subr.bf16.mxu0 0
  %3395 = vmatpush2.bf16.msra.mxu0 0
  %3396 = vmatprep.subr.bf16.mxu0 0
  %3397 = vmatpush2.bf16.msra.mxu0 0
  %3398 = vmatprep.subr.bf16.mxu0 0
  %3399 = vmatpush2.bf16.msra.mxu0 0
  %3400 = vmatprep.subr.bf16.mxu0 0
  %3401 = vmatpush2.bf16.msra.mxu0 0
  %3402 = vmatprep.mubr.bf16.mxu0 0
  %3403 = vmatmul.mubr.bf16.gmra.mxu0 %v3368
  %v3404 = vpop.f32.mrf.mxu0
  %v3405 = vadd.f32 0.0, %v3404
  %v3406 = vpop.f32.mrf.mxu0
  %v3407 = vpop.f32.mrf.mxu0
  %v3408 = vpop.f32.mrf.mxu0
  %3409 = vdwg.mxu0
  %v3410 = vpack.c.bf16 %v3405, %v3405
  %s3411 = scalar_lea.vmem %s7, 192
  %v3412 = vld [vmem:[%s3411] sm:$0xf]
  %v3413 = vld [vmem:[%s3411 + $0x4] sm:$0xf]
  %v3414 = vld [vmem:[%s3411 + $0x8] sm:$0xf]
  %v3415 = vld [vmem:[%s3411 + $0xc] sm:$0xf]
  %v3416 = vld [vmem:[%s3411 + $0x10] sm:$0xf]
  %v3417 = vld [vmem:[%s3411 + $0x14] sm:$0xf]
  %v3418 = vld [vmem:[%s3411 + $0x18] sm:$0xf]
  %v3419 = vld [vmem:[%s3411 + $0x1c] sm:$0xf]
  %v3428 = vunpack.c.l.b16 %v3412
  %v3429 = vunpack.c.l.b16 %v3413
  %v3430 = vunpack.c.l.b16 %v3414
  %v3431 = vunpack.c.l.b16 %v3415
  %v3432 = vunpack.c.l.b16 %v3416
  %v3433 = vunpack.c.l.b16 %v3417
  %v3434 = vunpack.c.l.b16 %v3418
  %v3435 = vunpack.c.l.b16 %v3419
  %v3436 = vpack.c.b16 %v3429, %v3428
  %v3437 = vpack.c.b16 %v3431, %v3430
  %v3438 = vpack.c.b16 %v3433, %v3432
  %v3439 = vpack.c.b16 %v3435, %v3434
  %v3445 = vsel %vm2699, %v3410, 0
  %3447 = vmatprep.subr.bf16.mxu0 0
  %3448 = vmatpush1.bf16.msra.mxu0 0
  %3449 = vmatprep.subr.bf16.mxu0 0
  %3450 = vmatpush1.bf16.msra.mxu0 0
  %3451 = vmatprep.subr.bf16.mxu0 0
  %3452 = vmatpush1.bf16.msra.mxu0 0
  %3453 = vmatprep.subr.bf16.mxu0 0
  %3454 = vmatpush1.bf16.msra.mxu0 0
  %3455 = vmatprep.subr.bf16.mxu0 0
  %3456 = vmatpush1.bf16.msra.mxu0 %v3439
  %3457 = vmatprep.subr.bf16.mxu0 0
  %3458 = vmatpush1.bf16.msra.mxu0 %v3438
  %3459 = vmatprep.subr.bf16.mxu0 0
  %3460 = vmatpush1.bf16.msra.mxu0 %v3437
  %3461 = vmatprep.subr.bf16.mxu0 0
  %3462 = vmatpush1.bf16.msra.mxu0 %v3436
  %3463 = vmatprep.subr.bf16.mxu0 0
  %3464 = vmatpush2.bf16.msra.mxu0 0
  %3465 = vmatprep.subr.bf16.mxu0 0
  %3466 = vmatpush2.bf16.msra.mxu0 0
  %3467 = vmatprep.subr.bf16.mxu0 0
  %3468 = vmatpush2.bf16.msra.mxu0 0
  %3469 = vmatprep.subr.bf16.mxu0 0
  %3470 = vmatpush2.bf16.msra.mxu0 0
  %3471 = vmatprep.subr.bf16.mxu0 0
  %3472 = vmatpush2.bf16.msra.mxu0 0
  %3473 = vmatprep.subr.bf16.mxu0 0
  %3474 = vmatpush2.bf16.msra.mxu0 0
  %3475 = vmatprep.subr.bf16.mxu0 0
  %3476 = vmatpush2.bf16.msra.mxu0 0
  %3477 = vmatprep.subr.bf16.mxu0 0
  %3478 = vmatpush2.bf16.msra.mxu0 0
  %3479 = vmatprep.mubr.bf16.mxu0 0
  %3480 = vmatmul.mubr.bf16.gmra.mxu0 %v3445
  %v3481 = vpop.f32.mrf.mxu0
  %v3482 = vadd.f32 0.0, %v3481
  %v3483 = vpop.f32.mrf.mxu0
  %v3484 = vpop.f32.mrf.mxu0
  %v3485 = vpop.f32.mrf.mxu0
  %3486 = vdwg.mxu0
  %v3487 = vadd.f32 %v3364, %v3482
  %s3488 = scalar_lea.vmem %s6, 28
  %v3489 = vld [vmem:[%s3488] sm:$0xf]
  %v3491 = vsel %vm381, %v3489, 0
  %3493 = vmatprep.subr.bf16.mxu0 0
  %3494 = vmatpush1.bf16.msra.mxu0 0
  %3495 = vmatprep.subr.bf16.mxu0 0
  %3496 = vmatpush1.bf16.msra.mxu0 0
  %3497 = vmatprep.subr.bf16.mxu0 0
  %3498 = vmatpush1.bf16.msra.mxu0 0
  %3499 = vmatprep.subr.bf16.mxu0 0
  %3500 = vmatpush1.bf16.msra.mxu0 0
  %3501 = vmatprep.subr.bf16.mxu0 0
  %3502 = vmatpush1.bf16.msra.mxu0 0
  %3503 = vmatprep.subr.bf16.mxu0 0
  %3504 = vmatpush1.bf16.msra.mxu0 0
  %3505 = vmatprep.subr.bf16.mxu0 0
  %3506 = vmatpush1.bf16.msra.mxu0 %v2620
  %3507 = vmatprep.subr.bf16.mxu0 0
  %3508 = vmatpush1.bf16.msra.mxu0 %v2619
  %3509 = vmatprep.subr.bf16.mxu0 0
  %3510 = vmatpush2.bf16.msra.mxu0 0
  %3511 = vmatprep.subr.bf16.mxu0 0
  %3512 = vmatpush2.bf16.msra.mxu0 0
  %3513 = vmatprep.subr.bf16.mxu0 0
  %3514 = vmatpush2.bf16.msra.mxu0 0
  %3515 = vmatprep.subr.bf16.mxu0 0
  %3516 = vmatpush2.bf16.msra.mxu0 0
  %3517 = vmatprep.subr.bf16.mxu0 0
  %3518 = vmatpush2.bf16.msra.mxu0 0
  %3519 = vmatprep.subr.bf16.mxu0 0
  %3520 = vmatpush2.bf16.msra.mxu0 0
  %3521 = vmatprep.subr.bf16.mxu0 0
  %3522 = vmatpush2.bf16.msra.mxu0 0
  %3523 = vmatprep.subr.bf16.mxu0 0
  %3524 = vmatpush2.bf16.msra.mxu0 0
  %3525 = vmatprep.mubr.bf16.mxu0 0
  %3526 = vmatmul.mubr.bf16.gmra.mxu0 %v3491
  %v3527 = vpop.f32.mrf.mxu0
  %v3528 = vadd.f32 0.0, %v3527
  %v3529 = vpop.f32.mrf.mxu0
  %v3530 = vpop.f32.mrf.mxu0
  %v3531 = vpop.f32.mrf.mxu0
  %3532 = vdwg.mxu0
  %v3533 = vpack.c.bf16 %v3528, %v3528
  %s3534 = scalar_lea.vmem %s7, 224
  %v3535 = vld [vmem:[%s3534] sm:$0xf]
  %v3536 = vld [vmem:[%s3534 + $0x4] sm:$0xf]
  %v3537 = vld [vmem:[%s3534 + $0x8] sm:$0xf]
  %v3538 = vld [vmem:[%s3534 + $0xc] sm:$0xf]
  %v3539 = vld [vmem:[%s3534 + $0x10] sm:$0xf]
  %v3540 = vld [vmem:[%s3534 + $0x14] sm:$0xf]
  %v3541 = vld [vmem:[%s3534 + $0x18] sm:$0xf]
  %v3542 = vld [vmem:[%s3534 + $0x1c] sm:$0xf]
  %v3551 = vunpack.c.l.b16 %v3535
  %v3552 = vunpack.c.l.b16 %v3536
  %v3553 = vunpack.c.l.b16 %v3537
  %v3554 = vunpack.c.l.b16 %v3538
  %v3555 = vunpack.c.l.b16 %v3539
  %v3556 = vunpack.c.l.b16 %v3540
  %v3557 = vunpack.c.l.b16 %v3541
  %v3558 = vunpack.c.l.b16 %v3542
  %v3559 = vpack.c.b16 %v3552, %v3551
  %v3560 = vpack.c.b16 %v3554, %v3553
  %v3561 = vpack.c.b16 %v3556, %v3555
  %v3562 = vpack.c.b16 %v3558, %v3557
  %v3568 = vsel %vm2699, %v3533, 0
  %3570 = vmatprep.subr.bf16.mxu0 0
  %3571 = vmatpush1.bf16.msra.mxu0 0
  %3572 = vmatprep.subr.bf16.mxu0 0
  %3573 = vmatpush1.bf16.msra.mxu0 0
  %3574 = vmatprep.subr.bf16.mxu0 0
  %3575 = vmatpush1.bf16.msra.mxu0 0
  %3576 = vmatprep.subr.bf16.mxu0 0
  %3577 = vmatpush1.bf16.msra.mxu0 0
  %3578 = vmatprep.subr.bf16.mxu0 0
  %3579 = vmatpush1.bf16.msra.mxu0 %v3562
  %3580 = vmatprep.subr.bf16.mxu0 0
  %3581 = vmatpush1.bf16.msra.mxu0 %v3561
  %3582 = vmatprep.subr.bf16.mxu0 0
  %3583 = vmatpush1.bf16.msra.mxu0 %v3560
  %3584 = vmatprep.subr.bf16.mxu0 0
  %3585 = vmatpush1.bf16.msra.mxu0 %v3559
  %3586 = vmatprep.subr.bf16.mxu0 0
  %3587 = vmatpush2.bf16.msra.mxu0 0
  %3588 = vmatprep.subr.bf16.mxu0 0
  %3589 = vmatpush2.bf16.msra.mxu0 0
  %3590 = vmatprep.subr.bf16.mxu0 0
  %3591 = vmatpush2.bf16.msra.mxu0 0
  %3592 = vmatprep.subr.bf16.mxu0 0
  %3593 = vmatpush2.bf16.msra.mxu0 0
  %3594 = vmatprep.subr.bf16.mxu0 0
  %3595 = vmatpush2.bf16.msra.mxu0 0
  %3596 = vmatprep.subr.bf16.mxu0 0
  %3597 = vmatpush2.bf16.msra.mxu0 0
  %3598 = vmatprep.subr.bf16.mxu0 0
  %3599 = vmatpush2.bf16.msra.mxu0 0
  %3600 = vmatprep.subr.bf16.mxu0 0
  %3601 = vmatpush2.bf16.msra.mxu0 0
  %3602 = vmatprep.mubr.bf16.mxu0 0
  %3603 = vmatmul.mubr.bf16.gmra.mxu0 %v3568
  %v3604 = vpop.f32.mrf.mxu0
  %v3605 = vadd.f32 0.0, %v3604
  %v3606 = vpop.f32.mrf.mxu0
  %v3607 = vpop.f32.mrf.mxu0
  %v3608 = vpop.f32.mrf.mxu0
  %3609 = vdwg.mxu0
  %v3610 = vadd.f32 %v3487, %v3605
  %s3611 = scalar_lea.vmem %s6, 32
  %v3612 = vld [vmem:[%s3611] sm:$0xf]
  %v3614 = vsel %vm381, %v3612, 0
  %3616 = vmatprep.subr.bf16.mxu0 0
  %3617 = vmatpush1.bf16.msra.mxu0 0
  %3618 = vmatprep.subr.bf16.mxu0 0
  %3619 = vmatpush1.bf16.msra.mxu0 0
  %3620 = vmatprep.subr.bf16.mxu0 0
  %3621 = vmatpush1.bf16.msra.mxu0 0
  %3622 = vmatprep.subr.bf16.mxu0 0
  %3623 = vmatpush1.bf16.msra.mxu0 0
  %3624 = vmatprep.subr.bf16.mxu0 0
  %3625 = vmatpush1.bf16.msra.mxu0 0
  %3626 = vmatprep.subr.bf16.mxu0 0
  %3627 = vmatpush1.bf16.msra.mxu0 0
  %3628 = vmatprep.subr.bf16.mxu0 0
  %3629 = vmatpush1.bf16.msra.mxu0 %v2620
  %3630 = vmatprep.subr.bf16.mxu0 0
  %3631 = vmatpush1.bf16.msra.mxu0 %v2619
  %3632 = vmatprep.subr.bf16.mxu0 0
  %3633 = vmatpush2.bf16.msra.mxu0 0
  %3634 = vmatprep.subr.bf16.mxu0 0
  %3635 = vmatpush2.bf16.msra.mxu0 0
  %3636 = vmatprep.subr.bf16.mxu0 0
  %3637 = vmatpush2.bf16.msra.mxu0 0
  %3638 = vmatprep.subr.bf16.mxu0 0
  %3639 = vmatpush2.bf16.msra.mxu0 0
  %3640 = vmatprep.subr.bf16.mxu0 0
  %3641 = vmatpush2.bf16.msra.mxu0 0
  %3642 = vmatprep.subr.bf16.mxu0 0
  %3643 = vmatpush2.bf16.msra.mxu0 0
  %3644 = vmatprep.subr.bf16.mxu0 0
  %3645 = vmatpush2.bf16.msra.mxu0 0
  %3646 = vmatprep.subr.bf16.mxu0 0
  %3647 = vmatpush2.bf16.msra.mxu0 0
  %3648 = vmatprep.mubr.bf16.mxu0 0
  %3649 = vmatmul.mubr.bf16.gmra.mxu0 %v3614
  %v3650 = vpop.f32.mrf.mxu0
  %v3651 = vadd.f32 0.0, %v3650
  %v3652 = vpop.f32.mrf.mxu0
  %v3653 = vpop.f32.mrf.mxu0
  %v3654 = vpop.f32.mrf.mxu0
  %3655 = vdwg.mxu0
  %v3656 = vpack.c.bf16 %v3651, %v3651
  %s3657 = scalar_lea.vmem %s7, 256
  %v3658 = vld [vmem:[%s3657] sm:$0xf]
  %v3659 = vld [vmem:[%s3657 + $0x4] sm:$0xf]
  %v3660 = vld [vmem:[%s3657 + $0x8] sm:$0xf]
  %v3661 = vld [vmem:[%s3657 + $0xc] sm:$0xf]
  %v3662 = vld [vmem:[%s3657 + $0x10] sm:$0xf]
  %v3663 = vld [vmem:[%s3657 + $0x14] sm:$0xf]
  %v3664 = vld [vmem:[%s3657 + $0x18] sm:$0xf]
  %v3665 = vld [vmem:[%s3657 + $0x1c] sm:$0xf]
  %v3674 = vunpack.c.l.b16 %v3658
  %v3675 = vunpack.c.l.b16 %v3659
  %v3676 = vunpack.c.l.b16 %v3660
  %v3677 = vunpack.c.l.b16 %v3661
  %v3678 = vunpack.c.l.b16 %v3662
  %v3679 = vunpack.c.l.b16 %v3663
  %v3680 = vunpack.c.l.b16 %v3664
  %v3681 = vunpack.c.l.b16 %v3665
  %v3682 = vpack.c.b16 %v3675, %v3674
  %v3683 = vpack.c.b16 %v3677, %v3676
  %v3684 = vpack.c.b16 %v3679, %v3678
  %v3685 = vpack.c.b16 %v3681, %v3680
  %v3691 = vsel %vm2699, %v3656, 0
  %3693 = vmatprep.subr.bf16.mxu0 0
  %3694 = vmatpush1.bf16.msra.mxu0 0
  %3695 = vmatprep.subr.bf16.mxu0 0
  %3696 = vmatpush1.bf16.msra.mxu0 0
  %3697 = vmatprep.subr.bf16.mxu0 0
  %3698 = vmatpush1.bf16.msra.mxu0 0
  %3699 = vmatprep.subr.bf16.mxu0 0
  %3700 = vmatpush1.bf16.msra.mxu0 0
  %3701 = vmatprep.subr.bf16.mxu0 0
  %3702 = vmatpush1.bf16.msra.mxu0 %v3685
  %3703 = vmatprep.subr.bf16.mxu0 0
  %3704 = vmatpush1.bf16.msra.mxu0 %v3684
  %3705 = vmatprep.subr.bf16.mxu0 0
  %3706 = vmatpush1.bf16.msra.mxu0 %v3683
  %3707 = vmatprep.subr.bf16.mxu0 0
  %3708 = vmatpush1.bf16.msra.mxu0 %v3682
  %3709 = vmatprep.subr.bf16.mxu0 0
  %3710 = vmatpush2.bf16.msra.mxu0 0
  %3711 = vmatprep.subr.bf16.mxu0 0
  %3712 = vmatpush2.bf16.msra.mxu0 0
  %3713 = vmatprep.subr.bf16.mxu0 0
  %3714 = vmatpush2.bf16.msra.mxu0 0
  %3715 = vmatprep.subr.bf16.mxu0 0
  %3716 = vmatpush2.bf16.msra.mxu0 0
  %3717 = vmatprep.subr.bf16.mxu0 0
  %3718 = vmatpush2.bf16.msra.mxu0 0
  %3719 = vmatprep.subr.bf16.mxu0 0
  %3720 = vmatpush2.bf16.msra.mxu0 0
  %3721 = vmatprep.subr.bf16.mxu0 0
  %3722 = vmatpush2.bf16.msra.mxu0 0
  %3723 = vmatprep.subr.bf16.mxu0 0
  %3724 = vmatpush2.bf16.msra.mxu0 0
  %3725 = vmatprep.mubr.bf16.mxu0 0
  %3726 = vmatmul.mubr.bf16.gmra.mxu0 %v3691
  %v3727 = vpop.f32.mrf.mxu0
  %v3728 = vadd.f32 0.0, %v3727
  %v3729 = vpop.f32.mrf.mxu0
  %v3730 = vpop.f32.mrf.mxu0
  %v3731 = vpop.f32.mrf.mxu0
  %3732 = vdwg.mxu0
  %v3733 = vadd.f32 %v3610, %v3728
  %s3734 = scalar_lea.vmem %s6, 36
  %v3735 = vld [vmem:[%s3734] sm:$0xf]
  %v3737 = vsel %vm381, %v3735, 0
  %3739 = vmatprep.subr.bf16.mxu0 0
  %3740 = vmatpush1.bf16.msra.mxu0 0
  %3741 = vmatprep.subr.bf16.mxu0 0
  %3742 = vmatpush1.bf16.msra.mxu0 0
  %3743 = vmatprep.subr.bf16.mxu0 0
  %3744 = vmatpush1.bf16.msra.mxu0 0
  %3745 = vmatprep.subr.bf16.mxu0 0
  %3746 = vmatpush1.bf16.msra.mxu0 0
  %3747 = vmatprep.subr.bf16.mxu0 0
  %3748 = vmatpush1.bf16.msra.mxu0 0
  %3749 = vmatprep.subr.bf16.mxu0 0
  %3750 = vmatpush1.bf16.msra.mxu0 0
  %3751 = vmatprep.subr.bf16.mxu0 0
  %3752 = vmatpush1.bf16.msra.mxu0 %v2620
  %3753 = vmatprep.subr.bf16.mxu0 0
  %3754 = vmatpush1.bf16.msra.mxu0 %v2619
  %3755 = vmatprep.subr.bf16.mxu0 0
  %3756 = vmatpush2.bf16.msra.mxu0 0
  %3757 = vmatprep.subr.bf16.mxu0 0
  %3758 = vmatpush2.bf16.msra.mxu0 0
  %3759 = vmatprep.subr.bf16.mxu0 0
  %3760 = vmatpush2.bf16.msra.mxu0 0
  %3761 = vmatprep.subr.bf16.mxu0 0
  %3762 = vmatpush2.bf16.msra.mxu0 0
  %3763 = vmatprep.subr.bf16.mxu0 0
  %3764 = vmatpush2.bf16.msra.mxu0 0
  %3765 = vmatprep.subr.bf16.mxu0 0
  %3766 = vmatpush2.bf16.msra.mxu0 0
  %3767 = vmatprep.subr.bf16.mxu0 0
  %3768 = vmatpush2.bf16.msra.mxu0 0
  %3769 = vmatprep.subr.bf16.mxu0 0
  %3770 = vmatpush2.bf16.msra.mxu0 0
  %3771 = vmatprep.mubr.bf16.mxu0 0
  %3772 = vmatmul.mubr.bf16.gmra.mxu0 %v3737
  %v3773 = vpop.f32.mrf.mxu0
  %v3774 = vadd.f32 0.0, %v3773
  %v3775 = vpop.f32.mrf.mxu0
  %v3776 = vpop.f32.mrf.mxu0
  %v3777 = vpop.f32.mrf.mxu0
  %3778 = vdwg.mxu0
  %v3779 = vpack.c.bf16 %v3774, %v3774
  %s3780 = scalar_lea.vmem %s7, 288
  %v3781 = vld [vmem:[%s3780] sm:$0xf]
  %v3782 = vld [vmem:[%s3780 + $0x4] sm:$0xf]
  %v3783 = vld [vmem:[%s3780 + $0x8] sm:$0xf]
  %v3784 = vld [vmem:[%s3780 + $0xc] sm:$0xf]
  %v3785 = vld [vmem:[%s3780 + $0x10] sm:$0xf]
  %v3786 = vld [vmem:[%s3780 + $0x14] sm:$0xf]
  %v3787 = vld [vmem:[%s3780 + $0x18] sm:$0xf]
  %v3788 = vld [vmem:[%s3780 + $0x1c] sm:$0xf]
  %v3797 = vunpack.c.l.b16 %v3781
  %v3798 = vunpack.c.l.b16 %v3782
  %v3799 = vunpack.c.l.b16 %v3783
  %v3800 = vunpack.c.l.b16 %v3784
  %v3801 = vunpack.c.l.b16 %v3785
  %v3802 = vunpack.c.l.b16 %v3786
  %v3803 = vunpack.c.l.b16 %v3787
  %v3804 = vunpack.c.l.b16 %v3788
  %v3805 = vpack.c.b16 %v3798, %v3797
  %v3806 = vpack.c.b16 %v3800, %v3799
  %v3807 = vpack.c.b16 %v3802, %v3801
  %v3808 = vpack.c.b16 %v3804, %v3803
  %v3814 = vsel %vm2699, %v3779, 0
  %3816 = vmatprep.subr.bf16.mxu0 0
  %3817 = vmatpush1.bf16.msra.mxu0 0
  %3818 = vmatprep.subr.bf16.mxu0 0
  %3819 = vmatpush1.bf16.msra.mxu0 0
  %3820 = vmatprep.subr.bf16.mxu0 0
  %3821 = vmatpush1.bf16.msra.mxu0 0
  %3822 = vmatprep.subr.bf16.mxu0 0
  %3823 = vmatpush1.bf16.msra.mxu0 0
  %3824 = vmatprep.subr.bf16.mxu0 0
  %3825 = vmatpush1.bf16.msra.mxu0 %v3808
  %3826 = vmatprep.subr.bf16.mxu0 0
  %3827 = vmatpush1.bf16.msra.mxu0 %v3807
  %3828 = vmatprep.subr.bf16.mxu0 0
  %3829 = vmatpush1.bf16.msra.mxu0 %v3806
  %3830 = vmatprep.subr.bf16.mxu0 0
  %3831 = vmatpush1.bf16.msra.mxu0 %v3805
  %3832 = vmatprep.subr.bf16.mxu0 0
  %3833 = vmatpush2.bf16.msra.mxu0 0
  %3834 = vmatprep.subr.bf16.mxu0 0
  %3835 = vmatpush2.bf16.msra.mxu0 0
  %3836 = vmatprep.subr.bf16.mxu0 0
  %3837 = vmatpush2.bf16.msra.mxu0 0
  %3838 = vmatprep.subr.bf16.mxu0 0
  %3839 = vmatpush2.bf16.msra.mxu0 0
  %3840 = vmatprep.subr.bf16.mxu0 0
  %3841 = vmatpush2.bf16.msra.mxu0 0
  %3842 = vmatprep.subr.bf16.mxu0 0
  %3843 = vmatpush2.bf16.msra.mxu0 0
  %3844 = vmatprep.subr.bf16.mxu0 0
  %3845 = vmatpush2.bf16.msra.mxu0 0
  %3846 = vmatprep.subr.bf16.mxu0 0
  %3847 = vmatpush2.bf16.msra.mxu0 0
  %3848 = vmatprep.mubr.bf16.mxu0 0
  %3849 = vmatmul.mubr.bf16.gmra.mxu0 %v3814
  %v3850 = vpop.f32.mrf.mxu0
  %v3851 = vadd.f32 0.0, %v3850
  %v3852 = vpop.f32.mrf.mxu0
  %v3853 = vpop.f32.mrf.mxu0
  %v3854 = vpop.f32.mrf.mxu0
  %3855 = vdwg.mxu0
  %v3856 = vadd.f32 %v3733, %v3851
  %s3857 = scalar_lea.vmem %s6, 40
  %v3858 = vld [vmem:[%s3857] sm:$0xf]
  %v3860 = vsel %vm381, %v3858, 0
  %3862 = vmatprep.subr.bf16.mxu0 0
  %3863 = vmatpush1.bf16.msra.mxu0 0
  %3864 = vmatprep.subr.bf16.mxu0 0
  %3865 = vmatpush1.bf16.msra.mxu0 0
  %3866 = vmatprep.subr.bf16.mxu0 0
  %3867 = vmatpush1.bf16.msra.mxu0 0
  %3868 = vmatprep.subr.bf16.mxu0 0
  %3869 = vmatpush1.bf16.msra.mxu0 0
  %3870 = vmatprep.subr.bf16.mxu0 0
  %3871 = vmatpush1.bf16.msra.mxu0 0
  %3872 = vmatprep.subr.bf16.mxu0 0
  %3873 = vmatpush1.bf16.msra.mxu0 0
  %3874 = vmatprep.subr.bf16.mxu0 0
  %3875 = vmatpush1.bf16.msra.mxu0 %v2620
  %3876 = vmatprep.subr.bf16.mxu0 0
  %3877 = vmatpush1.bf16.msra.mxu0 %v2619
  %3878 = vmatprep.subr.bf16.mxu0 0
  %3879 = vmatpush2.bf16.msra.mxu0 0
  %3880 = vmatprep.subr.bf16.mxu0 0
  %3881 = vmatpush2.bf16.msra.mxu0 0
  %3882 = vmatprep.subr.bf16.mxu0 0
  %3883 = vmatpush2.bf16.msra.mxu0 0
  %3884 = vmatprep.subr.bf16.mxu0 0
  %3885 = vmatpush2.bf16.msra.mxu0 0
  %3886 = vmatprep.subr.bf16.mxu0 0
  %3887 = vmatpush2.bf16.msra.mxu0 0
  %3888 = vmatprep.subr.bf16.mxu0 0
  %3889 = vmatpush2.bf16.msra.mxu0 0
  %3890 = vmatprep.subr.bf16.mxu0 0
  %3891 = vmatpush2.bf16.msra.mxu0 0
  %3892 = vmatprep.subr.bf16.mxu0 0
  %3893 = vmatpush2.bf16.msra.mxu0 0
  %3894 = vmatprep.mubr.bf16.mxu0 0
  %3895 = vmatmul.mubr.bf16.gmra.mxu0 %v3860
  %v3896 = vpop.f32.mrf.mxu0
  %v3897 = vadd.f32 0.0, %v3896
  %v3898 = vpop.f32.mrf.mxu0
  %v3899 = vpop.f32.mrf.mxu0
  %v3900 = vpop.f32.mrf.mxu0
  %3901 = vdwg.mxu0
  %v3902 = vpack.c.bf16 %v3897, %v3897
  %s3903 = scalar_lea.vmem %s7, 320
  %v3904 = vld [vmem:[%s3903] sm:$0xf]
  %v3905 = vld [vmem:[%s3903 + $0x4] sm:$0xf]
  %v3906 = vld [vmem:[%s3903 + $0x8] sm:$0xf]
  %v3907 = vld [vmem:[%s3903 + $0xc] sm:$0xf]
  %v3908 = vld [vmem:[%s3903 + $0x10] sm:$0xf]
  %v3909 = vld [vmem:[%s3903 + $0x14] sm:$0xf]
  %v3910 = vld [vmem:[%s3903 + $0x18] sm:$0xf]
  %v3911 = vld [vmem:[%s3903 + $0x1c] sm:$0xf]
  %v3920 = vunpack.c.l.b16 %v3904
  %v3921 = vunpack.c.l.b16 %v3905
  %v3922 = vunpack.c.l.b16 %v3906
  %v3923 = vunpack.c.l.b16 %v3907
  %v3924 = vunpack.c.l.b16 %v3908
  %v3925 = vunpack.c.l.b16 %v3909
  %v3926 = vunpack.c.l.b16 %v3910
  %v3927 = vunpack.c.l.b16 %v3911
  %v3928 = vpack.c.b16 %v3921, %v3920
  %v3929 = vpack.c.b16 %v3923, %v3922
  %v3930 = vpack.c.b16 %v3925, %v3924
  %v3931 = vpack.c.b16 %v3927, %v3926
  %v3937 = vsel %vm2699, %v3902, 0
  %3939 = vmatprep.subr.bf16.mxu0 0
  %3940 = vmatpush1.bf16.msra.mxu0 0
  %3941 = vmatprep.subr.bf16.mxu0 0
  %3942 = vmatpush1.bf16.msra.mxu0 0
  %3943 = vmatprep.subr.bf16.mxu0 0
  %3944 = vmatpush1.bf16.msra.mxu0 0
  %3945 = vmatprep.subr.bf16.mxu0 0
  %3946 = vmatpush1.bf16.msra.mxu0 0
  %3947 = vmatprep.subr.bf16.mxu0 0
  %3948 = vmatpush1.bf16.msra.mxu0 %v3931
  %3949 = vmatprep.subr.bf16.mxu0 0
  %3950 = vmatpush1.bf16.msra.mxu0 %v3930
  %3951 = vmatprep.subr.bf16.mxu0 0
  %3952 = vmatpush1.bf16.msra.mxu0 %v3929
  %3953 = vmatprep.subr.bf16.mxu0 0
  %3954 = vmatpush1.bf16.msra.mxu0 %v3928
  %3955 = vmatprep.subr.bf16.mxu0 0
  %3956 = vmatpush2.bf16.msra.mxu0 0
  %3957 = vmatprep.subr.bf16.mxu0 0
  %3958 = vmatpush2.bf16.msra.mxu0 0
  %3959 = vmatprep.subr.bf16.mxu0 0
  %3960 = vmatpush2.bf16.msra.mxu0 0
  %3961 = vmatprep.subr.bf16.mxu0 0
  %3962 = vmatpush2.bf16.msra.mxu0 0
  %3963 = vmatprep.subr.bf16.mxu0 0
  %3964 = vmatpush2.bf16.msra.mxu0 0
  %3965 = vmatprep.subr.bf16.mxu0 0
  %3966 = vmatpush2.bf16.msra.mxu0 0
  %3967 = vmatprep.subr.bf16.mxu0 0
  %3968 = vmatpush2.bf16.msra.mxu0 0
  %3969 = vmatprep.subr.bf16.mxu0 0
  %3970 = vmatpush2.bf16.msra.mxu0 0
  %3971 = vmatprep.mubr.bf16.mxu0 0
  %3972 = vmatmul.mubr.bf16.gmra.mxu0 %v3937
  %v3973 = vpop.f32.mrf.mxu0
  %v3974 = vadd.f32 0.0, %v3973
  %v3975 = vpop.f32.mrf.mxu0
  %v3976 = vpop.f32.mrf.mxu0
  %v3977 = vpop.f32.mrf.mxu0
  %3978 = vdwg.mxu0
  %v3979 = vadd.f32 %v3856, %v3974
  %s3980 = scalar_lea.vmem %s6, 44
  %v3981 = vld [vmem:[%s3980] sm:$0xf]
  %v3983 = vsel %vm381, %v3981, 0
  %3985 = vmatprep.subr.bf16.mxu0 0
  %3986 = vmatpush1.bf16.msra.mxu0 0
  %3987 = vmatprep.subr.bf16.mxu0 0
  %3988 = vmatpush1.bf16.msra.mxu0 0
  %3989 = vmatprep.subr.bf16.mxu0 0
  %3990 = vmatpush1.bf16.msra.mxu0 0
  %3991 = vmatprep.subr.bf16.mxu0 0
  %3992 = vmatpush1.bf16.msra.mxu0 0
  %3993 = vmatprep.subr.bf16.mxu0 0
  %3994 = vmatpush1.bf16.msra.mxu0 0
  %3995 = vmatprep.subr.bf16.mxu0 0
  %3996 = vmatpush1.bf16.msra.mxu0 0
  %3997 = vmatprep.subr.bf16.mxu0 0
  %3998 = vmatpush1.bf16.msra.mxu0 %v2620
  %3999 = vmatprep.subr.bf16.mxu0 0
  %4000 = vmatpush1.bf16.msra.mxu0 %v2619
  %4001 = vmatprep.subr.bf16.mxu0 0
  %4002 = vmatpush2.bf16.msra.mxu0 0
  %4003 = vmatprep.subr.bf16.mxu0 0
  %4004 = vmatpush2.bf16.msra.mxu0 0
  %4005 = vmatprep.subr.bf16.mxu0 0
  %4006 = vmatpush2.bf16.msra.mxu0 0
  %4007 = vmatprep.subr.bf16.mxu0 0
  %4008 = vmatpush2.bf16.msra.mxu0 0
  %4009 = vmatprep.subr.bf16.mxu0 0
  %4010 = vmatpush2.bf16.msra.mxu0 0
  %4011 = vmatprep.subr.bf16.mxu0 0
  %4012 = vmatpush2.bf16.msra.mxu0 0
  %4013 = vmatprep.subr.bf16.mxu0 0
  %4014 = vmatpush2.bf16.msra.mxu0 0
  %4015 = vmatprep.subr.bf16.mxu0 0
  %4016 = vmatpush2.bf16.msra.mxu0 0
  %4017 = vmatprep.mubr.bf16.mxu0 0
  %4018 = vmatmul.mubr.bf16.gmra.mxu0 %v3983
  %v4019 = vpop.f32.mrf.mxu0
  %v4020 = vadd.f32 0.0, %v4019
  %v4021 = vpop.f32.mrf.mxu0
  %v4022 = vpop.f32.mrf.mxu0
  %v4023 = vpop.f32.mrf.mxu0
  %4024 = vdwg.mxu0
  %v4025 = vpack.c.bf16 %v4020, %v4020
  %s4026 = scalar_lea.vmem %s7, 352
  %v4027 = vld [vmem:[%s4026] sm:$0xf]
  %v4028 = vld [vmem:[%s4026 + $0x4] sm:$0xf]
  %v4029 = vld [vmem:[%s4026 + $0x8] sm:$0xf]
  %v4030 = vld [vmem:[%s4026 + $0xc] sm:$0xf]
  %v4031 = vld [vmem:[%s4026 + $0x10] sm:$0xf]
  %v4032 = vld [vmem:[%s4026 + $0x14] sm:$0xf]
  %v4033 = vld [vmem:[%s4026 + $0x18] sm:$0xf]
  %v4034 = vld [vmem:[%s4026 + $0x1c] sm:$0xf]
  %v4043 = vunpack.c.l.b16 %v4027
  %v4044 = vunpack.c.l.b16 %v4028
  %v4045 = vunpack.c.l.b16 %v4029
  %v4046 = vunpack.c.l.b16 %v4030
  %v4047 = vunpack.c.l.b16 %v4031
  %v4048 = vunpack.c.l.b16 %v4032
  %v4049 = vunpack.c.l.b16 %v4033
  %v4050 = vunpack.c.l.b16 %v4034
  %v4051 = vpack.c.b16 %v4044, %v4043
  %v4052 = vpack.c.b16 %v4046, %v4045
  %v4053 = vpack.c.b16 %v4048, %v4047
  %v4054 = vpack.c.b16 %v4050, %v4049
  %v4060 = vsel %vm2699, %v4025, 0
  %4062 = vmatprep.subr.bf16.mxu0 0
  %4063 = vmatpush1.bf16.msra.mxu0 0
  %4064 = vmatprep.subr.bf16.mxu0 0
  %4065 = vmatpush1.bf16.msra.mxu0 0
  %4066 = vmatprep.subr.bf16.mxu0 0
  %4067 = vmatpush1.bf16.msra.mxu0 0
  %4068 = vmatprep.subr.bf16.mxu0 0
  %4069 = vmatpush1.bf16.msra.mxu0 0
  %4070 = vmatprep.subr.bf16.mxu0 0
  %4071 = vmatpush1.bf16.msra.mxu0 %v4054
  %4072 = vmatprep.subr.bf16.mxu0 0
  %4073 = vmatpush1.bf16.msra.mxu0 %v4053
  %4074 = vmatprep.subr.bf16.mxu0 0
  %4075 = vmatpush1.bf16.msra.mxu0 %v4052
  %4076 = vmatprep.subr.bf16.mxu0 0
  %4077 = vmatpush1.bf16.msra.mxu0 %v4051
  %4078 = vmatprep.subr.bf16.mxu0 0
  %4079 = vmatpush2.bf16.msra.mxu0 0
  %4080 = vmatprep.subr.bf16.mxu0 0
  %4081 = vmatpush2.bf16.msra.mxu0 0
  %4082 = vmatprep.subr.bf16.mxu0 0
  %4083 = vmatpush2.bf16.msra.mxu0 0
  %4084 = vmatprep.subr.bf16.mxu0 0
  %4085 = vmatpush2.bf16.msra.mxu0 0
  %4086 = vmatprep.subr.bf16.mxu0 0
  %4087 = vmatpush2.bf16.msra.mxu0 0
  %4088 = vmatprep.subr.bf16.mxu0 0
  %4089 = vmatpush2.bf16.msra.mxu0 0
  %4090 = vmatprep.subr.bf16.mxu0 0
  %4091 = vmatpush2.bf16.msra.mxu0 0
  %4092 = vmatprep.subr.bf16.mxu0 0
  %4093 = vmatpush2.bf16.msra.mxu0 0
  %4094 = vmatprep.mubr.bf16.mxu0 0
  %4095 = vmatmul.mubr.bf16.gmra.mxu0 %v4060
  %v4096 = vpop.f32.mrf.mxu0
  %v4097 = vadd.f32 0.0, %v4096
  %v4098 = vpop.f32.mrf.mxu0
  %v4099 = vpop.f32.mrf.mxu0
  %v4100 = vpop.f32.mrf.mxu0
  %4101 = vdwg.mxu0
  %v4102 = vadd.f32 %v3979, %v4097
  %s4103 = scalar_lea.vmem %s6, 48
  %v4104 = vld [vmem:[%s4103] sm:$0xf]
  %v4106 = vsel %vm381, %v4104, 0
  %4108 = vmatprep.subr.bf16.mxu0 0
  %4109 = vmatpush1.bf16.msra.mxu0 0
  %4110 = vmatprep.subr.bf16.mxu0 0
  %4111 = vmatpush1.bf16.msra.mxu0 0
  %4112 = vmatprep.subr.bf16.mxu0 0
  %4113 = vmatpush1.bf16.msra.mxu0 0
  %4114 = vmatprep.subr.bf16.mxu0 0
  %4115 = vmatpush1.bf16.msra.mxu0 0
  %4116 = vmatprep.subr.bf16.mxu0 0
  %4117 = vmatpush1.bf16.msra.mxu0 0
  %4118 = vmatprep.subr.bf16.mxu0 0
  %4119 = vmatpush1.bf16.msra.mxu0 0
  %4120 = vmatprep.subr.bf16.mxu0 0
  %4121 = vmatpush1.bf16.msra.mxu0 %v2620
  %4122 = vmatprep.subr.bf16.mxu0 0
  %4123 = vmatpush1.bf16.msra.mxu0 %v2619
  %4124 = vmatprep.subr.bf16.mxu0 0
  %4125 = vmatpush2.bf16.msra.mxu0 0
  %4126 = vmatprep.subr.bf16.mxu0 0
  %4127 = vmatpush2.bf16.msra.mxu0 0
  %4128 = vmatprep.subr.bf16.mxu0 0
  %4129 = vmatpush2.bf16.msra.mxu0 0
  %4130 = vmatprep.subr.bf16.mxu0 0
  %4131 = vmatpush2.bf16.msra.mxu0 0
  %4132 = vmatprep.subr.bf16.mxu0 0
  %4133 = vmatpush2.bf16.msra.mxu0 0
  %4134 = vmatprep.subr.bf16.mxu0 0
  %4135 = vmatpush2.bf16.msra.mxu0 0
  %4136 = vmatprep.subr.bf16.mxu0 0
  %4137 = vmatpush2.bf16.msra.mxu0 0
  %4138 = vmatprep.subr.bf16.mxu0 0
  %4139 = vmatpush2.bf16.msra.mxu0 0
  %4140 = vmatprep.mubr.bf16.mxu0 0
  %4141 = vmatmul.mubr.bf16.gmra.mxu0 %v4106
  %v4142 = vpop.f32.mrf.mxu0
  %v4143 = vadd.f32 0.0, %v4142
  %v4144 = vpop.f32.mrf.mxu0
  %v4145 = vpop.f32.mrf.mxu0
  %v4146 = vpop.f32.mrf.mxu0
  %4147 = vdwg.mxu0
  %v4148 = vpack.c.bf16 %v4143, %v4143
  %s4149 = scalar_lea.vmem %s7, 384
  %v4150 = vld [vmem:[%s4149] sm:$0xf]
  %v4151 = vld [vmem:[%s4149 + $0x4] sm:$0xf]
  %v4152 = vld [vmem:[%s4149 + $0x8] sm:$0xf]
  %v4153 = vld [vmem:[%s4149 + $0xc] sm:$0xf]
  %v4154 = vld [vmem:[%s4149 + $0x10] sm:$0xf]
  %v4155 = vld [vmem:[%s4149 + $0x14] sm:$0xf]
  %v4156 = vld [vmem:[%s4149 + $0x18] sm:$0xf]
  %v4157 = vld [vmem:[%s4149 + $0x1c] sm:$0xf]
  %v4166 = vunpack.c.l.b16 %v4150
  %v4167 = vunpack.c.l.b16 %v4151
  %v4168 = vunpack.c.l.b16 %v4152
  %v4169 = vunpack.c.l.b16 %v4153
  %v4170 = vunpack.c.l.b16 %v4154
  %v4171 = vunpack.c.l.b16 %v4155
  %v4172 = vunpack.c.l.b16 %v4156
  %v4173 = vunpack.c.l.b16 %v4157
  %v4174 = vpack.c.b16 %v4167, %v4166
  %v4175 = vpack.c.b16 %v4169, %v4168
  %v4176 = vpack.c.b16 %v4171, %v4170
  %v4177 = vpack.c.b16 %v4173, %v4172
  %v4183 = vsel %vm2699, %v4148, 0
  %4185 = vmatprep.subr.bf16.mxu0 0
  %4186 = vmatpush1.bf16.msra.mxu0 0
  %4187 = vmatprep.subr.bf16.mxu0 0
  %4188 = vmatpush1.bf16.msra.mxu0 0
  %4189 = vmatprep.subr.bf16.mxu0 0
  %4190 = vmatpush1.bf16.msra.mxu0 0
  %4191 = vmatprep.subr.bf16.mxu0 0
  %4192 = vmatpush1.bf16.msra.mxu0 0
  %4193 = vmatprep.subr.bf16.mxu0 0
  %4194 = vmatpush1.bf16.msra.mxu0 %v4177
  %4195 = vmatprep.subr.bf16.mxu0 0
  %4196 = vmatpush1.bf16.msra.mxu0 %v4176
  %4197 = vmatprep.subr.bf16.mxu0 0
  %4198 = vmatpush1.bf16.msra.mxu0 %v4175
  %4199 = vmatprep.subr.bf16.mxu0 0
  %4200 = vmatpush1.bf16.msra.mxu0 %v4174
  %4201 = vmatprep.subr.bf16.mxu0 0
  %4202 = vmatpush2.bf16.msra.mxu0 0
  %4203 = vmatprep.subr.bf16.mxu0 0
  %4204 = vmatpush2.bf16.msra.mxu0 0
  %4205 = vmatprep.subr.bf16.mxu0 0
  %4206 = vmatpush2.bf16.msra.mxu0 0
  %4207 = vmatprep.subr.bf16.mxu0 0
  %4208 = vmatpush2.bf16.msra.mxu0 0
  %4209 = vmatprep.subr.bf16.mxu0 0
  %4210 = vmatpush2.bf16.msra.mxu0 0
  %4211 = vmatprep.subr.bf16.mxu0 0
  %4212 = vmatpush2.bf16.msra.mxu0 0
  %4213 = vmatprep.subr.bf16.mxu0 0
  %4214 = vmatpush2.bf16.msra.mxu0 0
  %4215 = vmatprep.subr.bf16.mxu0 0
  %4216 = vmatpush2.bf16.msra.mxu0 0
  %4217 = vmatprep.mubr.bf16.mxu0 0
  %4218 = vmatmul.mubr.bf16.gmra.mxu0 %v4183
  %v4219 = vpop.f32.mrf.mxu0
  %v4220 = vadd.f32 0.0, %v4219
  %v4221 = vpop.f32.mrf.mxu0
  %v4222 = vpop.f32.mrf.mxu0
  %v4223 = vpop.f32.mrf.mxu0
  %4224 = vdwg.mxu0
  %v4225 = vadd.f32 %v4102, %v4220
  %s4226 = scalar_lea.vmem %s6, 52
  %v4227 = vld [vmem:[%s4226] sm:$0xf]
  %v4229 = vsel %vm381, %v4227, 0
  %4231 = vmatprep.subr.bf16.mxu0 0
  %4232 = vmatpush1.bf16.msra.mxu0 0
  %4233 = vmatprep.subr.bf16.mxu0 0
  %4234 = vmatpush1.bf16.msra.mxu0 0
  %4235 = vmatprep.subr.bf16.mxu0 0
  %4236 = vmatpush1.bf16.msra.mxu0 0
  %4237 = vmatprep.subr.bf16.mxu0 0
  %4238 = vmatpush1.bf16.msra.mxu0 0
  %4239 = vmatprep.subr.bf16.mxu0 0
  %4240 = vmatpush1.bf16.msra.mxu0 0
  %4241 = vmatprep.subr.bf16.mxu0 0
  %4242 = vmatpush1.bf16.msra.mxu0 0
  %4243 = vmatprep.subr.bf16.mxu0 0
  %4244 = vmatpush1.bf16.msra.mxu0 %v2620
  %4245 = vmatprep.subr.bf16.mxu0 0
  %4246 = vmatpush1.bf16.msra.mxu0 %v2619
  %4247 = vmatprep.subr.bf16.mxu0 0
  %4248 = vmatpush2.bf16.msra.mxu0 0
  %4249 = vmatprep.subr.bf16.mxu0 0
  %4250 = vmatpush2.bf16.msra.mxu0 0
  %4251 = vmatprep.subr.bf16.mxu0 0
  %4252 = vmatpush2.bf16.msra.mxu0 0
  %4253 = vmatprep.subr.bf16.mxu0 0
  %4254 = vmatpush2.bf16.msra.mxu0 0
  %4255 = vmatprep.subr.bf16.mxu0 0
  %4256 = vmatpush2.bf16.msra.mxu0 0
  %4257 = vmatprep.subr.bf16.mxu0 0
  %4258 = vmatpush2.bf16.msra.mxu0 0
  %4259 = vmatprep.subr.bf16.mxu0 0
  %4260 = vmatpush2.bf16.msra.mxu0 0
  %4261 = vmatprep.subr.bf16.mxu0 0
  %4262 = vmatpush2.bf16.msra.mxu0 0
  %4263 = vmatprep.mubr.bf16.mxu0 0
  %4264 = vmatmul.mubr.bf16.gmra.mxu0 %v4229
  %v4265 = vpop.f32.mrf.mxu0
  %v4266 = vadd.f32 0.0, %v4265
  %v4267 = vpop.f32.mrf.mxu0
  %v4268 = vpop.f32.mrf.mxu0
  %v4269 = vpop.f32.mrf.mxu0
  %4270 = vdwg.mxu0
  %v4271 = vpack.c.bf16 %v4266, %v4266
  %s4272 = scalar_lea.vmem %s7, 416
  %v4273 = vld [vmem:[%s4272] sm:$0xf]
  %v4274 = vld [vmem:[%s4272 + $0x4] sm:$0xf]
  %v4275 = vld [vmem:[%s4272 + $0x8] sm:$0xf]
  %v4276 = vld [vmem:[%s4272 + $0xc] sm:$0xf]
  %v4277 = vld [vmem:[%s4272 + $0x10] sm:$0xf]
  %v4278 = vld [vmem:[%s4272 + $0x14] sm:$0xf]
  %v4279 = vld [vmem:[%s4272 + $0x18] sm:$0xf]
  %v4280 = vld [vmem:[%s4272 + $0x1c] sm:$0xf]
  %v4289 = vunpack.c.l.b16 %v4273
  %v4290 = vunpack.c.l.b16 %v4274
  %v4291 = vunpack.c.l.b16 %v4275
  %v4292 = vunpack.c.l.b16 %v4276
  %v4293 = vunpack.c.l.b16 %v4277
  %v4294 = vunpack.c.l.b16 %v4278
  %v4295 = vunpack.c.l.b16 %v4279
  %v4296 = vunpack.c.l.b16 %v4280
  %v4297 = vpack.c.b16 %v4290, %v4289
  %v4298 = vpack.c.b16 %v4292, %v4291
  %v4299 = vpack.c.b16 %v4294, %v4293
  %v4300 = vpack.c.b16 %v4296, %v4295
  %v4306 = vsel %vm2699, %v4271, 0
  %4308 = vmatprep.subr.bf16.mxu0 0
  %4309 = vmatpush1.bf16.msra.mxu0 0
  %4310 = vmatprep.subr.bf16.mxu0 0
  %4311 = vmatpush1.bf16.msra.mxu0 0
  %4312 = vmatprep.subr.bf16.mxu0 0
  %4313 = vmatpush1.bf16.msra.mxu0 0
  %4314 = vmatprep.subr.bf16.mxu0 0
  %4315 = vmatpush1.bf16.msra.mxu0 0
  %4316 = vmatprep.subr.bf16.mxu0 0
  %4317 = vmatpush1.bf16.msra.mxu0 %v4300
  %4318 = vmatprep.subr.bf16.mxu0 0
  %4319 = vmatpush1.bf16.msra.mxu0 %v4299
  %4320 = vmatprep.subr.bf16.mxu0 0
  %4321 = vmatpush1.bf16.msra.mxu0 %v4298
  %4322 = vmatprep.subr.bf16.mxu0 0
  %4323 = vmatpush1.bf16.msra.mxu0 %v4297
  %4324 = vmatprep.subr.bf16.mxu0 0
  %4325 = vmatpush2.bf16.msra.mxu0 0
  %4326 = vmatprep.subr.bf16.mxu0 0
  %4327 = vmatpush2.bf16.msra.mxu0 0
  %4328 = vmatprep.subr.bf16.mxu0 0
  %4329 = vmatpush2.bf16.msra.mxu0 0
  %4330 = vmatprep.subr.bf16.mxu0 0
  %4331 = vmatpush2.bf16.msra.mxu0 0
  %4332 = vmatprep.subr.bf16.mxu0 0
  %4333 = vmatpush2.bf16.msra.mxu0 0
  %4334 = vmatprep.subr.bf16.mxu0 0
  %4335 = vmatpush2.bf16.msra.mxu0 0
  %4336 = vmatprep.subr.bf16.mxu0 0
  %4337 = vmatpush2.bf16.msra.mxu0 0
  %4338 = vmatprep.subr.bf16.mxu0 0
  %4339 = vmatpush2.bf16.msra.mxu0 0
  %4340 = vmatprep.mubr.bf16.mxu0 0
  %4341 = vmatmul.mubr.bf16.gmra.mxu0 %v4306
  %v4342 = vpop.f32.mrf.mxu0
  %v4343 = vadd.f32 0.0, %v4342
  %v4344 = vpop.f32.mrf.mxu0
  %v4345 = vpop.f32.mrf.mxu0
  %v4346 = vpop.f32.mrf.mxu0
  %4347 = vdwg.mxu0
  %v4348 = vadd.f32 %v4225, %v4343
  %s4349 = scalar_lea.vmem %s6, 56
  %v4350 = vld [vmem:[%s4349] sm:$0xf]
  %v4352 = vsel %vm381, %v4350, 0
  %4354 = vmatprep.subr.bf16.mxu0 0
  %4355 = vmatpush1.bf16.msra.mxu0 0
  %4356 = vmatprep.subr.bf16.mxu0 0
  %4357 = vmatpush1.bf16.msra.mxu0 0
  %4358 = vmatprep.subr.bf16.mxu0 0
  %4359 = vmatpush1.bf16.msra.mxu0 0
  %4360 = vmatprep.subr.bf16.mxu0 0
  %4361 = vmatpush1.bf16.msra.mxu0 0
  %4362 = vmatprep.subr.bf16.mxu0 0
  %4363 = vmatpush1.bf16.msra.mxu0 0
  %4364 = vmatprep.subr.bf16.mxu0 0
  %4365 = vmatpush1.bf16.msra.mxu0 0
  %4366 = vmatprep.subr.bf16.mxu0 0
  %4367 = vmatpush1.bf16.msra.mxu0 %v2620
  %4368 = vmatprep.subr.bf16.mxu0 0
  %4369 = vmatpush1.bf16.msra.mxu0 %v2619
  %4370 = vmatprep.subr.bf16.mxu0 0
  %4371 = vmatpush2.bf16.msra.mxu0 0
  %4372 = vmatprep.subr.bf16.mxu0 0
  %4373 = vmatpush2.bf16.msra.mxu0 0
  %4374 = vmatprep.subr.bf16.mxu0 0
  %4375 = vmatpush2.bf16.msra.mxu0 0
  %4376 = vmatprep.subr.bf16.mxu0 0
  %4377 = vmatpush2.bf16.msra.mxu0 0
  %4378 = vmatprep.subr.bf16.mxu0 0
  %4379 = vmatpush2.bf16.msra.mxu0 0
  %4380 = vmatprep.subr.bf16.mxu0 0
  %4381 = vmatpush2.bf16.msra.mxu0 0
  %4382 = vmatprep.subr.bf16.mxu0 0
  %4383 = vmatpush2.bf16.msra.mxu0 0
  %4384 = vmatprep.subr.bf16.mxu0 0
  %4385 = vmatpush2.bf16.msra.mxu0 0
  %4386 = vmatprep.mubr.bf16.mxu0 0
  %4387 = vmatmul.mubr.bf16.gmra.mxu0 %v4352
  %v4388 = vpop.f32.mrf.mxu0
  %v4389 = vadd.f32 0.0, %v4388
  %v4390 = vpop.f32.mrf.mxu0
  %v4391 = vpop.f32.mrf.mxu0
  %v4392 = vpop.f32.mrf.mxu0
  %4393 = vdwg.mxu0
  %v4394 = vpack.c.bf16 %v4389, %v4389
  %s4395 = scalar_lea.vmem %s7, 448
  %v4396 = vld [vmem:[%s4395] sm:$0xf]
  %v4397 = vld [vmem:[%s4395 + $0x4] sm:$0xf]
  %v4398 = vld [vmem:[%s4395 + $0x8] sm:$0xf]
  %v4399 = vld [vmem:[%s4395 + $0xc] sm:$0xf]
  %v4400 = vld [vmem:[%s4395 + $0x10] sm:$0xf]
  %v4401 = vld [vmem:[%s4395 + $0x14] sm:$0xf]
  %v4402 = vld [vmem:[%s4395 + $0x18] sm:$0xf]
  %v4403 = vld [vmem:[%s4395 + $0x1c] sm:$0xf]
  %v4412 = vunpack.c.l.b16 %v4396
  %v4413 = vunpack.c.l.b16 %v4397
  %v4414 = vunpack.c.l.b16 %v4398
  %v4415 = vunpack.c.l.b16 %v4399
  %v4416 = vunpack.c.l.b16 %v4400
  %v4417 = vunpack.c.l.b16 %v4401
  %v4418 = vunpack.c.l.b16 %v4402
  %v4419 = vunpack.c.l.b16 %v4403
  %v4420 = vpack.c.b16 %v4413, %v4412
  %v4421 = vpack.c.b16 %v4415, %v4414
  %v4422 = vpack.c.b16 %v4417, %v4416
  %v4423 = vpack.c.b16 %v4419, %v4418
  %v4429 = vsel %vm2699, %v4394, 0
  %4431 = vmatprep.subr.bf16.mxu0 0
  %4432 = vmatpush1.bf16.msra.mxu0 0
  %4433 = vmatprep.subr.bf16.mxu0 0
  %4434 = vmatpush1.bf16.msra.mxu0 0
  %4435 = vmatprep.subr.bf16.mxu0 0
  %4436 = vmatpush1.bf16.msra.mxu0 0
  %4437 = vmatprep.subr.bf16.mxu0 0
  %4438 = vmatpush1.bf16.msra.mxu0 0
  %4439 = vmatprep.subr.bf16.mxu0 0
  %4440 = vmatpush1.bf16.msra.mxu0 %v4423
  %4441 = vmatprep.subr.bf16.mxu0 0
  %4442 = vmatpush1.bf16.msra.mxu0 %v4422
  %4443 = vmatprep.subr.bf16.mxu0 0
  %4444 = vmatpush1.bf16.msra.mxu0 %v4421
  %4445 = vmatprep.subr.bf16.mxu0 0
  %4446 = vmatpush1.bf16.msra.mxu0 %v4420
  %4447 = vmatprep.subr.bf16.mxu0 0
  %4448 = vmatpush2.bf16.msra.mxu0 0
  %4449 = vmatprep.subr.bf16.mxu0 0
  %4450 = vmatpush2.bf16.msra.mxu0 0
  %4451 = vmatprep.subr.bf16.mxu0 0
  %4452 = vmatpush2.bf16.msra.mxu0 0
  %4453 = vmatprep.subr.bf16.mxu0 0
  %4454 = vmatpush2.bf16.msra.mxu0 0
  %4455 = vmatprep.subr.bf16.mxu0 0
  %4456 = vmatpush2.bf16.msra.mxu0 0
  %4457 = vmatprep.subr.bf16.mxu0 0
  %4458 = vmatpush2.bf16.msra.mxu0 0
  %4459 = vmatprep.subr.bf16.mxu0 0
  %4460 = vmatpush2.bf16.msra.mxu0 0
  %4461 = vmatprep.subr.bf16.mxu0 0
  %4462 = vmatpush2.bf16.msra.mxu0 0
  %4463 = vmatprep.mubr.bf16.mxu0 0
  %4464 = vmatmul.mubr.bf16.gmra.mxu0 %v4429
  %v4465 = vpop.f32.mrf.mxu0
  %v4466 = vadd.f32 0.0, %v4465
  %v4467 = vpop.f32.mrf.mxu0
  %v4468 = vpop.f32.mrf.mxu0
  %v4469 = vpop.f32.mrf.mxu0
  %4470 = vdwg.mxu0
  %v4471 = vadd.f32 %v4348, %v4466
  %s4472 = scalar_lea.vmem %s6, 60
  %v4473 = vld [vmem:[%s4472] sm:$0xf]
  %v4475 = vsel %vm381, %v4473, 0
  %4477 = vmatprep.subr.bf16.mxu0 0
  %4478 = vmatpush1.bf16.msra.mxu0 0
  %4479 = vmatprep.subr.bf16.mxu0 0
  %4480 = vmatpush1.bf16.msra.mxu0 0
  %4481 = vmatprep.subr.bf16.mxu0 0
  %4482 = vmatpush1.bf16.msra.mxu0 0
  %4483 = vmatprep.subr.bf16.mxu0 0
  %4484 = vmatpush1.bf16.msra.mxu0 0
  %4485 = vmatprep.subr.bf16.mxu0 0
  %4486 = vmatpush1.bf16.msra.mxu0 0
  %4487 = vmatprep.subr.bf16.mxu0 0
  %4488 = vmatpush1.bf16.msra.mxu0 0
  %4489 = vmatprep.subr.bf16.mxu0 0
  %4490 = vmatpush1.bf16.msra.mxu0 %v2620
  %4491 = vmatprep.subr.bf16.mxu0 0
  %4492 = vmatpush1.bf16.msra.mxu0 %v2619
  %4493 = vmatprep.subr.bf16.mxu0 0
  %4494 = vmatpush2.bf16.msra.mxu0 0
  %4495 = vmatprep.subr.bf16.mxu0 0
  %4496 = vmatpush2.bf16.msra.mxu0 0
  %4497 = vmatprep.subr.bf16.mxu0 0
  %4498 = vmatpush2.bf16.msra.mxu0 0
  %4499 = vmatprep.subr.bf16.mxu0 0
  %4500 = vmatpush2.bf16.msra.mxu0 0
  %4501 = vmatprep.subr.bf16.mxu0 0
  %4502 = vmatpush2.bf16.msra.mxu0 0
  %4503 = vmatprep.subr.bf16.mxu0 0
  %4504 = vmatpush2.bf16.msra.mxu0 0
  %4505 = vmatprep.subr.bf16.mxu0 0
  %4506 = vmatpush2.bf16.msra.mxu0 0
  %4507 = vmatprep.subr.bf16.mxu0 0
  %4508 = vmatpush2.bf16.msra.mxu0 0
  %4509 = vmatprep.mubr.bf16.mxu0 0
  %4510 = vmatmul.mubr.bf16.gmra.mxu0 %v4475
  %v4511 = vpop.f32.mrf.mxu0
  %v4512 = vadd.f32 0.0, %v4511
  %v4513 = vpop.f32.mrf.mxu0
  %v4514 = vpop.f32.mrf.mxu0
  %v4515 = vpop.f32.mrf.mxu0
  %4516 = vdwg.mxu0
  %v4517 = vpack.c.bf16 %v4512, %v4512
  %s4518 = scalar_lea.vmem %s7, 480
  %v4519 = vld [vmem:[%s4518] sm:$0xf]
  %v4520 = vld [vmem:[%s4518 + $0x4] sm:$0xf]
  %v4521 = vld [vmem:[%s4518 + $0x8] sm:$0xf]
  %v4522 = vld [vmem:[%s4518 + $0xc] sm:$0xf]
  %v4523 = vld [vmem:[%s4518 + $0x10] sm:$0xf]
  %v4524 = vld [vmem:[%s4518 + $0x14] sm:$0xf]
  %v4525 = vld [vmem:[%s4518 + $0x18] sm:$0xf]
  %v4526 = vld [vmem:[%s4518 + $0x1c] sm:$0xf]
  %v4535 = vunpack.c.l.b16 %v4519
  %v4536 = vunpack.c.l.b16 %v4520
  %v4537 = vunpack.c.l.b16 %v4521
  %v4538 = vunpack.c.l.b16 %v4522
  %v4539 = vunpack.c.l.b16 %v4523
  %v4540 = vunpack.c.l.b16 %v4524
  %v4541 = vunpack.c.l.b16 %v4525
  %v4542 = vunpack.c.l.b16 %v4526
  %v4543 = vpack.c.b16 %v4536, %v4535
  %v4544 = vpack.c.b16 %v4538, %v4537
  %v4545 = vpack.c.b16 %v4540, %v4539
  %v4546 = vpack.c.b16 %v4542, %v4541
  %v4552 = vsel %vm2699, %v4517, 0
  %4554 = vmatprep.subr.bf16.mxu0 0
  %4555 = vmatpush1.bf16.msra.mxu0 0
  %4556 = vmatprep.subr.bf16.mxu0 0
  %4557 = vmatpush1.bf16.msra.mxu0 0
  %4558 = vmatprep.subr.bf16.mxu0 0
  %4559 = vmatpush1.bf16.msra.mxu0 0
  %4560 = vmatprep.subr.bf16.mxu0 0
  %4561 = vmatpush1.bf16.msra.mxu0 0
  %4562 = vmatprep.subr.bf16.mxu0 0
  %4563 = vmatpush1.bf16.msra.mxu0 %v4546
  %4564 = vmatprep.subr.bf16.mxu0 0
  %4565 = vmatpush1.bf16.msra.mxu0 %v4545
  %4566 = vmatprep.subr.bf16.mxu0 0
  %4567 = vmatpush1.bf16.msra.mxu0 %v4544
  %4568 = vmatprep.subr.bf16.mxu0 0
  %4569 = vmatpush1.bf16.msra.mxu0 %v4543
  %4570 = vmatprep.subr.bf16.mxu0 0
  %4571 = vmatpush2.bf16.msra.mxu0 0
  %4572 = vmatprep.subr.bf16.mxu0 0
  %4573 = vmatpush2.bf16.msra.mxu0 0
  %4574 = vmatprep.subr.bf16.mxu0 0
  %4575 = vmatpush2.bf16.msra.mxu0 0
  %4576 = vmatprep.subr.bf16.mxu0 0
  %4577 = vmatpush2.bf16.msra.mxu0 0
  %4578 = vmatprep.subr.bf16.mxu0 0
  %4579 = vmatpush2.bf16.msra.mxu0 0
  %4580 = vmatprep.subr.bf16.mxu0 0
  %4581 = vmatpush2.bf16.msra.mxu0 0
  %4582 = vmatprep.subr.bf16.mxu0 0
  %4583 = vmatpush2.bf16.msra.mxu0 0
  %4584 = vmatprep.subr.bf16.mxu0 0
  %4585 = vmatpush2.bf16.msra.mxu0 0
  %4586 = vmatprep.mubr.bf16.mxu0 0
  %4587 = vmatmul.mubr.bf16.gmra.mxu0 %v4552
  %v4588 = vpop.f32.mrf.mxu0
  %v4589 = vadd.f32 0.0, %v4588
  %v4590 = vpop.f32.mrf.mxu0
  %v4591 = vpop.f32.mrf.mxu0
  %v4592 = vpop.f32.mrf.mxu0
  %4593 = vdwg.mxu0
  %v4594 = vadd.f32 %v4471, %v4589
  %vm4595 = vcmp.ge.f32.partialorder %v4594, 0.0
  %v4596 = vmul.f32 %v4594, 0.2
  %v4597 = vsel %vm4595, %v4594, %v4596
  %v4598 = vpack.c.bf16 %v4597, %v4597
  %v4599 = vld [vmem:[%s11] sm:$0x3]
  %v4600 = vld [vmem:[%s9] sm:$0xf]
  %vm4601 = vcmask 64512
  %v4603 = vsel %vm4601, %v4600, 0
  %vm4605 = vcmask 1043456
  %v4607 = vsel %vm4605, %v4598, 0
  %4609 = vmatprep.subr.bf16.mxu0 0
  %4610 = vmatpush1.bf16.msra.mxu0 0
  %4611 = vmatprep.subr.bf16.mxu0 0
  %4612 = vmatpush1.bf16.msra.mxu0 0
  %4613 = vmatprep.subr.bf16.mxu0 0
  %4614 = vmatpush1.bf16.msra.mxu0 0
  %4615 = vmatprep.subr.bf16.mxu0 0
  %4616 = vmatpush1.bf16.msra.mxu0 0
  %4617 = vmatprep.subr.bf16.mxu0 0
  %4618 = vmatpush1.bf16.msra.mxu0 0
  %4619 = vmatprep.subr.bf16.mxu0 0
  %4620 = vmatpush1.bf16.msra.mxu0 0
  %4621 = vmatprep.subr.bf16.mxu0 0
  %4622 = vmatpush1.bf16.msra.mxu0 0
  %4623 = vmatprep.subr.bf16.mxu0 0
  %4624 = vmatpush1.bf16.msra.mxu0 %v4607
  %4625 = vmatprep.subr.bf16.mxu0 0
  %4626 = vmatpush2.bf16.msra.mxu0 0
  %4627 = vmatprep.subr.bf16.mxu0 0
  %4628 = vmatpush2.bf16.msra.mxu0 0
  %4629 = vmatprep.subr.bf16.mxu0 0
  %4630 = vmatpush2.bf16.msra.mxu0 0
  %4631 = vmatprep.subr.bf16.mxu0 0
  %4632 = vmatpush2.bf16.msra.mxu0 0
  %4633 = vmatprep.subr.bf16.mxu0 0
  %4634 = vmatpush2.bf16.msra.mxu0 0
  %4635 = vmatprep.subr.bf16.mxu0 0
  %4636 = vmatpush2.bf16.msra.mxu0 0
  %4637 = vmatprep.subr.bf16.mxu0 0
  %4638 = vmatpush2.bf16.msra.mxu0 0
  %4639 = vmatprep.subr.bf16.mxu0 0
  %4640 = vmatpush2.bf16.msra.mxu0 0
  %4641 = vmatprep.mubr.bf16.mxu0 0
  %4642 = vmatmul.mubr.bf16.gmra.mxu0 %v4603
  %v4643 = vpop.f32.mrf.mxu0
  %v4644 = vadd.f32 0.0, %v4643
  %v4645 = vpop.f32.mrf.mxu0
  %v4646 = vpop.f32.mrf.mxu0
  %v4647 = vpop.f32.mrf.mxu0
  %4648 = vdwg.mxu0
  %v4649 = vpack.c.bf16 %v4644, %v4644
  %v4650 = vld [vmem:[%s10] sm:$0xff]
  %v4651 = vld [vmem:[%s10 + $0x8] sm:$0xff]
  %v4652 = vld [vmem:[%s10 + $0x10] sm:$0xff]
  %v4653 = vld [vmem:[%s10 + $0x18] sm:$0xff]
  %v4654 = vld [vmem:[%s10 + $0x20] sm:$0xff]
  %v4655 = vld [vmem:[%s10 + $0x28] sm:$0xff]
  %v4656 = vld [vmem:[%s10 + $0x30] sm:$0xff]
  %v4657 = vld [vmem:[%s10 + $0x38] sm:$0xff]
  %v4658 = vld [vmem:[%s10 + $0x40] sm:$0xff]
  %v4659 = vld [vmem:[%s10 + $0x48] sm:$0xff]
  %v4660 = vld [vmem:[%s10 + $0x50] sm:$0xff]
  %v4661 = vld [vmem:[%s10 + $0x58] sm:$0xff]
  %v4662 = vld [vmem:[%s10 + $0x60] sm:$0xff]
  %v4663 = vld [vmem:[%s10 + $0x68] sm:$0xff]
  %v4664 = vld [vmem:[%s10 + $0x70] sm:$0xff]
  %v4665 = vld [vmem:[%s10 + $0x78] sm:$0xff]
  %v4682 = vunpack.c.l.b16 %v4650
  %v4683 = vunpack.c.h.b16 %v4650
  %v4684 = vunpack.c.l.b16 %v4651
  %v4685 = vunpack.c.h.b16 %v4651
  %v4686 = vunpack.c.l.b16 %v4652
  %v4687 = vunpack.c.h.b16 %v4652
  %v4688 = vunpack.c.l.b16 %v4653
  %v4689 = vunpack.c.h.b16 %v4653
  %v4690 = vunpack.c.l.b16 %v4654
  %v4691 = vunpack.c.h.b16 %v4654
  %v4692 = vunpack.c.l.b16 %v4655
  %v4693 = vunpack.c.h.b16 %v4655
  %v4694 = vunpack.c.l.b16 %v4656
  %v4695 = vunpack.c.h.b16 %v4656
  %v4696 = vunpack.c.l.b16 %v4657
  %v4697 = vunpack.c.h.b16 %v4657
  %v4698 = vunpack.c.l.b16 %v4658
  %v4699 = vunpack.c.h.b16 %v4658
  %v4700 = vunpack.c.l.b16 %v4659
  %v4701 = vunpack.c.h.b16 %v4659
  %v4702 = vunpack.c.l.b16 %v4660
  %v4703 = vunpack.c.h.b16 %v4660
  %v4704 = vunpack.c.l.b16 %v4661
  %v4705 = vunpack.c.h.b16 %v4661
  %v4706 = vunpack.c.l.b16 %v4662
  %v4707 = vunpack.c.h.b16 %v4662
  %v4708 = vunpack.c.l.b16 %v4663
  %v4709 = vunpack.c.h.b16 %v4663
  %v4710 = vunpack.c.l.b16 %v4664
  %v4711 = vunpack.c.h.b16 %v4664
  %v4712 = vunpack.c.l.b16 %v4665
  %v4713 = vunpack.c.h.b16 %v4665
  %v4714 = vpack.c.b16 %v4684, %v4682
  %v4715 = vpack.c.b16 %v4685, %v4683
  %v4716 = vpack.c.b16 %v4688, %v4686
  %v4717 = vpack.c.b16 %v4689, %v4687
  %v4718 = vpack.c.b16 %v4692, %v4690
  %v4719 = vpack.c.b16 %v4693, %v4691
  %v4720 = vpack.c.b16 %v4696, %v4694
  %v4721 = vpack.c.b16 %v4697, %v4695
  %v4722 = vpack.c.b16 %v4700, %v4698
  %v4723 = vpack.c.b16 %v4701, %v4699
  %v4724 = vpack.c.b16 %v4704, %v4702
  %v4725 = vpack.c.b16 %v4705, %v4703
  %v4726 = vpack.c.b16 %v4708, %v4706
  %v4727 = vpack.c.b16 %v4709, %v4707
  %v4728 = vpack.c.b16 %v4712, %v4710
  %v4729 = vpack.c.b16 %v4713, %v4711
  %4746 = vmatprep.subr.bf16.mxu0 %v4729
  %4747 = vmatpush1.bf16.msra.mxu0 %v4728
  %4748 = vmatprep.subr.bf16.mxu0 %v4727
  %4749 = vmatpush1.bf16.msra.mxu0 %v4726
  %4750 = vmatprep.subr.bf16.mxu0 %v4725
  %4751 = vmatpush1.bf16.msra.mxu0 %v4724
  %4752 = vmatprep.subr.bf16.mxu0 %v4723
  %4753 = vmatpush1.bf16.msra.mxu0 %v4722
  %4754 = vmatprep.subr.bf16.mxu0 %v4721
  %4755 = vmatpush1.bf16.msra.mxu0 %v4720
  %4756 = vmatprep.subr.bf16.mxu0 %v4719
  %4757 = vmatpush1.bf16.msra.mxu0 %v4718
  %4758 = vmatprep.subr.bf16.mxu0 %v4717
  %4759 = vmatpush1.bf16.msra.mxu0 %v4716
  %4760 = vmatprep.subr.bf16.mxu0 %v4715
  %4761 = vmatpush1.bf16.msra.mxu0 %v4714
  %4762 = vmatprep.subr.bf16.mxu0 0
  %4763 = vmatpush2.bf16.msra.mxu0 0
  %4764 = vmatprep.subr.bf16.mxu0 0
  %4765 = vmatpush2.bf16.msra.mxu0 0
  %4766 = vmatprep.subr.bf16.mxu0 0
  %4767 = vmatpush2.bf16.msra.mxu0 0
  %4768 = vmatprep.subr.bf16.mxu0 0
  %4769 = vmatpush2.bf16.msra.mxu0 0
  %4770 = vmatprep.subr.bf16.mxu0 0
  %4771 = vmatpush2.bf16.msra.mxu0 0
  %4772 = vmatprep.subr.bf16.mxu0 0
  %4773 = vmatpush2.bf16.msra.mxu0 0
  %4774 = vmatprep.subr.bf16.mxu0 0
  %4775 = vmatpush2.bf16.msra.mxu0 0
  %4776 = vmatprep.subr.bf16.mxu0 0
  %4777 = vmatpush2.bf16.msra.mxu0 0
  %4778 = vmatprep.mubr.bf16.mxu0 0
  %4779 = vmatmul.mubr.bf16.gmra.mxu0 %v4649
  %v4780 = vpop.f32.mrf.mxu0
  %v4781 = vadd.f32 0.0, %v4780
  %v4782 = vpop.f32.mrf.mxu0
  %v4783 = vadd.f32 0.0, %v4782
  %v4784 = vpop.f32.mrf.mxu0
  %v4785 = vpop.f32.mrf.mxu0
  %4786 = vdwg.mxu0
  %v4788 = vlaneseq
  %v4789 = vshrl.u32 %v4788, 7
  %v4790 = vsub.s32 0, %v4789
  %v4791 = vrot.slane %v4599, %v4790
  %v4792 = vlaneseq
  %v4793 = vshrl.u32 %v4792, 7
  %v4794 = vsub.s32 1, %v4793
  %v4795 = vrot.slane %v4599, %v4794
  %v4798 = vadd.f32 %v4791, %v4781
  %v4799 = vadd.f32 %v4795, %v4783
  %s4800 = scalar_lea.vmem %s9, 4
  %v4801 = vld [vmem:[%s4800] sm:$0xf]
  %v4803 = vsel %vm4601, %v4801, 0
  %4805 = vmatprep.subr.bf16.mxu0 0
  %4806 = vmatpush1.bf16.msra.mxu0 0
  %4807 = vmatprep.subr.bf16.mxu0 0
  %4808 = vmatpush1.bf16.msra.mxu0 0
  %4809 = vmatprep.subr.bf16.mxu0 0
  %4810 = vmatpush1.bf16.msra.mxu0 0
  %4811 = vmatprep.subr.bf16.mxu0 0
  %4812 = vmatpush1.bf16.msra.mxu0 0
  %4813 = vmatprep.subr.bf16.mxu0 0
  %4814 = vmatpush1.bf16.msra.mxu0 0
  %4815 = vmatprep.subr.bf16.mxu0 0
  %4816 = vmatpush1.bf16.msra.mxu0 0
  %4817 = vmatprep.subr.bf16.mxu0 0
  %4818 = vmatpush1.bf16.msra.mxu0 0
  %4819 = vmatprep.subr.bf16.mxu0 0
  %4820 = vmatpush1.bf16.msra.mxu0 %v4607
  %4821 = vmatprep.subr.bf16.mxu0 0
  %4822 = vmatpush2.bf16.msra.mxu0 0
  %4823 = vmatprep.subr.bf16.mxu0 0
  %4824 = vmatpush2.bf16.msra.mxu0 0
  %4825 = vmatprep.subr.bf16.mxu0 0
  %4826 = vmatpush2.bf16.msra.mxu0 0
  %4827 = vmatprep.subr.bf16.mxu0 0
  %4828 = vmatpush2.bf16.msra.mxu0 0
  %4829 = vmatprep.subr.bf16.mxu0 0
  %4830 = vmatpush2.bf16.msra.mxu0 0
  %4831 = vmatprep.subr.bf16.mxu0 0
  %4832 = vmatpush2.bf16.msra.mxu0 0
  %4833 = vmatprep.subr.bf16.mxu0 0
  %4834 = vmatpush2.bf16.msra.mxu0 0
  %4835 = vmatprep.subr.bf16.mxu0 0
  %4836 = vmatpush2.bf16.msra.mxu0 0
  %4837 = vmatprep.mubr.bf16.mxu0 0
  %4838 = vmatmul.mubr.bf16.gmra.mxu0 %v4803
  %v4839 = vpop.f32.mrf.mxu0
  %v4840 = vadd.f32 0.0, %v4839
  %v4841 = vpop.f32.mrf.mxu0
  %v4842 = vpop.f32.mrf.mxu0
  %v4843 = vpop.f32.mrf.mxu0
  %4844 = vdwg.mxu0
  %v4845 = vpack.c.bf16 %v4840, %v4840
  %s4846 = scalar_lea.vmem %s10, 128
  %v4847 = vld [vmem:[%s4846] sm:$0xff]
  %v4848 = vld [vmem:[%s4846 + $0x8] sm:$0xff]
  %v4849 = vld [vmem:[%s4846 + $0x10] sm:$0xff]
  %v4850 = vld [vmem:[%s4846 + $0x18] sm:$0xff]
  %v4851 = vld [vmem:[%s4846 + $0x20] sm:$0xff]
  %v4852 = vld [vmem:[%s4846 + $0x28] sm:$0xff]
  %v4853 = vld [vmem:[%s4846 + $0x30] sm:$0xff]
  %v4854 = vld [vmem:[%s4846 + $0x38] sm:$0xff]
  %v4855 = vld [vmem:[%s4846 + $0x40] sm:$0xff]
  %v4856 = vld [vmem:[%s4846 + $0x48] sm:$0xff]
  %v4857 = vld [vmem:[%s4846 + $0x50] sm:$0xff]
  %v4858 = vld [vmem:[%s4846 + $0x58] sm:$0xff]
  %v4859 = vld [vmem:[%s4846 + $0x60] sm:$0xff]
  %v4860 = vld [vmem:[%s4846 + $0x68] sm:$0xff]
  %v4861 = vld [vmem:[%s4846 + $0x70] sm:$0xff]
  %v4862 = vld [vmem:[%s4846 + $0x78] sm:$0xff]
  %v4879 = vunpack.c.l.b16 %v4847
  %v4880 = vunpack.c.h.b16 %v4847
  %v4881 = vunpack.c.l.b16 %v4848
  %v4882 = vunpack.c.h.b16 %v4848
  %v4883 = vunpack.c.l.b16 %v4849
  %v4884 = vunpack.c.h.b16 %v4849
  %v4885 = vunpack.c.l.b16 %v4850
  %v4886 = vunpack.c.h.b16 %v4850
  %v4887 = vunpack.c.l.b16 %v4851
  %v4888 = vunpack.c.h.b16 %v4851
  %v4889 = vunpack.c.l.b16 %v4852
  %v4890 = vunpack.c.h.b16 %v4852
  %v4891 = vunpack.c.l.b16 %v4853
  %v4892 = vunpack.c.h.b16 %v4853
  %v4893 = vunpack.c.l.b16 %v4854
  %v4894 = vunpack.c.h.b16 %v4854
  %v4895 = vunpack.c.l.b16 %v4855
  %v4896 = vunpack.c.h.b16 %v4855
  %v4897 = vunpack.c.l.b16 %v4856
  %v4898 = vunpack.c.h.b16 %v4856
  %v4899 = vunpack.c.l.b16 %v4857
  %v4900 = vunpack.c.h.b16 %v4857
  %v4901 = vunpack.c.l.b16 %v4858
  %v4902 = vunpack.c.h.b16 %v4858
  %v4903 = vunpack.c.l.b16 %v4859
  %v4904 = vunpack.c.h.b16 %v4859
  %v4905 = vunpack.c.l.b16 %v4860
  %v4906 = vunpack.c.h.b16 %v4860
  %v4907 = vunpack.c.l.b16 %v4861
  %v4908 = vunpack.c.h.b16 %v4861
  %v4909 = vunpack.c.l.b16 %v4862
  %v4910 = vunpack.c.h.b16 %v4862
  %v4911 = vpack.c.b16 %v4881, %v4879
  %v4912 = vpack.c.b16 %v4882, %v4880
  %v4913 = vpack.c.b16 %v4885, %v4883
  %v4914 = vpack.c.b16 %v4886, %v4884
  %v4915 = vpack.c.b16 %v4889, %v4887
  %v4916 = vpack.c.b16 %v4890, %v4888
  %v4917 = vpack.c.b16 %v4893, %v4891
  %v4918 = vpack.c.b16 %v4894, %v4892
  %v4919 = vpack.c.b16 %v4897, %v4895
  %v4920 = vpack.c.b16 %v4898, %v4896
  %v4921 = vpack.c.b16 %v4901, %v4899
  %v4922 = vpack.c.b16 %v4902, %v4900
  %v4923 = vpack.c.b16 %v4905, %v4903
  %v4924 = vpack.c.b16 %v4906, %v4904
  %v4925 = vpack.c.b16 %v4909, %v4907
  %v4926 = vpack.c.b16 %v4910, %v4908
  %4943 = vmatprep.subr.bf16.mxu0 %v4926
  %4944 = vmatpush1.bf16.msra.mxu0 %v4925
  %4945 = vmatprep.subr.bf16.mxu0 %v4924
  %4946 = vmatpush1.bf16.msra.mxu0 %v4923
  %4947 = vmatprep.subr.bf16.mxu0 %v4922
  %4948 = vmatpush1.bf16.msra.mxu0 %v4921
  %4949 = vmatprep.subr.bf16.mxu0 %v4920
  %4950 = vmatpush1.bf16.msra.mxu0 %v4919
  %4951 = vmatprep.subr.bf16.mxu0 %v4918
  %4952 = vmatpush1.bf16.msra.mxu0 %v4917
  %4953 = vmatprep.subr.bf16.mxu0 %v4916
  %4954 = vmatpush1.bf16.msra.mxu0 %v4915
  %4955 = vmatprep.subr.bf16.mxu0 %v4914
  %4956 = vmatpush1.bf16.msra.mxu0 %v4913
  %4957 = vmatprep.subr.bf16.mxu0 %v4912
  %4958 = vmatpush1.bf16.msra.mxu0 %v4911
  %4959 = vmatprep.subr.bf16.mxu0 0
  %4960 = vmatpush2.bf16.msra.mxu0 0
  %4961 = vmatprep.subr.bf16.mxu0 0
  %4962 = vmatpush2.bf16.msra.mxu0 0
  %4963 = vmatprep.subr.bf16.mxu0 0
  %4964 = vmatpush2.bf16.msra.mxu0 0
  %4965 = vmatprep.subr.bf16.mxu0 0
  %4966 = vmatpush2.bf16.msra.mxu0 0
  %4967 = vmatprep.subr.bf16.mxu0 0
  %4968 = vmatpush2.bf16.msra.mxu0 0
  %4969 = vmatprep.subr.bf16.mxu0 0
  %4970 = vmatpush2.bf16.msra.mxu0 0
  %4971 = vmatprep.subr.bf16.mxu0 0
  %4972 = vmatpush2.bf16.msra.mxu0 0
  %4973 = vmatprep.subr.bf16.mxu0 0
  %4974 = vmatpush2.bf16.msra.mxu0 0
  %4975 = vmatprep.mubr.bf16.mxu0 0
  %4976 = vmatmul.mubr.bf16.gmra.mxu0 %v4845
  %v4977 = vpop.f32.mrf.mxu0
  %v4978 = vadd.f32 0.0, %v4977
  %v4979 = vpop.f32.mrf.mxu0
  %v4980 = vadd.f32 0.0, %v4979
  %v4981 = vpop.f32.mrf.mxu0
  %v4982 = vpop.f32.mrf.mxu0
  %4983 = vdwg.mxu0
  %v4984 = vadd.f32 %v4798, %v4978
  %v4985 = vadd.f32 %v4799, %v4980
  %s4986 = scalar_lea.vmem %s9, 8
  %v4987 = vld [vmem:[%s4986] sm:$0xf]
  %v4989 = vsel %vm4601, %v4987, 0
  %4991 = vmatprep.subr.bf16.mxu0 0
  %4992 = vmatpush1.bf16.msra.mxu0 0
  %4993 = vmatprep.subr.bf16.mxu0 0
  %4994 = vmatpush1.bf16.msra.mxu0 0
  %4995 = vmatprep.subr.bf16.mxu0 0
  %4996 = vmatpush1.bf16.msra.mxu0 0
  %4997 = vmatprep.subr.bf16.mxu0 0
  %4998 = vmatpush1.bf16.msra.mxu0 0
  %4999 = vmatprep.subr.bf16.mxu0 0
  %5000 = vmatpush1.bf16.msra.mxu0 0
  %5001 = vmatprep.subr.bf16.mxu0 0
  %5002 = vmatpush1.bf16.msra.mxu0 0
  %5003 = vmatprep.subr.bf16.mxu0 0
  %5004 = vmatpush1.bf16.msra.mxu0 0
  %5005 = vmatprep.subr.bf16.mxu0 0
  %5006 = vmatpush1.bf16.msra.mxu0 %v4607
  %5007 = vmatprep.subr.bf16.mxu0 0
  %5008 = vmatpush2.bf16.msra.mxu0 0
  %5009 = vmatprep.subr.bf16.mxu0 0
  %5010 = vmatpush2.bf16.msra.mxu0 0
  %5011 = vmatprep.subr.bf16.mxu0 0
  %5012 = vmatpush2.bf16.msra.mxu0 0
  %5013 = vmatprep.subr.bf16.mxu0 0
  %5014 = vmatpush2.bf16.msra.mxu0 0
  %5015 = vmatprep.subr.bf16.mxu0 0
  %5016 = vmatpush2.bf16.msra.mxu0 0
  %5017 = vmatprep.subr.bf16.mxu0 0
  %5018 = vmatpush2.bf16.msra.mxu0 0
  %5019 = vmatprep.subr.bf16.mxu0 0
  %5020 = vmatpush2.bf16.msra.mxu0 0
  %5021 = vmatprep.subr.bf16.mxu0 0
  %5022 = vmatpush2.bf16.msra.mxu0 0
  %5023 = vmatprep.mubr.bf16.mxu0 0
  %5024 = vmatmul.mubr.bf16.gmra.mxu0 %v4989
  %v5025 = vpop.f32.mrf.mxu0
  %v5026 = vadd.f32 0.0, %v5025
  %v5027 = vpop.f32.mrf.mxu0
  %v5028 = vpop.f32.mrf.mxu0
  %v5029 = vpop.f32.mrf.mxu0
  %5030 = vdwg.mxu0
  %v5031 = vpack.c.bf16 %v5026, %v5026
  %s5032 = scalar_lea.vmem %s10, 256
  %v5033 = vld [vmem:[%s5032] sm:$0xff]
  %v5034 = vld [vmem:[%s5032 + $0x8] sm:$0xff]
  %v5035 = vld [vmem:[%s5032 + $0x10] sm:$0xff]
  %v5036 = vld [vmem:[%s5032 + $0x18] sm:$0xff]
  %v5037 = vld [vmem:[%s5032 + $0x20] sm:$0xff]
  %v5038 = vld [vmem:[%s5032 + $0x28] sm:$0xff]
  %v5039 = vld [vmem:[%s5032 + $0x30] sm:$0xff]
  %v5040 = vld [vmem:[%s5032 + $0x38] sm:$0xff]
  %v5041 = vld [vmem:[%s5032 + $0x40] sm:$0xff]
  %v5042 = vld [vmem:[%s5032 + $0x48] sm:$0xff]
  %v5043 = vld [vmem:[%s5032 + $0x50] sm:$0xff]
  %v5044 = vld [vmem:[%s5032 + $0x58] sm:$0xff]
  %v5045 = vld [vmem:[%s5032 + $0x60] sm:$0xff]
  %v5046 = vld [vmem:[%s5032 + $0x68] sm:$0xff]
  %v5047 = vld [vmem:[%s5032 + $0x70] sm:$0xff]
  %v5048 = vld [vmem:[%s5032 + $0x78] sm:$0xff]
  %v5065 = vunpack.c.l.b16 %v5033
  %v5066 = vunpack.c.h.b16 %v5033
  %v5067 = vunpack.c.l.b16 %v5034
  %v5068 = vunpack.c.h.b16 %v5034
  %v5069 = vunpack.c.l.b16 %v5035
  %v5070 = vunpack.c.h.b16 %v5035
  %v5071 = vunpack.c.l.b16 %v5036
  %v5072 = vunpack.c.h.b16 %v5036
  %v5073 = vunpack.c.l.b16 %v5037
  %v5074 = vunpack.c.h.b16 %v5037
  %v5075 = vunpack.c.l.b16 %v5038
  %v5076 = vunpack.c.h.b16 %v5038
  %v5077 = vunpack.c.l.b16 %v5039
  %v5078 = vunpack.c.h.b16 %v5039
  %v5079 = vunpack.c.l.b16 %v5040
  %v5080 = vunpack.c.h.b16 %v5040
  %v5081 = vunpack.c.l.b16 %v5041
  %v5082 = vunpack.c.h.b16 %v5041
  %v5083 = vunpack.c.l.b16 %v5042
  %v5084 = vunpack.c.h.b16 %v5042
  %v5085 = vunpack.c.l.b16 %v5043
  %v5086 = vunpack.c.h.b16 %v5043
  %v5087 = vunpack.c.l.b16 %v5044
  %v5088 = vunpack.c.h.b16 %v5044
  %v5089 = vunpack.c.l.b16 %v5045
  %v5090 = vunpack.c.h.b16 %v5045
  %v5091 = vunpack.c.l.b16 %v5046
  %v5092 = vunpack.c.h.b16 %v5046
  %v5093 = vunpack.c.l.b16 %v5047
  %v5094 = vunpack.c.h.b16 %v5047
  %v5095 = vunpack.c.l.b16 %v5048
  %v5096 = vunpack.c.h.b16 %v5048
  %v5097 = vpack.c.b16 %v5067, %v5065
  %v5098 = vpack.c.b16 %v5068, %v5066
  %v5099 = vpack.c.b16 %v5071, %v5069
  %v5100 = vpack.c.b16 %v5072, %v5070
  %v5101 = vpack.c.b16 %v5075, %v5073
  %v5102 = vpack.c.b16 %v5076, %v5074
  %v5103 = vpack.c.b16 %v5079, %v5077
  %v5104 = vpack.c.b16 %v5080, %v5078
  %v5105 = vpack.c.b16 %v5083, %v5081
  %v5106 = vpack.c.b16 %v5084, %v5082
  %v5107 = vpack.c.b16 %v5087, %v5085
  %v5108 = vpack.c.b16 %v5088, %v5086
  %v5109 = vpack.c.b16 %v5091, %v5089
  %v5110 = vpack.c.b16 %v5092, %v5090
  %v5111 = vpack.c.b16 %v5095, %v5093
  %v5112 = vpack.c.b16 %v5096, %v5094
  %5129 = vmatprep.subr.bf16.mxu0 %v5112
  %5130 = vmatpush1.bf16.msra.mxu0 %v5111
  %5131 = vmatprep.subr.bf16.mxu0 %v5110
  %5132 = vmatpush1.bf16.msra.mxu0 %v5109
  %5133 = vmatprep.subr.bf16.mxu0 %v5108
  %5134 = vmatpush1.bf16.msra.mxu0 %v5107
  %5135 = vmatprep.subr.bf16.mxu0 %v5106
  %5136 = vmatpush1.bf16.msra.mxu0 %v5105
  %5137 = vmatprep.subr.bf16.mxu0 %v5104
  %5138 = vmatpush1.bf16.msra.mxu0 %v5103
  %5139 = vmatprep.subr.bf16.mxu0 %v5102
  %5140 = vmatpush1.bf16.msra.mxu0 %v5101
  %5141 = vmatprep.subr.bf16.mxu0 %v5100
  %5142 = vmatpush1.bf16.msra.mxu0 %v5099
  %5143 = vmatprep.subr.bf16.mxu0 %v5098
  %5144 = vmatpush1.bf16.msra.mxu0 %v5097
  %5145 = vmatprep.subr.bf16.mxu0 0
  %5146 = vmatpush2.bf16.msra.mxu0 0
  %5147 = vmatprep.subr.bf16.mxu0 0
  %5148 = vmatpush2.bf16.msra.mxu0 0
  %5149 = vmatprep.subr.bf16.mxu0 0
  %5150 = vmatpush2.bf16.msra.mxu0 0
  %5151 = vmatprep.subr.bf16.mxu0 0
  %5152 = vmatpush2.bf16.msra.mxu0 0
  %5153 = vmatprep.subr.bf16.mxu0 0
  %5154 = vmatpush2.bf16.msra.mxu0 0
  %5155 = vmatprep.subr.bf16.mxu0 0
  %5156 = vmatpush2.bf16.msra.mxu0 0
  %5157 = vmatprep.subr.bf16.mxu0 0
  %5158 = vmatpush2.bf16.msra.mxu0 0
  %5159 = vmatprep.subr.bf16.mxu0 0
  %5160 = vmatpush2.bf16.msra.mxu0 0
  %5161 = vmatprep.mubr.bf16.mxu0 0
  %5162 = vmatmul.mubr.bf16.gmra.mxu0 %v5031
  %v5163 = vpop.f32.mrf.mxu0
  %v5164 = vadd.f32 0.0, %v5163
  %v5165 = vpop.f32.mrf.mxu0
  %v5166 = vadd.f32 0.0, %v5165
  %v5167 = vpop.f32.mrf.mxu0
  %v5168 = vpop.f32.mrf.mxu0
  %5169 = vdwg.mxu0
  %v5170 = vadd.f32 %v4984, %v5164
  %v5171 = vadd.f32 %v4985, %v5166
  %s5172 = scalar_lea.vmem %s9, 12
  %v5173 = vld [vmem:[%s5172] sm:$0xf]
  %v5175 = vsel %vm4601, %v5173, 0
  %5177 = vmatprep.subr.bf16.mxu0 0
  %5178 = vmatpush1.bf16.msra.mxu0 0
  %5179 = vmatprep.subr.bf16.mxu0 0
  %5180 = vmatpush1.bf16.msra.mxu0 0
  %5181 = vmatprep.subr.bf16.mxu0 0
  %5182 = vmatpush1.bf16.msra.mxu0 0
  %5183 = vmatprep.subr.bf16.mxu0 0
  %5184 = vmatpush1.bf16.msra.mxu0 0
  %5185 = vmatprep.subr.bf16.mxu0 0
  %5186 = vmatpush1.bf16.msra.mxu0 0
  %5187 = vmatprep.subr.bf16.mxu0 0
  %5188 = vmatpush1.bf16.msra.mxu0 0
  %5189 = vmatprep.subr.bf16.mxu0 0
  %5190 = vmatpush1.bf16.msra.mxu0 0
  %5191 = vmatprep.subr.bf16.mxu0 0
  %5192 = vmatpush1.bf16.msra.mxu0 %v4607
  %5193 = vmatprep.subr.bf16.mxu0 0
  %5194 = vmatpush2.bf16.msra.mxu0 0
  %5195 = vmatprep.subr.bf16.mxu0 0
  %5196 = vmatpush2.bf16.msra.mxu0 0
  %5197 = vmatprep.subr.bf16.mxu0 0
  %5198 = vmatpush2.bf16.msra.mxu0 0
  %5199 = vmatprep.subr.bf16.mxu0 0
  %5200 = vmatpush2.bf16.msra.mxu0 0
  %5201 = vmatprep.subr.bf16.mxu0 0
  %5202 = vmatpush2.bf16.msra.mxu0 0
  %5203 = vmatprep.subr.bf16.mxu0 0
  %5204 = vmatpush2.bf16.msra.mxu0 0
  %5205 = vmatprep.subr.bf16.mxu0 0
  %5206 = vmatpush2.bf16.msra.mxu0 0
  %5207 = vmatprep.subr.bf16.mxu0 0
  %5208 = vmatpush2.bf16.msra.mxu0 0
  %5209 = vmatprep.mubr.bf16.mxu0 0
  %5210 = vmatmul.mubr.bf16.gmra.mxu0 %v5175
  %v5211 = vpop.f32.mrf.mxu0
  %v5212 = vadd.f32 0.0, %v5211
  %v5213 = vpop.f32.mrf.mxu0
  %v5214 = vpop.f32.mrf.mxu0
  %v5215 = vpop.f32.mrf.mxu0
  %5216 = vdwg.mxu0
  %v5217 = vpack.c.bf16 %v5212, %v5212
  %s5218 = scalar_lea.vmem %s10, 384
  %v5219 = vld [vmem:[%s5218] sm:$0xff]
  %v5220 = vld [vmem:[%s5218 + $0x8] sm:$0xff]
  %v5221 = vld [vmem:[%s5218 + $0x10] sm:$0xff]
  %v5222 = vld [vmem:[%s5218 + $0x18] sm:$0xff]
  %v5223 = vld [vmem:[%s5218 + $0x20] sm:$0xff]
  %v5224 = vld [vmem:[%s5218 + $0x28] sm:$0xff]
  %v5225 = vld [vmem:[%s5218 + $0x30] sm:$0xff]
  %v5226 = vld [vmem:[%s5218 + $0x38] sm:$0xff]
  %v5227 = vld [vmem:[%s5218 + $0x40] sm:$0xff]
  %v5228 = vld [vmem:[%s5218 + $0x48] sm:$0xff]
  %v5229 = vld [vmem:[%s5218 + $0x50] sm:$0xff]
  %v5230 = vld [vmem:[%s5218 + $0x58] sm:$0xff]
  %v5231 = vld [vmem:[%s5218 + $0x60] sm:$0xff]
  %v5232 = vld [vmem:[%s5218 + $0x68] sm:$0xff]
  %v5233 = vld [vmem:[%s5218 + $0x70] sm:$0xff]
  %v5234 = vld [vmem:[%s5218 + $0x78] sm:$0xff]
  %v5251 = vunpack.c.l.b16 %v5219
  %v5252 = vunpack.c.h.b16 %v5219
  %v5253 = vunpack.c.l.b16 %v5220
  %v5254 = vunpack.c.h.b16 %v5220
  %v5255 = vunpack.c.l.b16 %v5221
  %v5256 = vunpack.c.h.b16 %v5221
  %v5257 = vunpack.c.l.b16 %v5222
  %v5258 = vunpack.c.h.b16 %v5222
  %v5259 = vunpack.c.l.b16 %v5223
  %v5260 = vunpack.c.h.b16 %v5223
  %v5261 = vunpack.c.l.b16 %v5224
  %v5262 = vunpack.c.h.b16 %v5224
  %v5263 = vunpack.c.l.b16 %v5225
  %v5264 = vunpack.c.h.b16 %v5225
  %v5265 = vunpack.c.l.b16 %v5226
  %v5266 = vunpack.c.h.b16 %v5226
  %v5267 = vunpack.c.l.b16 %v5227
  %v5268 = vunpack.c.h.b16 %v5227
  %v5269 = vunpack.c.l.b16 %v5228
  %v5270 = vunpack.c.h.b16 %v5228
  %v5271 = vunpack.c.l.b16 %v5229
  %v5272 = vunpack.c.h.b16 %v5229
  %v5273 = vunpack.c.l.b16 %v5230
  %v5274 = vunpack.c.h.b16 %v5230
  %v5275 = vunpack.c.l.b16 %v5231
  %v5276 = vunpack.c.h.b16 %v5231
  %v5277 = vunpack.c.l.b16 %v5232
  %v5278 = vunpack.c.h.b16 %v5232
  %v5279 = vunpack.c.l.b16 %v5233
  %v5280 = vunpack.c.h.b16 %v5233
  %v5281 = vunpack.c.l.b16 %v5234
  %v5282 = vunpack.c.h.b16 %v5234
  %v5283 = vpack.c.b16 %v5253, %v5251
  %v5284 = vpack.c.b16 %v5254, %v5252
  %v5285 = vpack.c.b16 %v5257, %v5255
  %v5286 = vpack.c.b16 %v5258, %v5256
  %v5287 = vpack.c.b16 %v5261, %v5259
  %v5288 = vpack.c.b16 %v5262, %v5260
  %v5289 = vpack.c.b16 %v5265, %v5263
  %v5290 = vpack.c.b16 %v5266, %v5264
  %v5291 = vpack.c.b16 %v5269, %v5267
  %v5292 = vpack.c.b16 %v5270, %v5268
  %v5293 = vpack.c.b16 %v5273, %v5271
  %v5294 = vpack.c.b16 %v5274, %v5272
  %v5295 = vpack.c.b16 %v5277, %v5275
  %v5296 = vpack.c.b16 %v5278, %v5276
  %v5297 = vpack.c.b16 %v5281, %v5279
  %v5298 = vpack.c.b16 %v5282, %v5280
  %5315 = vmatprep.subr.bf16.mxu0 %v5298
  %5316 = vmatpush1.bf16.msra.mxu0 %v5297
  %5317 = vmatprep.subr.bf16.mxu0 %v5296
  %5318 = vmatpush1.bf16.msra.mxu0 %v5295
  %5319 = vmatprep.subr.bf16.mxu0 %v5294
  %5320 = vmatpush1.bf16.msra.mxu0 %v5293
  %5321 = vmatprep.subr.bf16.mxu0 %v5292
  %5322 = vmatpush1.bf16.msra.mxu0 %v5291
  %5323 = vmatprep.subr.bf16.mxu0 %v5290
  %5324 = vmatpush1.bf16.msra.mxu0 %v5289
  %5325 = vmatprep.subr.bf16.mxu0 %v5288
  %5326 = vmatpush1.bf16.msra.mxu0 %v5287
  %5327 = vmatprep.subr.bf16.mxu0 %v5286
  %5328 = vmatpush1.bf16.msra.mxu0 %v5285
  %5329 = vmatprep.subr.bf16.mxu0 %v5284
  %5330 = vmatpush1.bf16.msra.mxu0 %v5283
  %5331 = vmatprep.subr.bf16.mxu0 0
  %5332 = vmatpush2.bf16.msra.mxu0 0
  %5333 = vmatprep.subr.bf16.mxu0 0
  %5334 = vmatpush2.bf16.msra.mxu0 0
  %5335 = vmatprep.subr.bf16.mxu0 0
  %5336 = vmatpush2.bf16.msra.mxu0 0
  %5337 = vmatprep.subr.bf16.mxu0 0
  %5338 = vmatpush2.bf16.msra.mxu0 0
  %5339 = vmatprep.subr.bf16.mxu0 0
  %5340 = vmatpush2.bf16.msra.mxu0 0
  %5341 = vmatprep.subr.bf16.mxu0 0
  %5342 = vmatpush2.bf16.msra.mxu0 0
  %5343 = vmatprep.subr.bf16.mxu0 0
  %5344 = vmatpush2.bf16.msra.mxu0 0
  %5345 = vmatprep.subr.bf16.mxu0 0
  %5346 = vmatpush2.bf16.msra.mxu0 0
  %5347 = vmatprep.mubr.bf16.mxu0 0
  %5348 = vmatmul.mubr.bf16.gmra.mxu0 %v5217
  %v5349 = vpop.f32.mrf.mxu0
  %v5350 = vadd.f32 0.0, %v5349
  %v5351 = vpop.f32.mrf.mxu0
  %v5352 = vadd.f32 0.0, %v5351
  %v5353 = vpop.f32.mrf.mxu0
  %v5354 = vpop.f32.mrf.mxu0
  %5355 = vdwg.mxu0
  %v5356 = vadd.f32 %v5170, %v5350
  %v5357 = vadd.f32 %v5171, %v5352
  %vm5358 = vcmp.ge.f32.partialorder %v5356, 0.0
  %vm5359 = vcmp.ge.f32.partialorder %v5357, 0.0
  %v5360 = vmul.f32 %v5356, 0.2
  %v5361 = vmul.f32 %v5357, 0.2
  %v5362 = vsel %vm5358, %v5356, %v5360
  %v5363 = vsel %vm5359, %v5357, %v5361
  %v5364 = vpack.c.bf16 %v5362, %v5362
  %v5365 = vpack.c.bf16 %v5363, %v5363
  %v5366 = vld [vmem:[%s12] sm:$0xf]
  %v5367 = vld [vmem:[%s12 + $0x4] sm:$0xf]
  %v5368 = vld [vmem:[%s12 + $0x8] sm:$0xf]
  %v5369 = vld [vmem:[%s12 + $0xc] sm:$0xf]
  %v5370 = vld [vmem:[%s12 + $0x10] sm:$0xf]
  %v5371 = vld [vmem:[%s12 + $0x14] sm:$0xf]
  %v5372 = vld [vmem:[%s12 + $0x18] sm:$0xf]
  %v5373 = vld [vmem:[%s12 + $0x1c] sm:$0xf]
  %v5374 = vld [vmem:[%s12 + $0x20] sm:$0xf]
  %v5375 = vld [vmem:[%s12 + $0x24] sm:$0xf]
  %v5376 = vld [vmem:[%s12 + $0x28] sm:$0xf]
  %v5377 = vld [vmem:[%s12 + $0x2c] sm:$0xf]
  %v5378 = vld [vmem:[%s12 + $0x30] sm:$0xf]
  %v5379 = vld [vmem:[%s12 + $0x34] sm:$0xf]
  %v5380 = vld [vmem:[%s12 + $0x38] sm:$0xf]
  %v5381 = vld [vmem:[%s12 + $0x3c] sm:$0xf]
  %v5382 = vld [vmem:[%s12 + $0x40] sm:$0xf]
  %v5383 = vld [vmem:[%s12 + $0x44] sm:$0xf]
  %v5384 = vld [vmem:[%s12 + $0x48] sm:$0xf]
  %v5385 = vld [vmem:[%s12 + $0x4c] sm:$0xf]
  %v5386 = vld [vmem:[%s12 + $0x50] sm:$0xf]
  %v5387 = vld [vmem:[%s12 + $0x54] sm:$0xf]
  %v5388 = vld [vmem:[%s12 + $0x58] sm:$0xf]
  %v5389 = vld [vmem:[%s12 + $0x5c] sm:$0xf]
  %v5390 = vld [vmem:[%s12 + $0x60] sm:$0xf]
  %v5391 = vld [vmem:[%s12 + $0x64] sm:$0xf]
  %v5392 = vld [vmem:[%s12 + $0x68] sm:$0xf]
  %v5393 = vld [vmem:[%s12 + $0x6c] sm:$0xf]
  %v5394 = vld [vmem:[%s12 + $0x70] sm:$0xf]
  %v5395 = vld [vmem:[%s12 + $0x74] sm:$0xf]
  %v5396 = vld [vmem:[%s12 + $0x78] sm:$0xf]
  %v5397 = vld [vmem:[%s12 + $0x7c] sm:$0xf]
  %v5398 = vld [vmem:[%s13] sm:$0x1]
  %v5400 = vlaneseq
  %v5401 = vshrl.u32 %v5400, 7
  %v5402 = vsub.s32 0, %v5401
  %v5403 = vrot.slane %v5398, %v5402
  %v5437 = vunpack.c.l.b16 %v5366
  %v5438 = vunpack.c.l.b16 %v5367
  %v5439 = vunpack.c.l.b16 %v5368
  %v5440 = vunpack.c.l.b16 %v5369
  %v5441 = vunpack.c.l.b16 %v5370
  %v5442 = vunpack.c.l.b16 %v5371
  %v5443 = vunpack.c.l.b16 %v5372
  %v5444 = vunpack.c.l.b16 %v5373
  %v5445 = vunpack.c.l.b16 %v5374
  %v5446 = vunpack.c.l.b16 %v5375
  %v5447 = vunpack.c.l.b16 %v5376
  %v5448 = vunpack.c.l.b16 %v5377
  %v5449 = vunpack.c.l.b16 %v5378
  %v5450 = vunpack.c.l.b16 %v5379
  %v5451 = vunpack.c.l.b16 %v5380
  %v5452 = vunpack.c.l.b16 %v5381
  %v5453 = vunpack.c.l.b16 %v5382
  %v5454 = vunpack.c.l.b16 %v5383
  %v5455 = vunpack.c.l.b16 %v5384
  %v5456 = vunpack.c.l.b16 %v5385
  %v5457 = vunpack.c.l.b16 %v5386
  %v5458 = vunpack.c.l.b16 %v5387
  %v5459 = vunpack.c.l.b16 %v5388
  %v5460 = vunpack.c.l.b16 %v5389
  %v5461 = vunpack.c.l.b16 %v5390
  %v5462 = vunpack.c.l.b16 %v5391
  %v5463 = vunpack.c.l.b16 %v5392
  %v5464 = vunpack.c.l.b16 %v5393
  %v5465 = vunpack.c.l.b16 %v5394
  %v5466 = vunpack.c.l.b16 %v5395
  %v5467 = vunpack.c.l.b16 %v5396
  %v5468 = vunpack.c.l.b16 %v5397
  %v5469 = vpack.c.b16 %v5438, %v5437
  %v5470 = vpack.c.b16 %v5440, %v5439
  %v5471 = vpack.c.b16 %v5442, %v5441
  %v5472 = vpack.c.b16 %v5444, %v5443
  %v5473 = vpack.c.b16 %v5446, %v5445
  %v5474 = vpack.c.b16 %v5448, %v5447
  %v5475 = vpack.c.b16 %v5450, %v5449
  %v5476 = vpack.c.b16 %v5452, %v5451
  %v5477 = vpack.c.b16 %v5454, %v5453
  %v5478 = vpack.c.b16 %v5456, %v5455
  %v5479 = vpack.c.b16 %v5458, %v5457
  %v5480 = vpack.c.b16 %v5460, %v5459
  %v5481 = vpack.c.b16 %v5462, %v5461
  %v5482 = vpack.c.b16 %v5464, %v5463
  %v5483 = vpack.c.b16 %v5466, %v5465
  %v5484 = vpack.c.b16 %v5468, %v5467
  %5501 = vmatprep.subr.bf16.mxu0 0
  %5502 = vmatpush1.bf16.msra.mxu0 %v5476
  %5503 = vmatprep.subr.bf16.mxu0 0
  %5504 = vmatpush1.bf16.msra.mxu0 %v5475
  %5505 = vmatprep.subr.bf16.mxu0 0
  %5506 = vmatpush1.bf16.msra.mxu0 %v5474
  %5507 = vmatprep.subr.bf16.mxu0 0
  %5508 = vmatpush1.bf16.msra.mxu0 %v5473
  %5509 = vmatprep.subr.bf16.mxu0 0
  %5510 = vmatpush1.bf16.msra.mxu0 %v5472
  %5511 = vmatprep.subr.bf16.mxu0 0
  %5512 = vmatpush1.bf16.msra.mxu0 %v5471
  %5513 = vmatprep.subr.bf16.mxu0 0
  %5514 = vmatpush1.bf16.msra.mxu0 %v5470
  %5515 = vmatprep.subr.bf16.mxu0 0
  %5516 = vmatpush1.bf16.msra.mxu0 %v5469
  %5517 = vmatprep.subr.bf16.mxu0 0
  %5518 = vmatpush2.bf16.msra.mxu0 %v5484
  %5519 = vmatprep.subr.bf16.mxu0 0
  %5520 = vmatpush2.bf16.msra.mxu0 %v5483
  %5521 = vmatprep.subr.bf16.mxu0 0
  %5522 = vmatpush2.bf16.msra.mxu0 %v5482
  %5523 = vmatprep.subr.bf16.mxu0 0
  %5524 = vmatpush2.bf16.msra.mxu0 %v5481
  %5525 = vmatprep.subr.bf16.mxu0 0
  %5526 = vmatpush2.bf16.msra.mxu0 %v5480
  %5527 = vmatprep.subr.bf16.mxu0 0
  %5528 = vmatpush2.bf16.msra.mxu0 %v5479
  %5529 = vmatprep.subr.bf16.mxu0 0
  %5530 = vmatpush2.bf16.msra.mxu0 %v5478
  %5531 = vmatprep.subr.bf16.mxu0 0
  %5532 = vmatpush2.bf16.msra.mxu0 %v5477
  %5533 = vmatprep.mubr.bf16.mxu0 %v5365
  %5534 = vmatmul.mubr.bf16.gmra.mxu0 %v5364
  %v5535 = vpop.f32.mrf.mxu0
  %v5536 = vadd.f32 %v5403, %v5535
  %v5537 = vpop.f32.mrf.mxu0
  %v5538 = vpop.f32.mrf.mxu0
  %v5539 = vpop.f32.mrf.mxu0
  %5540 = vdwg.mxu0
  %5541 = vst [vmem:[%s14] sm:$0x3] %v5536
  // Predicated region
  $region58: #{encoder_forward.1} parent=0 // pred_check
    _
  $region59: #{encoder_forward.1} parent=0 // pred_check_branch
    %5543 = sbr.rel (0) target = $region61
  $region60: #{encoder_forward.1} parent=0 // pred_region
    _
  $region61: #{encoder_forward.1} parent=0 // pred_fallthru
    _
  // Predicated region
  $region62: #{encoder_forward.1} parent=0 // pred_check
    _
  $region63: #{encoder_forward.1} parent=0 // pred_check_branch
    %5545 = sbr.rel (0) target = $region65
  $region64: #{encoder_forward.1} parent=0 // pred_region
    _
  $region65: #{encoder_forward.1} parent=0 // pred_fallthru
    _

</llo_original>
